<compile_context>
chip_gen: v5e
topology: v5e:2x2
jax: 0.10.0
libtpu: 0.0.40
codegen_flags: <defaults>
</compile_context>

<pallas_src>
import numpy as np
import jax
import jax.numpy as jnp
from jax import lax
from jax.experimental import pallas as pl
from jax.experimental.pallas import tpu as pltpu

# ---- stand-ins for the repo's config object `c` ----
N_FEAT = 32            # c.n_feat
FC_INTERNAL = 64       # c.fc_internal
N_COUPLING_BLOCKS = 2  # c.n_coupling_blocks
CLAMP = 3.0            # c.clamp

_INV_CLAMP = 1.0 / CLAMP
_TAN_PI_8 = 0.41421356237309503
_TAN_3PI_8 = 2.414213562373095
_PI_2 = 1.5707963267948966
_PI_4 = 0.7853981633974483


# ---------------------------------------------------------------------------
# elementwise math shared by the kernel and the pure-JAX reference (all f32)
# ---------------------------------------------------------------------------
def _atan32(x):
    """Cephes-style float32 atan built only from Mosaic-supported elementwise ops."""
    neg = x < 0.0
    t = jnp.abs(x)
    big = t > _TAN_3PI_8
    mid = t > _TAN_PI_8
    t_safe = jnp.maximum(t, 1e-30)          # guard -1/t in the (discarded) branch at t==0
    z = jnp.where(big, -1.0 / t_safe, jnp.where(mid, (t - 1.0) / (t + 1.0), t))
    base = jnp.where(big, _PI_2, jnp.where(mid, _PI_4, 0.0))
    z2 = z * z
    p = (((8.05374449538e-2 * z2 - 1.38776856032e-1) * z2
          + 1.99777106478e-1) * z2 - 3.33329491539e-1) * z2 * z + z
    res = base + p
    return jnp.where(neg, -res, res)


def _e_clamp(s):
    # glow_coupling_layer.e(s) = exp(clamp * 0.636 * atan(s / clamp))
    return jnp.exp((CLAMP * 0.636) * _atan32(s * _INV_CLAMP))


def _bf16(x):
    return x.astype(jnp.bfloat16)


# ---------------------------------------------------------------------------
# Fused Pallas kernel: the whole flow (all blocks, whole batch) in one call.
# ---------------------------------------------------------------------------
def _make_flow_kernel(perm, B, N, C, H, n_halves):
    """Build the kernel closure.  `perm` (static) is the composed channel order."""
    perm = [int(p) for p in perm]

    def kernel(x_ref, wqkv_ref, bqkv_ref, wst_ref, bst_ref, out_ref):
        M = B * N
        x = x_ref[...]                                   # (B*N, C) f32, original order

        # ---- static channel permutation (exact, elementwise lane selects) ----
        lane = lax.broadcasted_iota(jnp.int32, (M, C), 1)
        z = jnp.zeros_like(x)
        for j in range(C):
            z = jnp.where(lane == j, x[:, perm[j]:perm[j] + 1], z)

        # ---- n_halves half-couplings; weights shared across all B*N rows ----
        for i in range(n_halves):
            wqkv = wqkv_ref[i]                           # (C, 3H) bf16 (1/sqrt(H) folded)
            bqkv = bqkv_ref[i]                           # (1, 3H) f32
            wst = wst_ref[i]                             # (H, 2C) bf16
            bst = bst_ref[i]                             # (1, 2C) f32

            qkv = jnp.dot(_bf16(z), wqkv, preferred_element_type=jnp.float32) + bqkv
            q = qkv[:, :H]
            k = qkv[:, H:2 * H]
            v = qkv[:, 2 * H:]

            # per-batch-element (N, N) attention; B is tiny and static -> unrolled
            hs = []
            for b in range(B):
                qb = _bf16(q[b * N:(b + 1) * N])
                kb = _bf16(k[b * N:(b + 1) * N])
                vb = _bf16(v[b * N:(b + 1) * N])
                sc = lax.dot_general(qb, kb, (((1,), (1,)), ((), ())),
                                     preferred_element_type=jnp.float32)
                sc = sc - jnp.max(sc, axis=-1, keepdims=True)
                p = jnp.exp(sc)
                attn = p / jnp.sum(p, axis=-1, keepdims=True)   # exact (pretrained parity)
                hs.append(jnp.dot(_bf16(attn), vb,
                                  preferred_element_type=jnp.float32))
            h = jnp.concatenate(hs, axis=0)              # (B*N, H)

            st = jnp.dot(_bf16(h), wst, preferred_element_type=jnp.float32) + bst
            s = st[:, :C]
            t = st[:, C:]
            # inactive channels have s = t = 0  ->  e(0)*z + 0 = z (identity update)
            z = _e_clamp(s) * z + t

        # drop each element's cls token (row 0 of its N rows) and store densely
        out_ref[...] = jnp.concatenate(
            [z[b * N + 1:(b + 1) * N] for b in range(B)], axis=0)

    return kernel


def adwithglow_forward(x, wqkv_all, bqkv_all, wst_all, bst_all, out_perm):
    """ADwithGlow.forward, pretrained path. x: (B, N, C) -> (B, N-1, C)."""
    B, N, C = x.shape
    n_halves, _, three_h = wqkv_all.shape
    H = three_h // 3

    kern = _make_flow_kernel(out_perm, B, N, C, H, n_halves)
    x2 = x.reshape(B * N, C)                             # contiguous -> free reshape
    vmem = lambda: pl.BlockSpec(memory_space=pltpu.MemorySpace.VMEM)

    z = pl.pallas_call(
        kern,
        out_shape=jax.ShapeDtypeStruct((B * (N - 1), C), jnp.float32),
        in_specs=[vmem(), vmem(), vmem(), vmem(), vmem()],
        out_specs=vmem(),
    )(x2, wqkv_all, bqkv_all, wst_all, bst_all)
    return z.reshape(B, N - 1, C)                        # contiguous -> free reshape


# ---------------------------------------------------------------------------
# Pure-JAX reference: straightforward take / split / subnet formulation with the
# same bf16-operand / f32-accumulate matmul math and exact softmax division.
# ---------------------------------------------------------------------------
def _mm(a, b):
    return jnp.dot(a.astype(jnp.bfloat16), b.astype(jnp.bfloat16),
                   preferred_element_type=jnp.float32)


def _ref_subnet(x, wq, wk, wv, bq, bk, bv, ws, bs, wt, bt):
    hidden = wq.shape[1]
    q = _mm(x, wq) + bq
    k = _mm(x, wk) + bk
    v = _mm(x, wv) + bv
    scores = lax.dot_general(q.astype(jnp.bfloat16), k.astype(jnp.bfloat16),
                             (((1,), (1,)), ((), ())),
                             preferred_element_type=jnp.float32)
    scores = scores * (1.0 / float(np.sqrt(hidden)))
    scores = scores - jnp.max(scores, axis=-1, keepdims=True)
    p = jnp.exp(scores)
    attn = p / jnp.sum(p, axis=-1, keepdims=True)
    h = _mm(attn, v)
    s = _mm(h, ws) + bs
    t = _mm(h, wt) + bt
    return s, t


def _ref_coupling_block(x, params):
    B, N, C = x.shape
    split1 = C // 2
    x1 = x[..., :split1]
    x2 = x[..., split1:]
    (wq2, wk2, wv2, bq2, bk2, bv2, ws2, bs2, wt2, bt2,
     wq1, wk1, wv1, bq1, bk1, bv1, ws1, bs1, wt1, bt1) = params
    sub2 = jax.vmap(lambda tt: _ref_subnet(tt, wq2, wk2, wv2, bq2, bk2, bv2,
                                           ws2, bs2, wt2, bt2))
    sub1 = jax.vmap(lambda tt: _ref_subnet(tt, wq1, wk1, wv1, bq1, bk1, bv1,
                                           ws1, bs1, wt1, bt1))
    s2, t2 = sub2(x2)
    y1 = _e_clamp(s2) * x1 + t2
    s1, t1 = sub1(y1)
    y2 = _e_clamp(s1) * x2 + t1
    return jnp.concatenate([y1, y2], axis=-1)


def ref_forward(x, flow_params, perms):
    z = x
    for k in range(len(flow_params)):
        z = jnp.take(z, jnp.asarray(perms[k]), axis=-1)   # permute_layer(seed=k)
        z = _ref_coupling_block(z, flow_params[k])        # glow_coupling_layer
    return z[:, 1:, :]


# ---------------------------------------------------------------------------
# Parameter construction
# ---------------------------------------------------------------------------
def _init_logical_params(key, C, H, n_blocks):
    """FrEIA-style logical weights (float32) + per-block channel permutations."""
    split1 = C // 2
    split2 = C - split1

    def subnet_shapes(cin, cout):
        return [(cin, H), (cin, H), (cin, H),       # wq wk wv
                (1, H), (1, H), (1, H),             # bq bk bv
                (H, cout), (1, cout),               # ws bs
                (H, cout), (1, cout)]               # wt bt

    flow_params, perms = [], []
    for k in range(n_blocks):
        np.random.seed(k)                           # permute_layer(seed=k)
        perms.append(np.random.permutation(C).astype(np.int32))
        shapes = subnet_shapes(split2, split1) + subnet_shapes(split1, split2)
        block = []
        for shp in shapes:
            key, wk_ = jax.random.split(key)
            scale = 1.0 / np.sqrt(shp[0]) if shp[0] > 1 else 0.05
            block.append(scale * jax.random.normal(wk_, shp, dtype=jnp.float32))
        flow_params.append(tuple(block))
    return flow_params, perms, key


def _build_kernel_params(flow_params, perms, C, H):
    """Fold static channel permutations into zero-padded fused QKV / [s|t] weights,
    fold the 1/sqrt(H) attention scale into wq/bq, and stack everything into
    4 operands: wqkv (2K, C, 3H) bf16, bqkv (2K, 1, 3H) f32,
                wst  (2K, H, 2C) bf16, bst  (2K, 1, 2C) f32.
    The kernel keeps the activation in the final composed channel order R; block k's
    coupling channel c lives at kernel position idx_k[c] = R^{-1}[Q_k[c]].
    """
    split1 = C // 2
    n_blocks = len(flow_params)
    inv_sqrt_h = 1.0 / float(np.sqrt(H))

    # Compose permutations: Q_k = Q_{k-1}[perm_k]; R = Q_{K-1} is the final order.
    Q = []
    q = np.arange(C)
    for k in range(n_blocks):
        q = q[perms[k]]
        Q.append(q.copy())
    R = Q[-1]
    Rinv = np.empty(C, dtype=np.int64)
    Rinv[R] = np.arange(C)

    wqkv_l, bqkv_l, wst_l, bst_l = [], [], [], []

    def add_subnet(wq, wk, wv, bq, bk, bv, ws, bs, wt, bt, pin, pout):
        wq, wk, wv, ws, wt, bq, bk, bv, bs, bt = (
            np.asarray(a, np.float32) for a in (wq, wk, wv, ws, wt, bq, bk, bv, bs, bt))

        wqkv = np.zeros((C, 3 * H), np.float32)
        wqkv[pin, 0:H] = wq * inv_sqrt_h          # fold attention scale into q
        wqkv[pin, H:2 * H] = wk
        wqkv[pin, 2 * H:3 * H] = wv
        bqkv = np.concatenate([bq * inv_sqrt_h, bk, bv], axis=-1)   # (1, 3H)

        wst = np.zeros((H, 2 * C), np.float32)
        wst[:, pout] = ws
        wst[:, C + pout] = wt
        bst = np.zeros((1, 2 * C), np.float32)
        bst[0, pout] = bs[0]
        bst[0, C + pout] = bt[0]

        wqkv_l.append(wqkv); bqkv_l.append(bqkv)
        wst_l.append(wst); bst_l.append(bst)

    for k in range(n_blocks):
        idx = Rinv[Q[k]]                 # coupling channel c -> kernel position idx[c]
        s1_pos, s2_pos = idx[:split1], idx[split1:]
        (wq2, wk2, wv2, bq2, bk2, bv2, ws2, bs2, wt2, bt2,
         wq1, wk1, wv1, bq1, bk1, bv1, ws1, bs1, wt1, bt1) = flow_params[k]
        # y1 = e(s2(x2)) * x1 + t2(x2)
        add_subnet(wq2, wk2, wv2, bq2, bk2, bv2, ws2, bs2, wt2, bt2,
                   pin=s2_pos, pout=s1_pos)
        # y2 = e(s1(y1)) * x2 + t1(y1)
        add_subnet(wq1, wk1, wv1, bq1, bk1, bv1, ws1, bs1, wt1, bt1,
                   pin=s1_pos, pout=s2_pos)

    wqkv_all = jnp.asarray(np.stack(wqkv_l), jnp.bfloat16)
    bqkv_all = jnp.asarray(np.stack(bqkv_l), jnp.float32)
    wst_all = jnp.asarray(np.stack(wst_l), jnp.bfloat16)
    bst_all = jnp.asarray(np.stack(bst_l), jnp.float32)
    return (wqkv_all, bqkv_all, wst_all, bst_all), R.astype(np.int32)


# ---------------------------------------------------------------------------
if __name__ == "__main__":
    B, N, C, H = 2, 9, N_FEAT, FC_INTERNAL   # 9 tokens = 1 cls + 8 patch tokens

    key = jax.random.PRNGKey(0)
    flow_params, perms, key = _init_logical_params(key, C, H, N_COUPLING_BLOCKS)
    (wqkv_all, bqkv_all, wst_all, bst_all), out_perm = _build_kernel_params(
        flow_params, perms, C, H)

    key, xk = jax.random.split(key)
    x = jax.random.normal(xk, (B, N, C), dtype=jnp.float32)

    fwd = jax.jit(lambda xx: adwithglow_forward(
        xx, wqkv_all, bqkv_all, wst_all, bst_all, out_perm))
    z = fwd(x)
    jax.block_until_ready(z)
    assert z.shape == (B, N - 1, C), z.shape

    # Reference uses the same bf16-operand / f32-accumulate matmul math and exact
    # softmax division, so residual disagreement is only accumulation-order /
    # transcendental-ulp level (<<1e-2); structural (permutation / folding) bugs
    # would show up as O(1) errors.
    z_ref = ref_forward(x, flow_params, perms)
    np.testing.assert_allclose(np.asarray(z), np.asarray(z_ref), rtol=2e-2, atol=2e-2)

    print("KERNEL_OK")
</pallas_src>

<mosaic_0001>
module attributes {stable_mosaic.version = 11 : i64} {
  func.func @kernel(%arg0: memref<18x32xf32, #tpu.memory_space<vmem>>, %arg1: memref<4x32x192xbf16, #tpu.memory_space<vmem>>, %arg2: memref<4x1x192xf32, #tpu.memory_space<vmem>>, %arg3: memref<4x64x64xbf16, #tpu.memory_space<vmem>>, %arg4: memref<4x1x64xf32, #tpu.memory_space<vmem>>, %arg5: memref<16x32xf32, #tpu.memory_space<vmem>>) attributes {dimension_semantics = [], scalar_prefetch = 0 : i64, scratch_operands = 0 : i64, tpu.core_type = #tpu.core_type<tc>} {
    %c0 = arith.constant 0 : index
    %c0_0 = arith.constant 0 : index
    %0 = vector.load %arg0[%c0, %c0_0] : memref<18x32xf32, #tpu.memory_space<vmem>>, vector<18x32xf32>
    %1 = tpu.iota {dimensions = array<i32: 1>} : vector<18x32xi32>
    %cst = arith.constant 0.000000e+00 : f32
    %2 = vector.broadcast %cst : f32 to vector<18x32xf32>
    %c0_i32 = arith.constant 0 : i32
    %3 = vector.broadcast %c0_i32 : i32 to vector<18x32xi32>
    %4 = arith.cmpi eq, %1, %3 : vector<18x32xi32>
    %5 = vector.extract_strided_slice %0 {offsets = [0, 3], sizes = [18, 1], strides = [1, 1]} : vector<18x32xf32> to vector<18x1xf32>
    %6 = vector.shape_cast %5 : vector<18x1xf32> to vector<18x1xf32>
    %7 = vector.broadcast %6 : vector<18x1xf32> to vector<18x32xf32>
    %8 = arith.select %4, %7, %2 : vector<18x32xi1>, vector<18x32xf32>
    %c1_i32 = arith.constant 1 : i32
    %9 = vector.broadcast %c1_i32 : i32 to vector<18x32xi32>
    %10 = arith.cmpi eq, %1, %9 : vector<18x32xi32>
    %11 = vector.extract_strided_slice %0 {offsets = [0, 2], sizes = [18, 1], strides = [1, 1]} : vector<18x32xf32> to vector<18x1xf32>
    %12 = vector.shape_cast %11 : vector<18x1xf32> to vector<18x1xf32>
    %13 = vector.broadcast %12 : vector<18x1xf32> to vector<18x32xf32>
    %14 = arith.select %10, %13, %8 : vector<18x32xi1>, vector<18x32xf32>
    %c2_i32 = arith.constant 2 : i32
    %15 = vector.broadcast %c2_i32 : i32 to vector<18x32xi32>
    %16 = arith.cmpi eq, %1, %15 : vector<18x32xi32>
    %17 = vector.extract_strided_slice %0 {offsets = [0, 29], sizes = [18, 1], strides = [1, 1]} : vector<18x32xf32> to vector<18x1xf32>
    %18 = vector.shape_cast %17 : vector<18x1xf32> to vector<18x1xf32>
    %19 = vector.broadcast %18 : vector<18x1xf32> to vector<18x32xf32>
    %20 = arith.select %16, %19, %14 : vector<18x32xi1>, vector<18x32xf32>
    %c3_i32 = arith.constant 3 : i32
    %21 = vector.broadcast %c3_i32 : i32 to vector<18x32xi32>
    %22 = arith.cmpi eq, %1, %21 : vector<18x32xi32>
    %23 = vector.extract_strided_slice %0 {offsets = [0, 31], sizes = [18, 1], strides = [1, 1]} : vector<18x32xf32> to vector<18x1xf32>
    %24 = vector.shape_cast %23 : vector<18x1xf32> to vector<18x1xf32>
    %25 = vector.broadcast %24 : vector<18x1xf32> to vector<18x32xf32>
    %26 = arith.select %22, %25, %20 : vector<18x32xi1>, vector<18x32xf32>
    %c4_i32 = arith.constant 4 : i32
    %27 = vector.broadcast %c4_i32 : i32 to vector<18x32xi32>
    %28 = arith.cmpi eq, %1, %27 : vector<18x32xi32>
    %29 = vector.extract_strided_slice %0 {offsets = [0, 19], sizes = [18, 1], strides = [1, 1]} : vector<18x32xf32> to vector<18x1xf32>
    %30 = vector.shape_cast %29 : vector<18x1xf32> to vector<18x1xf32>
    %31 = vector.broadcast %30 : vector<18x1xf32> to vector<18x32xf32>
    %32 = arith.select %28, %31, %26 : vector<18x32xi1>, vector<18x32xf32>
    %c5_i32 = arith.constant 5 : i32
    %33 = vector.broadcast %c5_i32 : i32 to vector<18x32xi32>
    %34 = arith.cmpi eq, %1, %33 : vector<18x32xi32>
    %35 = vector.extract_strided_slice %0 {offsets = [0, 1], sizes = [18, 1], strides = [1, 1]} : vector<18x32xf32> to vector<18x1xf32>
    %36 = vector.shape_cast %35 : vector<18x1xf32> to vector<18x1xf32>
    %37 = vector.broadcast %36 : vector<18x1xf32> to vector<18x32xf32>
    %38 = arith.select %34, %37, %32 : vector<18x32xi1>, vector<18x32xf32>
    %c6_i32 = arith.constant 6 : i32
    %39 = vector.broadcast %c6_i32 : i32 to vector<18x32xi32>
    %40 = arith.cmpi eq, %1, %39 : vector<18x32xi32>
    %41 = vector.extract_strided_slice %0 {offsets = [0, 18], sizes = [18, 1], strides = [1, 1]} : vector<18x32xf32> to vector<18x1xf32>
    %42 = vector.shape_cast %41 : vector<18x1xf32> to vector<18x1xf32>
    %43 = vector.broadcast %42 : vector<18x1xf32> to vector<18x32xf32>
    %44 = arith.select %40, %43, %38 : vector<18x32xi1>, vector<18x32xf32>
    %c7_i32 = arith.constant 7 : i32
    %45 = vector.broadcast %c7_i32 : i32 to vector<18x32xi32>
    %46 = arith.cmpi eq, %1, %45 : vector<18x32xi32>
    %47 = vector.extract_strided_slice %0 {offsets = [0, 0], sizes = [18, 1], strides = [1, 1]} : vector<18x32xf32> to vector<18x1xf32>
    %48 = vector.shape_cast %47 : vector<18x1xf32> to vector<18x1xf32>
    %49 = vector.broadcast %48 : vector<18x1xf32> to vector<18x32xf32>
    %50 = arith.select %46, %49, %44 : vector<18x32xi1>, vector<18x32xf32>
    %c8_i32 = arith.constant 8 : i32
    %51 = vector.broadcast %c8_i32 : i32 to vector<18x32xi32>
    %52 = arith.cmpi eq, %1, %51 : vector<18x32xi32>
    %53 = vector.extract_strided_slice %0 {offsets = [0, 6], sizes = [18, 1], strides = [1, 1]} : vector<18x32xf32> to vector<18x1xf32>
    %54 = vector.shape_cast %53 : vector<18x1xf32> to vector<18x1xf32>
    %55 = vector.broadcast %54 : vector<18x1xf32> to vector<18x32xf32>
    %56 = arith.select %52, %55, %50 : vector<18x32xi1>, vector<18x32xf32>
    %c9_i32 = arith.constant 9 : i32
    %57 = vector.broadcast %c9_i32 : i32 to vector<18x32xi32>
    %58 = arith.cmpi eq, %1, %57 : vector<18x32xi32>
    %59 = vector.extract_strided_slice %0 {offsets = [0, 30], sizes = [18, 1], strides = [1, 1]} : vector<18x32xf32> to vector<18x1xf32>
    %60 = vector.shape_cast %59 : vector<18x1xf32> to vector<18x1xf32>
    %61 = vector.broadcast %60 : vector<18x1xf32> to vector<18x32xf32>
    %62 = arith.select %58, %61, %56 : vector<18x32xi1>, vector<18x32xf32>
    %c10_i32 = arith.constant 10 : i32
    %63 = vector.broadcast %c10_i32 : i32 to vector<18x32xi32>
    %64 = arith.cmpi eq, %1, %63 : vector<18x32xi32>
    %65 = vector.extract_strided_slice %0 {offsets = [0, 9], sizes = [18, 1], strides = [1, 1]} : vector<18x32xf32> to vector<18x1xf32>
    %66 = vector.shape_cast %65 : vector<18x1xf32> to vector<18x1xf32>
    %67 = vector.broadcast %66 : vector<18x1xf32> to vector<18x32xf32>
    %68 = arith.select %64, %67, %62 : vector<18x32xi1>, vector<18x32xf32>
    %c11_i32 = arith.constant 11 : i32
    %69 = vector.broadcast %c11_i32 : i32 to vector<18x32xi32>
    %70 = arith.cmpi eq, %1, %69 : vector<18x32xi32>
    %71 = vector.extract_strided_slice %0 {offsets = [0, 24], sizes = [18, 1], strides = [1, 1]} : vector<18x32xf32> to vector<18x1xf32>
    %72 = vector.shape_cast %71 : vector<18x1xf32> to vector<18x1xf32>
    %73 = vector.broadcast %72 : vector<18x1xf32> to vector<18x32xf32>
    %74 = arith.select %70, %73, %68 : vector<18x32xi1>, vector<18x32xf32>
    %c12_i32 = arith.constant 12 : i32
    %75 = vector.broadcast %c12_i32 : i32 to vector<18x32xi32>
    %76 = arith.cmpi eq, %1, %75 : vector<18x32xi32>
    %77 = vector.extract_strided_slice %0 {offsets = [0, 4], sizes = [18, 1], strides = [1, 1]} : vector<18x32xf32> to vector<18x1xf32>
    %78 = vector.shape_cast %77 : vector<18x1xf32> to vector<18x1xf32>
    %79 = vector.broadcast %78 : vector<18x1xf32> to vector<18x32xf32>
    %80 = arith.select %76, %79, %74 : vector<18x32xi1>, vector<18x32xf32>
    %c13_i32 = arith.constant 13 : i32
    %81 = vector.broadcast %c13_i32 : i32 to vector<18x32xi32>
    %82 = arith.cmpi eq, %1, %81 : vector<18x32xi32>
    %83 = vector.extract_strided_slice %0 {offsets = [0, 27], sizes = [18, 1], strides = [1, 1]} : vector<18x32xf32> to vector<18x1xf32>
    %84 = vector.shape_cast %83 : vector<18x1xf32> to vector<18x1xf32>
    %85 = vector.broadcast %84 : vector<18x1xf32> to vector<18x32xf32>
    %86 = arith.select %82, %85, %80 : vector<18x32xi1>, vector<18x32xf32>
    %c14_i32 = arith.constant 14 : i32
    %87 = vector.broadcast %c14_i32 : i32 to vector<18x32xi32>
    %88 = arith.cmpi eq, %1, %87 : vector<18x32xi32>
    %89 = vector.extract_strided_slice %0 {offsets = [0, 16], sizes = [18, 1], strides = [1, 1]} : vector<18x32xf32> to vector<18x1xf32>
    %90 = vector.shape_cast %89 : vector<18x1xf32> to vector<18x1xf32>
    %91 = vector.broadcast %90 : vector<18x1xf32> to vector<18x32xf32>
    %92 = arith.select %88, %91, %86 : vector<18x32xi1>, vector<18x32xf32>
    %c15_i32 = arith.constant 15 : i32
    %93 = vector.broadcast %c15_i32 : i32 to vector<18x32xi32>
    %94 = arith.cmpi eq, %1, %93 : vector<18x32xi32>
    %95 = vector.extract_strided_slice %0 {offsets = [0, 10], sizes = [18, 1], strides = [1, 1]} : vector<18x32xf32> to vector<18x1xf32>
    %96 = vector.shape_cast %95 : vector<18x1xf32> to vector<18x1xf32>
    %97 = vector.broadcast %96 : vector<18x1xf32> to vector<18x32xf32>
    %98 = arith.select %94, %97, %92 : vector<18x32xi1>, vector<18x32xf32>
    %c16_i32 = arith.constant 16 : i32
    %99 = vector.broadcast %c16_i32 : i32 to vector<18x32xi32>
    %100 = arith.cmpi eq, %1, %99 : vector<18x32xi32>
    %101 = vector.extract_strided_slice %0 {offsets = [0, 7], sizes = [18, 1], strides = [1, 1]} : vector<18x32xf32> to vector<18x1xf32>
    %102 = vector.shape_cast %101 : vector<18x1xf32> to vector<18x1xf32>
    %103 = vector.broadcast %102 : vector<18x1xf32> to vector<18x32xf32>
    %104 = arith.select %100, %103, %98 : vector<18x32xi1>, vector<18x32xf32>
    %c17_i32 = arith.constant 17 : i32
    %105 = vector.broadcast %c17_i32 : i32 to vector<18x32xi32>
    %106 = arith.cmpi eq, %1, %105 : vector<18x32xi32>
    %107 = vector.extract_strided_slice %0 {offsets = [0, 28], sizes = [18, 1], strides = [1, 1]} : vector<18x32xf32> to vector<18x1xf32>
    %108 = vector.shape_cast %107 : vector<18x1xf32> to vector<18x1xf32>
    %109 = vector.broadcast %108 : vector<18x1xf32> to vector<18x32xf32>
    %110 = arith.select %106, %109, %104 : vector<18x32xi1>, vector<18x32xf32>
    %c18_i32 = arith.constant 18 : i32
    %111 = vector.broadcast %c18_i32 : i32 to vector<18x32xi32>
    %112 = arith.cmpi eq, %1, %111 : vector<18x32xi32>
    %113 = vector.extract_strided_slice %0 {offsets = [0, 8], sizes = [18, 1], strides = [1, 1]} : vector<18x32xf32> to vector<18x1xf32>
    %114 = vector.shape_cast %113 : vector<18x1xf32> to vector<18x1xf32>
    %115 = vector.broadcast %114 : vector<18x1xf32> to vector<18x32xf32>
    %116 = arith.select %112, %115, %110 : vector<18x32xi1>, vector<18x32xf32>
    %c19_i32 = arith.constant 19 : i32
    %117 = vector.broadcast %c19_i32 : i32 to vector<18x32xi32>
    %118 = arith.cmpi eq, %1, %117 : vector<18x32xi32>
    %119 = vector.extract_strided_slice %0 {offsets = [0, 26], sizes = [18, 1], strides = [1, 1]} : vector<18x32xf32> to vector<18x1xf32>
    %120 = vector.shape_cast %119 : vector<18x1xf32> to vector<18x1xf32>
    %121 = vector.broadcast %120 : vector<18x1xf32> to vector<18x32xf32>
    %122 = arith.select %118, %121, %116 : vector<18x32xi1>, vector<18x32xf32>
    %c20_i32 = arith.constant 20 : i32
    %123 = vector.broadcast %c20_i32 : i32 to vector<18x32xi32>
    %124 = arith.cmpi eq, %1, %123 : vector<18x32xi32>
    %125 = vector.extract_strided_slice %0 {offsets = [0, 21], sizes = [18, 1], strides = [1, 1]} : vector<18x32xf32> to vector<18x1xf32>
    %126 = vector.shape_cast %125 : vector<18x1xf32> to vector<18x1xf32>
    %127 = vector.broadcast %126 : vector<18x1xf32> to vector<18x32xf32>
    %128 = arith.select %124, %127, %122 : vector<18x32xi1>, vector<18x32xf32>
    %c21_i32 = arith.constant 21 : i32
    %129 = vector.broadcast %c21_i32 : i32 to vector<18x32xi32>
    %130 = arith.cmpi eq, %1, %129 : vector<18x32xi32>
    %131 = vector.extract_strided_slice %0 {offsets = [0, 22], sizes = [18, 1], strides = [1, 1]} : vector<18x32xf32> to vector<18x1xf32>
    %132 = vector.shape_cast %131 : vector<18x1xf32> to vector<18x1xf32>
    %133 = vector.broadcast %132 : vector<18x1xf32> to vector<18x32xf32>
    %134 = arith.select %130, %133, %128 : vector<18x32xi1>, vector<18x32xf32>
    %c22_i32 = arith.constant 22 : i32
    %135 = vector.broadcast %c22_i32 : i32 to vector<18x32xi32>
    %136 = arith.cmpi eq, %1, %135 : vector<18x32xi32>
    %137 = vector.extract_strided_slice %0 {offsets = [0, 23], sizes = [18, 1], strides = [1, 1]} : vector<18x32xf32> to vector<18x1xf32>
    %138 = vector.shape_cast %137 : vector<18x1xf32> to vector<18x1xf32>
    %139 = vector.broadcast %138 : vector<18x1xf32> to vector<18x32xf32>
    %140 = arith.select %136, %139, %134 : vector<18x32xi1>, vector<18x32xf32>
    %c23_i32 = arith.constant 23 : i32
    %141 = vector.broadcast %c23_i32 : i32 to vector<18x32xi32>
    %142 = arith.cmpi eq, %1, %141 : vector<18x32xi32>
    %143 = vector.extract_strided_slice %0 {offsets = [0, 11], sizes = [18, 1], strides = [1, 1]} : vector<18x32xf32> to vector<18x1xf32>
    %144 = vector.shape_cast %143 : vector<18x1xf32> to vector<18x1xf32>
    %145 = vector.broadcast %144 : vector<18x1xf32> to vector<18x32xf32>
    %146 = arith.select %142, %145, %140 : vector<18x32xi1>, vector<18x32xf32>
    %c24_i32 = arith.constant 24 : i32
    %147 = vector.broadcast %c24_i32 : i32 to vector<18x32xi32>
    %148 = arith.cmpi eq, %1, %147 : vector<18x32xi32>
    %149 = vector.extract_strided_slice %0 {offsets = [0, 25], sizes = [18, 1], strides = [1, 1]} : vector<18x32xf32> to vector<18x1xf32>
    %150 = vector.shape_cast %149 : vector<18x1xf32> to vector<18x1xf32>
    %151 = vector.broadcast %150 : vector<18x1xf32> to vector<18x32xf32>
    %152 = arith.select %148, %151, %146 : vector<18x32xi1>, vector<18x32xf32>
    %c25_i32 = arith.constant 25 : i32
    %153 = vector.broadcast %c25_i32 : i32 to vector<18x32xi32>
    %154 = arith.cmpi eq, %1, %153 : vector<18x32xi32>
    %155 = vector.extract_strided_slice %0 {offsets = [0, 12], sizes = [18, 1], strides = [1, 1]} : vector<18x32xf32> to vector<18x1xf32>
    %156 = vector.shape_cast %155 : vector<18x1xf32> to vector<18x1xf32>
    %157 = vector.broadcast %156 : vector<18x1xf32> to vector<18x32xf32>
    %158 = arith.select %154, %157, %152 : vector<18x32xi1>, vector<18x32xf32>
    %c26_i32 = arith.constant 26 : i32
    %159 = vector.broadcast %c26_i32 : i32 to vector<18x32xi32>
    %160 = arith.cmpi eq, %1, %159 : vector<18x32xi32>
    %161 = vector.extract_strided_slice %0 {offsets = [0, 15], sizes = [18, 1], strides = [1, 1]} : vector<18x32xf32> to vector<18x1xf32>
    %162 = vector.shape_cast %161 : vector<18x1xf32> to vector<18x1xf32>
    %163 = vector.broadcast %162 : vector<18x1xf32> to vector<18x32xf32>
    %164 = arith.select %160, %163, %158 : vector<18x32xi1>, vector<18x32xf32>
    %c27_i32 = arith.constant 27 : i32
    %165 = vector.broadcast %c27_i32 : i32 to vector<18x32xi32>
    %166 = arith.cmpi eq, %1, %165 : vector<18x32xi32>
    %167 = vector.extract_strided_slice %0 {offsets = [0, 13], sizes = [18, 1], strides = [1, 1]} : vector<18x32xf32> to vector<18x1xf32>
    %168 = vector.shape_cast %167 : vector<18x1xf32> to vector<18x1xf32>
    %169 = vector.broadcast %168 : vector<18x1xf32> to vector<18x32xf32>
    %170 = arith.select %166, %169, %164 : vector<18x32xi1>, vector<18x32xf32>
    %c28_i32 = arith.constant 28 : i32
    %171 = vector.broadcast %c28_i32 : i32 to vector<18x32xi32>
    %172 = arith.cmpi eq, %1, %171 : vector<18x32xi32>
    %173 = vector.extract_strided_slice %0 {offsets = [0, 20], sizes = [18, 1], strides = [1, 1]} : vector<18x32xf32> to vector<18x1xf32>
    %174 = vector.shape_cast %173 : vector<18x1xf32> to vector<18x1xf32>
    %175 = vector.broadcast %174 : vector<18x1xf32> to vector<18x32xf32>
    %176 = arith.select %172, %175, %170 : vector<18x32xi1>, vector<18x32xf32>
    %c29_i32 = arith.constant 29 : i32
    %177 = vector.broadcast %c29_i32 : i32 to vector<18x32xi32>
    %178 = arith.cmpi eq, %1, %177 : vector<18x32xi32>
    %179 = vector.extract_strided_slice %0 {offsets = [0, 17], sizes = [18, 1], strides = [1, 1]} : vector<18x32xf32> to vector<18x1xf32>
    %180 = vector.shape_cast %179 : vector<18x1xf32> to vector<18x1xf32>
    %181 = vector.broadcast %180 : vector<18x1xf32> to vector<18x32xf32>
    %182 = arith.select %178, %181, %176 : vector<18x32xi1>, vector<18x32xf32>
    %c30_i32 = arith.constant 30 : i32
    %183 = vector.broadcast %c30_i32 : i32 to vector<18x32xi32>
    %184 = arith.cmpi eq, %1, %183 : vector<18x32xi32>
    %185 = vector.extract_strided_slice %0 {offsets = [0, 5], sizes = [18, 1], strides = [1, 1]} : vector<18x32xf32> to vector<18x1xf32>
    %186 = vector.shape_cast %185 : vector<18x1xf32> to vector<18x1xf32>
    %187 = vector.broadcast %186 : vector<18x1xf32> to vector<18x32xf32>
    %188 = arith.select %184, %187, %182 : vector<18x32xi1>, vector<18x32xf32>
    %c31_i32 = arith.constant 31 : i32
    %189 = vector.broadcast %c31_i32 : i32 to vector<18x32xi32>
    %190 = arith.cmpi eq, %1, %189 : vector<18x32xi32>
    %191 = vector.extract_strided_slice %0 {offsets = [0, 14], sizes = [18, 1], strides = [1, 1]} : vector<18x32xf32> to vector<18x1xf32>
    %192 = vector.shape_cast %191 : vector<18x1xf32> to vector<18x1xf32>
    %193 = vector.broadcast %192 : vector<18x1xf32> to vector<18x32xf32>
    %194 = arith.select %190, %193, %188 : vector<18x32xi1>, vector<18x32xf32>
    %c0_1 = arith.constant 0 : index
    %c0_2 = arith.constant 0 : index
    %c0_3 = arith.constant 0 : index
    %195 = vector.load %arg1[%c0_1, %c0_2, %c0_3] : memref<4x32x192xbf16, #tpu.memory_space<vmem>>, vector<1x32x192xbf16>
    %196 = vector.shape_cast %195 : vector<1x32x192xbf16> to vector<32x192xbf16>
    %c0_4 = arith.constant 0 : index
    %c0_5 = arith.constant 0 : index
    %c0_6 = arith.constant 0 : index
    %197 = vector.load %arg2[%c0_4, %c0_5, %c0_6] : memref<4x1x192xf32, #tpu.memory_space<vmem>>, vector<1x1x192xf32>
    %198 = vector.shape_cast %197 : vector<1x1x192xf32> to vector<1x192xf32>
    %c0_7 = arith.constant 0 : index
    %c0_8 = arith.constant 0 : index
    %c0_9 = arith.constant 0 : index
    %199 = vector.load %arg3[%c0_7, %c0_8, %c0_9] : memref<4x64x64xbf16, #tpu.memory_space<vmem>>, vector<1x64x64xbf16>
    %200 = vector.shape_cast %199 : vector<1x64x64xbf16> to vector<64x64xbf16>
    %c0_10 = arith.constant 0 : index
    %c0_11 = arith.constant 0 : index
    %c0_12 = arith.constant 0 : index
    %201 = vector.load %arg4[%c0_10, %c0_11, %c0_12] : memref<4x1x64xf32, #tpu.memory_space<vmem>>, vector<1x1x64xf32>
    %202 = vector.shape_cast %201 : vector<1x1x64xf32> to vector<1x64xf32>
    %203 = arith.truncf %194 : vector<18x32xf32> to vector<18x32xbf16>
    %cst_13 = arith.constant dense<0.000000e+00> : vector<18x192xf32>
    %204 = tpu.matmul %203, %196, %cst_13 {dimension_numbers = #tpu.dot_dimension_numbers<[1], [0], [0], [1], [0, 0, 1, 1], [], []>} : vector<18x32xbf16>, vector<32x192xbf16>, vector<18x192xf32> -> vector<18x192xf32>
    %205 = vector.broadcast %198 : vector<1x192xf32> to vector<18x192xf32>
    %206 = arith.addf %204, %205 : vector<18x192xf32>
    %207 = vector.extract_strided_slice %206 {offsets = [0, 0], sizes = [18, 64], strides = [1, 1]} : vector<18x192xf32> to vector<18x64xf32>
    %208 = vector.extract_strided_slice %206 {offsets = [0, 64], sizes = [18, 64], strides = [1, 1]} : vector<18x192xf32> to vector<18x64xf32>
    %209 = vector.extract_strided_slice %206 {offsets = [0, 128], sizes = [18, 64], strides = [1, 1]} : vector<18x192xf32> to vector<18x64xf32>
    %210 = vector.extract_strided_slice %207 {offsets = [0, 0], sizes = [9, 64], strides = [1, 1]} : vector<18x64xf32> to vector<9x64xf32>
    %211 = arith.truncf %210 : vector<9x64xf32> to vector<9x64xbf16>
    %212 = vector.extract_strided_slice %208 {offsets = [0, 0], sizes = [9, 64], strides = [1, 1]} : vector<18x64xf32> to vector<9x64xf32>
    %213 = arith.truncf %212 : vector<9x64xf32> to vector<9x64xbf16>
    %214 = vector.extract_strided_slice %209 {offsets = [0, 0], sizes = [9, 64], strides = [1, 1]} : vector<18x64xf32> to vector<9x64xf32>
    %215 = arith.truncf %214 : vector<9x64xf32> to vector<9x64xbf16>
    %cst_14 = arith.constant dense<0.000000e+00> : vector<9x9xf32>
    %216 = tpu.matmul %211, %213, %cst_14 {dimension_numbers = #tpu.dot_dimension_numbers<[1], [1], [0], [0], [0, 0, 1, 0], [], []>} : vector<9x64xbf16>, vector<9x64xbf16>, vector<9x9xf32> -> vector<9x9xf32>
    %cst_15 = arith.constant dense<0xFF800000> : vector<9xf32>
    %217 = vector.multi_reduction <maximumf>, %216, %cst_15 [1] : vector<9x9xf32> to vector<9xf32>
    %218 = vector.shape_cast %217 : vector<9xf32> to vector<9x1xf32>
    %219 = vector.broadcast %218 : vector<9x1xf32> to vector<9x9xf32>
    %220 = arith.subf %216, %219 : vector<9x9xf32>
    %221 = math.exp %220 : vector<9x9xf32>
    %cst_16 = arith.constant dense<0.000000e+00> : vector<9xf32>
    %222 = vector.multi_reduction <add>, %221, %cst_16 [1] : vector<9x9xf32> to vector<9xf32>
    %223 = vector.shape_cast %222 : vector<9xf32> to vector<9x1xf32>
    %224 = vector.broadcast %223 : vector<9x1xf32> to vector<9x9xf32>
    %225 = arith.divf %221, %224 : vector<9x9xf32>
    %226 = arith.truncf %225 : vector<9x9xf32> to vector<9x9xbf16>
    %cst_17 = arith.constant dense<0.000000e+00> : vector<9x64xf32>
    %227 = tpu.matmul %226, %215, %cst_17 {dimension_numbers = #tpu.dot_dimension_numbers<[1], [0], [0], [1], [0, 0, 1, 1], [], []>} : vector<9x9xbf16>, vector<9x64xbf16>, vector<9x64xf32> -> vector<9x64xf32>
    %228 = vector.extract_strided_slice %207 {offsets = [9, 0], sizes = [9, 64], strides = [1, 1]} : vector<18x64xf32> to vector<9x64xf32>
    %229 = arith.truncf %228 : vector<9x64xf32> to vector<9x64xbf16>
    %230 = vector.extract_strided_slice %208 {offsets = [9, 0], sizes = [9, 64], strides = [1, 1]} : vector<18x64xf32> to vector<9x64xf32>
    %231 = arith.truncf %230 : vector<9x64xf32> to vector<9x64xbf16>
    %232 = vector.extract_strided_slice %209 {offsets = [9, 0], sizes = [9, 64], strides = [1, 1]} : vector<18x64xf32> to vector<9x64xf32>
    %233 = arith.truncf %232 : vector<9x64xf32> to vector<9x64xbf16>
    %cst_18 = arith.constant dense<0.000000e+00> : vector<9x9xf32>
    %234 = tpu.matmul %229, %231, %cst_18 {dimension_numbers = #tpu.dot_dimension_numbers<[1], [1], [0], [0], [0, 0, 1, 0], [], []>} : vector<9x64xbf16>, vector<9x64xbf16>, vector<9x9xf32> -> vector<9x9xf32>
    %cst_19 = arith.constant dense<0xFF800000> : vector<9xf32>
    %235 = vector.multi_reduction <maximumf>, %234, %cst_19 [1] : vector<9x9xf32> to vector<9xf32>
    %236 = vector.shape_cast %235 : vector<9xf32> to vector<9x1xf32>
    %237 = vector.broadcast %236 : vector<9x1xf32> to vector<9x9xf32>
    %238 = arith.subf %234, %237 : vector<9x9xf32>
    %239 = math.exp %238 : vector<9x9xf32>
    %cst_20 = arith.constant dense<0.000000e+00> : vector<9xf32>
    %240 = vector.multi_reduction <add>, %239, %cst_20 [1] : vector<9x9xf32> to vector<9xf32>
    %241 = vector.shape_cast %240 : vector<9xf32> to vector<9x1xf32>
    %242 = vector.broadcast %241 : vector<9x1xf32> to vector<9x9xf32>
    %243 = arith.divf %239, %242 : vector<9x9xf32>
    %244 = arith.truncf %243 : vector<9x9xf32> to vector<9x9xbf16>
    %cst_21 = arith.constant dense<0.000000e+00> : vector<9x64xf32>
    %245 = tpu.matmul %244, %233, %cst_21 {dimension_numbers = #tpu.dot_dimension_numbers<[1], [0], [0], [1], [0, 0, 1, 1], [], []>} : vector<9x9xbf16>, vector<9x64xbf16>, vector<9x64xf32> -> vector<9x64xf32>
    %246 = tpu.concatenate %227, %245 in 0 : vector<9x64xf32>, vector<9x64xf32> -> vector<18x64xf32>
    %247 = arith.truncf %246 : vector<18x64xf32> to vector<18x64xbf16>
    %cst_22 = arith.constant dense<0.000000e+00> : vector<18x64xf32>
    %248 = tpu.matmul %247, %200, %cst_22 {dimension_numbers = #tpu.dot_dimension_numbers<[1], [0], [0], [1], [0, 0, 1, 1], [], []>} : vector<18x64xbf16>, vector<64x64xbf16>, vector<18x64xf32> -> vector<18x64xf32>
    %249 = vector.broadcast %202 : vector<1x64xf32> to vector<18x64xf32>
    %250 = arith.addf %248, %249 : vector<18x64xf32>
    %251 = vector.extract_strided_slice %250 {offsets = [0, 0], sizes = [18, 32], strides = [1, 1]} : vector<18x64xf32> to vector<18x32xf32>
    %252 = vector.extract_strided_slice %250 {offsets = [0, 32], sizes = [18, 32], strides = [1, 1]} : vector<18x64xf32> to vector<18x32xf32>
    %cst_23 = arith.constant 0.333333343 : f32
    %253 = vector.broadcast %cst_23 : f32 to vector<18x32xf32>
    %254 = arith.mulf %251, %253 : vector<18x32xf32>
    %cst_24 = arith.constant 0.000000e+00 : f32
    %255 = vector.broadcast %cst_24 : f32 to vector<18x32xf32>
    %256 = arith.cmpf olt, %254, %255 : vector<18x32xf32>
    %257 = math.absf %254 : vector<18x32xf32>
    %cst_25 = arith.constant 2.41421366 : f32
    %258 = vector.broadcast %cst_25 : f32 to vector<18x32xf32>
    %259 = arith.cmpf ogt, %257, %258 : vector<18x32xf32>
    %cst_26 = arith.constant 0.414213568 : f32
    %260 = vector.broadcast %cst_26 : f32 to vector<18x32xf32>
    %261 = arith.cmpf ogt, %257, %260 : vector<18x32xf32>
    %cst_27 = arith.constant 1.000000e-30 : f32
    %262 = vector.broadcast %cst_27 : f32 to vector<18x32xf32>
    %263 = arith.maximumf %257, %262 : vector<18x32xf32>
    %cst_28 = arith.constant -1.000000e+00 : f32
    %264 = vector.broadcast %cst_28 : f32 to vector<18x32xf32>
    %265 = arith.divf %264, %263 : vector<18x32xf32>
    %cst_29 = arith.constant 1.000000e+00 : f32
    %266 = vector.broadcast %cst_29 : f32 to vector<18x32xf32>
    %267 = arith.subf %257, %266 : vector<18x32xf32>
    %cst_30 = arith.constant 1.000000e+00 : f32
    %268 = vector.broadcast %cst_30 : f32 to vector<18x32xf32>
    %269 = arith.addf %257, %268 : vector<18x32xf32>
    %270 = arith.divf %267, %269 : vector<18x32xf32>
    %271 = arith.select %261, %270, %257 : vector<18x32xi1>, vector<18x32xf32>
    %272 = arith.select %259, %265, %271 : vector<18x32xi1>, vector<18x32xf32>
    %cst_31 = arith.constant 0.785398185 : f32
    %cst_32 = arith.constant 0.000000e+00 : f32
    %273 = vector.broadcast %cst_31 : f32 to vector<18x32xf32>
    %274 = vector.broadcast %cst_32 : f32 to vector<18x32xf32>
    %275 = arith.select %261, %273, %274 : vector<18x32xi1>, vector<18x32xf32>
    %cst_33 = arith.constant 1.57079637 : f32
    %276 = vector.broadcast %cst_33 : f32 to vector<18x32xf32>
    %277 = arith.select %259, %276, %275 : vector<18x32xi1>, vector<18x32xf32>
    %278 = arith.mulf %272, %272 : vector<18x32xf32>
    %cst_34 = arith.constant 0.0805374458 : f32
    %279 = vector.broadcast %cst_34 : f32 to vector<18x32xf32>
    %280 = arith.mulf %279, %278 : vector<18x32xf32>
    %cst_35 = arith.constant 0.138776854 : f32
    %281 = vector.broadcast %cst_35 : f32 to vector<18x32xf32>
    %282 = arith.subf %280, %281 : vector<18x32xf32>
    %283 = arith.mulf %282, %278 : vector<18x32xf32>
    %cst_36 = arith.constant 0.199777111 : f32
    %284 = vector.broadcast %cst_36 : f32 to vector<18x32xf32>
    %285 = arith.addf %283, %284 : vector<18x32xf32>
    %286 = arith.mulf %285, %278 : vector<18x32xf32>
    %cst_37 = arith.constant 0.333329499 : f32
    %287 = vector.broadcast %cst_37 : f32 to vector<18x32xf32>
    %288 = arith.subf %286, %287 : vector<18x32xf32>
    %289 = arith.mulf %288, %278 : vector<18x32xf32>
    %290 = arith.mulf %289, %272 : vector<18x32xf32>
    %291 = arith.addf %290, %272 : vector<18x32xf32>
    %292 = arith.addf %277, %291 : vector<18x32xf32>
    %cst_38 = arith.constant 0.000000e+00 : f32
    %293 = vector.broadcast %cst_38 : f32 to vector<18x32xf32>
    %294 = arith.subf %293, %292 : vector<18x32xf32>
    %295 = arith.select %256, %294, %292 : vector<18x32xi1>, vector<18x32xf32>
    %cst_39 = arith.constant 1.908000e+00 : f32
    %296 = vector.broadcast %cst_39 : f32 to vector<18x32xf32>
    %297 = arith.mulf %296, %295 : vector<18x32xf32>
    %298 = math.exp %297 : vector<18x32xf32>
    %299 = arith.mulf %298, %194 : vector<18x32xf32>
    %300 = arith.addf %299, %252 : vector<18x32xf32>
    %c1 = arith.constant 1 : index
    %c0_40 = arith.constant 0 : index
    %c0_41 = arith.constant 0 : index
    %301 = vector.load %arg1[%c1, %c0_40, %c0_41] : memref<4x32x192xbf16, #tpu.memory_space<vmem>>, vector<1x32x192xbf16>
    %302 = vector.shape_cast %301 : vector<1x32x192xbf16> to vector<32x192xbf16>
    %c1_42 = arith.constant 1 : index
    %c0_43 = arith.constant 0 : index
    %c0_44 = arith.constant 0 : index
    %303 = vector.load %arg2[%c1_42, %c0_43, %c0_44] : memref<4x1x192xf32, #tpu.memory_space<vmem>>, vector<1x1x192xf32>
    %304 = vector.shape_cast %303 : vector<1x1x192xf32> to vector<1x192xf32>
    %c1_45 = arith.constant 1 : index
    %c0_46 = arith.constant 0 : index
    %c0_47 = arith.constant 0 : index
    %305 = vector.load %arg3[%c1_45, %c0_46, %c0_47] : memref<4x64x64xbf16, #tpu.memory_space<vmem>>, vector<1x64x64xbf16>
    %306 = vector.shape_cast %305 : vector<1x64x64xbf16> to vector<64x64xbf16>
    %c1_48 = arith.constant 1 : index
    %c0_49 = arith.constant 0 : index
    %c0_50 = arith.constant 0 : index
    %307 = vector.load %arg4[%c1_48, %c0_49, %c0_50] : memref<4x1x64xf32, #tpu.memory_space<vmem>>, vector<1x1x64xf32>
    %308 = vector.shape_cast %307 : vector<1x1x64xf32> to vector<1x64xf32>
    %309 = arith.truncf %300 : vector<18x32xf32> to vector<18x32xbf16>
    %cst_51 = arith.constant dense<0.000000e+00> : vector<18x192xf32>
    %310 = tpu.matmul %309, %302, %cst_51 {dimension_numbers = #tpu.dot_dimension_numbers<[1], [0], [0], [1], [0, 0, 1, 1], [], []>} : vector<18x32xbf16>, vector<32x192xbf16>, vector<18x192xf32> -> vector<18x192xf32>
    %311 = vector.broadcast %304 : vector<1x192xf32> to vector<18x192xf32>
    %312 = arith.addf %310, %311 : vector<18x192xf32>
    %313 = vector.extract_strided_slice %312 {offsets = [0, 0], sizes = [18, 64], strides = [1, 1]} : vector<18x192xf32> to vector<18x64xf32>
    %314 = vector.extract_strided_slice %312 {offsets = [0, 64], sizes = [18, 64], strides = [1, 1]} : vector<18x192xf32> to vector<18x64xf32>
    %315 = vector.extract_strided_slice %312 {offsets = [0, 128], sizes = [18, 64], strides = [1, 1]} : vector<18x192xf32> to vector<18x64xf32>
    %316 = vector.extract_strided_slice %313 {offsets = [0, 0], sizes = [9, 64], strides = [1, 1]} : vector<18x64xf32> to vector<9x64xf32>
    %317 = arith.truncf %316 : vector<9x64xf32> to vector<9x64xbf16>
    %318 = vector.extract_strided_slice %314 {offsets = [0, 0], sizes = [9, 64], strides = [1, 1]} : vector<18x64xf32> to vector<9x64xf32>
    %319 = arith.truncf %318 : vector<9x64xf32> to vector<9x64xbf16>
    %320 = vector.extract_strided_slice %315 {offsets = [0, 0], sizes = [9, 64], strides = [1, 1]} : vector<18x64xf32> to vector<9x64xf32>
    %321 = arith.truncf %320 : vector<9x64xf32> to vector<9x64xbf16>
    %cst_52 = arith.constant dense<0.000000e+00> : vector<9x9xf32>
    %322 = tpu.matmul %317, %319, %cst_52 {dimension_numbers = #tpu.dot_dimension_numbers<[1], [1], [0], [0], [0, 0, 1, 0], [], []>} : vector<9x64xbf16>, vector<9x64xbf16>, vector<9x9xf32> -> vector<9x9xf32>
    %cst_53 = arith.constant dense<0xFF800000> : vector<9xf32>
    %323 = vector.multi_reduction <maximumf>, %322, %cst_53 [1] : vector<9x9xf32> to vector<9xf32>
    %324 = vector.shape_cast %323 : vector<9xf32> to vector<9x1xf32>
    %325 = vector.broadcast %324 : vector<9x1xf32> to vector<9x9xf32>
    %326 = arith.subf %322, %325 : vector<9x9xf32>
    %327 = math.exp %326 : vector<9x9xf32>
    %cst_54 = arith.constant dense<0.000000e+00> : vector<9xf32>
    %328 = vector.multi_reduction <add>, %327, %cst_54 [1] : vector<9x9xf32> to vector<9xf32>
    %329 = vector.shape_cast %328 : vector<9xf32> to vector<9x1xf32>
    %330 = vector.broadcast %329 : vector<9x1xf32> to vector<9x9xf32>
    %331 = arith.divf %327, %330 : vector<9x9xf32>
    %332 = arith.truncf %331 : vector<9x9xf32> to vector<9x9xbf16>
    %cst_55 = arith.constant dense<0.000000e+00> : vector<9x64xf32>
    %333 = tpu.matmul %332, %321, %cst_55 {dimension_numbers = #tpu.dot_dimension_numbers<[1], [0], [0], [1], [0, 0, 1, 1], [], []>} : vector<9x9xbf16>, vector<9x64xbf16>, vector<9x64xf32> -> vector<9x64xf32>
    %334 = vector.extract_strided_slice %313 {offsets = [9, 0], sizes = [9, 64], strides = [1, 1]} : vector<18x64xf32> to vector<9x64xf32>
    %335 = arith.truncf %334 : vector<9x64xf32> to vector<9x64xbf16>
    %336 = vector.extract_strided_slice %314 {offsets = [9, 0], sizes = [9, 64], strides = [1, 1]} : vector<18x64xf32> to vector<9x64xf32>
    %337 = arith.truncf %336 : vector<9x64xf32> to vector<9x64xbf16>
    %338 = vector.extract_strided_slice %315 {offsets = [9, 0], sizes = [9, 64], strides = [1, 1]} : vector<18x64xf32> to vector<9x64xf32>
    %339 = arith.truncf %338 : vector<9x64xf32> to vector<9x64xbf16>
    %cst_56 = arith.constant dense<0.000000e+00> : vector<9x9xf32>
    %340 = tpu.matmul %335, %337, %cst_56 {dimension_numbers = #tpu.dot_dimension_numbers<[1], [1], [0], [0], [0, 0, 1, 0], [], []>} : vector<9x64xbf16>, vector<9x64xbf16>, vector<9x9xf32> -> vector<9x9xf32>
    %cst_57 = arith.constant dense<0xFF800000> : vector<9xf32>
    %341 = vector.multi_reduction <maximumf>, %340, %cst_57 [1] : vector<9x9xf32> to vector<9xf32>
    %342 = vector.shape_cast %341 : vector<9xf32> to vector<9x1xf32>
    %343 = vector.broadcast %342 : vector<9x1xf32> to vector<9x9xf32>
    %344 = arith.subf %340, %343 : vector<9x9xf32>
    %345 = math.exp %344 : vector<9x9xf32>
    %cst_58 = arith.constant dense<0.000000e+00> : vector<9xf32>
    %346 = vector.multi_reduction <add>, %345, %cst_58 [1] : vector<9x9xf32> to vector<9xf32>
    %347 = vector.shape_cast %346 : vector<9xf32> to vector<9x1xf32>
    %348 = vector.broadcast %347 : vector<9x1xf32> to vector<9x9xf32>
    %349 = arith.divf %345, %348 : vector<9x9xf32>
    %350 = arith.truncf %349 : vector<9x9xf32> to vector<9x9xbf16>
    %cst_59 = arith.constant dense<0.000000e+00> : vector<9x64xf32>
    %351 = tpu.matmul %350, %339, %cst_59 {dimension_numbers = #tpu.dot_dimension_numbers<[1], [0], [0], [1], [0, 0, 1, 1], [], []>} : vector<9x9xbf16>, vector<9x64xbf16>, vector<9x64xf32> -> vector<9x64xf32>
    %352 = tpu.concatenate %333, %351 in 0 : vector<9x64xf32>, vector<9x64xf32> -> vector<18x64xf32>
    %353 = arith.truncf %352 : vector<18x64xf32> to vector<18x64xbf16>
    %cst_60 = arith.constant dense<0.000000e+00> : vector<18x64xf32>
    %354 = tpu.matmul %353, %306, %cst_60 {dimension_numbers = #tpu.dot_dimension_numbers<[1], [0], [0], [1], [0, 0, 1, 1], [], []>} : vector<18x64xbf16>, vector<64x64xbf16>, vector<18x64xf32> -> vector<18x64xf32>
    %355 = vector.broadcast %308 : vector<1x64xf32> to vector<18x64xf32>
    %356 = arith.addf %354, %355 : vector<18x64xf32>
    %357 = vector.extract_strided_slice %356 {offsets = [0, 0], sizes = [18, 32], strides = [1, 1]} : vector<18x64xf32> to vector<18x32xf32>
    %358 = vector.extract_strided_slice %356 {offsets = [0, 32], sizes = [18, 32], strides = [1, 1]} : vector<18x64xf32> to vector<18x32xf32>
    %cst_61 = arith.constant 0.333333343 : f32
    %359 = vector.broadcast %cst_61 : f32 to vector<18x32xf32>
    %360 = arith.mulf %357, %359 : vector<18x32xf32>
    %cst_62 = arith.constant 0.000000e+00 : f32
    %361 = vector.broadcast %cst_62 : f32 to vector<18x32xf32>
    %362 = arith.cmpf olt, %360, %361 : vector<18x32xf32>
    %363 = math.absf %360 : vector<18x32xf32>
    %cst_63 = arith.constant 2.41421366 : f32
    %364 = vector.broadcast %cst_63 : f32 to vector<18x32xf32>
    %365 = arith.cmpf ogt, %363, %364 : vector<18x32xf32>
    %cst_64 = arith.constant 0.414213568 : f32
    %366 = vector.broadcast %cst_64 : f32 to vector<18x32xf32>
    %367 = arith.cmpf ogt, %363, %366 : vector<18x32xf32>
    %cst_65 = arith.constant 1.000000e-30 : f32
    %368 = vector.broadcast %cst_65 : f32 to vector<18x32xf32>
    %369 = arith.maximumf %363, %368 : vector<18x32xf32>
    %cst_66 = arith.constant -1.000000e+00 : f32
    %370 = vector.broadcast %cst_66 : f32 to vector<18x32xf32>
    %371 = arith.divf %370, %369 : vector<18x32xf32>
    %cst_67 = arith.constant 1.000000e+00 : f32
    %372 = vector.broadcast %cst_67 : f32 to vector<18x32xf32>
    %373 = arith.subf %363, %372 : vector<18x32xf32>
    %cst_68 = arith.constant 1.000000e+00 : f32
    %374 = vector.broadcast %cst_68 : f32 to vector<18x32xf32>
    %375 = arith.addf %363, %374 : vector<18x32xf32>
    %376 = arith.divf %373, %375 : vector<18x32xf32>
    %377 = arith.select %367, %376, %363 : vector<18x32xi1>, vector<18x32xf32>
    %378 = arith.select %365, %371, %377 : vector<18x32xi1>, vector<18x32xf32>
    %cst_69 = arith.constant 0.785398185 : f32
    %cst_70 = arith.constant 0.000000e+00 : f32
    %379 = vector.broadcast %cst_69 : f32 to vector<18x32xf32>
    %380 = vector.broadcast %cst_70 : f32 to vector<18x32xf32>
    %381 = arith.select %367, %379, %380 : vector<18x32xi1>, vector<18x32xf32>
    %cst_71 = arith.constant 1.57079637 : f32
    %382 = vector.broadcast %cst_71 : f32 to vector<18x32xf32>
    %383 = arith.select %365, %382, %381 : vector<18x32xi1>, vector<18x32xf32>
    %384 = arith.mulf %378, %378 : vector<18x32xf32>
    %cst_72 = arith.constant 0.0805374458 : f32
    %385 = vector.broadcast %cst_72 : f32 to vector<18x32xf32>
    %386 = arith.mulf %385, %384 : vector<18x32xf32>
    %cst_73 = arith.constant 0.138776854 : f32
    %387 = vector.broadcast %cst_73 : f32 to vector<18x32xf32>
    %388 = arith.subf %386, %387 : vector<18x32xf32>
    %389 = arith.mulf %388, %384 : vector<18x32xf32>
    %cst_74 = arith.constant 0.199777111 : f32
    %390 = vector.broadcast %cst_74 : f32 to vector<18x32xf32>
    %391 = arith.addf %389, %390 : vector<18x32xf32>
    %392 = arith.mulf %391, %384 : vector<18x32xf32>
    %cst_75 = arith.constant 0.333329499 : f32
    %393 = vector.broadcast %cst_75 : f32 to vector<18x32xf32>
    %394 = arith.subf %392, %393 : vector<18x32xf32>
    %395 = arith.mulf %394, %384 : vector<18x32xf32>
    %396 = arith.mulf %395, %378 : vector<18x32xf32>
    %397 = arith.addf %396, %378 : vector<18x32xf32>
    %398 = arith.addf %383, %397 : vector<18x32xf32>
    %cst_76 = arith.constant 0.000000e+00 : f32
    %399 = vector.broadcast %cst_76 : f32 to vector<18x32xf32>
    %400 = arith.subf %399, %398 : vector<18x32xf32>
    %401 = arith.select %362, %400, %398 : vector<18x32xi1>, vector<18x32xf32>
    %cst_77 = arith.constant 1.908000e+00 : f32
    %402 = vector.broadcast %cst_77 : f32 to vector<18x32xf32>
    %403 = arith.mulf %402, %401 : vector<18x32xf32>
    %404 = math.exp %403 : vector<18x32xf32>
    %405 = arith.mulf %404, %300 : vector<18x32xf32>
    %406 = arith.addf %405, %358 : vector<18x32xf32>
    %c2 = arith.constant 2 : index
    %c0_78 = arith.constant 0 : index
    %c0_79 = arith.constant 0 : index
    %407 = vector.load %arg1[%c2, %c0_78, %c0_79] : memref<4x32x192xbf16, #tpu.memory_space<vmem>>, vector<1x32x192xbf16>
    %408 = vector.shape_cast %407 : vector<1x32x192xbf16> to vector<32x192xbf16>
    %c2_80 = arith.constant 2 : index
    %c0_81 = arith.constant 0 : index
    %c0_82 = arith.constant 0 : index
    %409 = vector.load %arg2[%c2_80, %c0_81, %c0_82] : memref<4x1x192xf32, #tpu.memory_space<vmem>>, vector<1x1x192xf32>
    %410 = vector.shape_cast %409 : vector<1x1x192xf32> to vector<1x192xf32>
    %c2_83 = arith.constant 2 : index
    %c0_84 = arith.constant 0 : index
    %c0_85 = arith.constant 0 : index
    %411 = vector.load %arg3[%c2_83, %c0_84, %c0_85] : memref<4x64x64xbf16, #tpu.memory_space<vmem>>, vector<1x64x64xbf16>
    %412 = vector.shape_cast %411 : vector<1x64x64xbf16> to vector<64x64xbf16>
    %c2_86 = arith.constant 2 : index
    %c0_87 = arith.constant 0 : index
    %c0_88 = arith.constant 0 : index
    %413 = vector.load %arg4[%c2_86, %c0_87, %c0_88] : memref<4x1x64xf32, #tpu.memory_space<vmem>>, vector<1x1x64xf32>
    %414 = vector.shape_cast %413 : vector<1x1x64xf32> to vector<1x64xf32>
    %415 = arith.truncf %406 : vector<18x32xf32> to vector<18x32xbf16>
    %cst_89 = arith.constant dense<0.000000e+00> : vector<18x192xf32>
    %416 = tpu.matmul %415, %408, %cst_89 {dimension_numbers = #tpu.dot_dimension_numbers<[1], [0], [0], [1], [0, 0, 1, 1], [], []>} : vector<18x32xbf16>, vector<32x192xbf16>, vector<18x192xf32> -> vector<18x192xf32>
    %417 = vector.broadcast %410 : vector<1x192xf32> to vector<18x192xf32>
    %418 = arith.addf %416, %417 : vector<18x192xf32>
    %419 = vector.extract_strided_slice %418 {offsets = [0, 0], sizes = [18, 64], strides = [1, 1]} : vector<18x192xf32> to vector<18x64xf32>
    %420 = vector.extract_strided_slice %418 {offsets = [0, 64], sizes = [18, 64], strides = [1, 1]} : vector<18x192xf32> to vector<18x64xf32>
    %421 = vector.extract_strided_slice %418 {offsets = [0, 128], sizes = [18, 64], strides = [1, 1]} : vector<18x192xf32> to vector<18x64xf32>
    %422 = vector.extract_strided_slice %419 {offsets = [0, 0], sizes = [9, 64], strides = [1, 1]} : vector<18x64xf32> to vector<9x64xf32>
    %423 = arith.truncf %422 : vector<9x64xf32> to vector<9x64xbf16>
    %424 = vector.extract_strided_slice %420 {offsets = [0, 0], sizes = [9, 64], strides = [1, 1]} : vector<18x64xf32> to vector<9x64xf32>
    %425 = arith.truncf %424 : vector<9x64xf32> to vector<9x64xbf16>
    %426 = vector.extract_strided_slice %421 {offsets = [0, 0], sizes = [9, 64], strides = [1, 1]} : vector<18x64xf32> to vector<9x64xf32>
    %427 = arith.truncf %426 : vector<9x64xf32> to vector<9x64xbf16>
    %cst_90 = arith.constant dense<0.000000e+00> : vector<9x9xf32>
    %428 = tpu.matmul %423, %425, %cst_90 {dimension_numbers = #tpu.dot_dimension_numbers<[1], [1], [0], [0], [0, 0, 1, 0], [], []>} : vector<9x64xbf16>, vector<9x64xbf16>, vector<9x9xf32> -> vector<9x9xf32>
    %cst_91 = arith.constant dense<0xFF800000> : vector<9xf32>
    %429 = vector.multi_reduction <maximumf>, %428, %cst_91 [1] : vector<9x9xf32> to vector<9xf32>
    %430 = vector.shape_cast %429 : vector<9xf32> to vector<9x1xf32>
    %431 = vector.broadcast %430 : vector<9x1xf32> to vector<9x9xf32>
    %432 = arith.subf %428, %431 : vector<9x9xf32>
    %433 = math.exp %432 : vector<9x9xf32>
    %cst_92 = arith.constant dense<0.000000e+00> : vector<9xf32>
    %434 = vector.multi_reduction <add>, %433, %cst_92 [1] : vector<9x9xf32> to vector<9xf32>
    %435 = vector.shape_cast %434 : vector<9xf32> to vector<9x1xf32>
    %436 = vector.broadcast %435 : vector<9x1xf32> to vector<9x9xf32>
    %437 = arith.divf %433, %436 : vector<9x9xf32>
    %438 = arith.truncf %437 : vector<9x9xf32> to vector<9x9xbf16>
    %cst_93 = arith.constant dense<0.000000e+00> : vector<9x64xf32>
    %439 = tpu.matmul %438, %427, %cst_93 {dimension_numbers = #tpu.dot_dimension_numbers<[1], [0], [0], [1], [0, 0, 1, 1], [], []>} : vector<9x9xbf16>, vector<9x64xbf16>, vector<9x64xf32> -> vector<9x64xf32>
    %440 = vector.extract_strided_slice %419 {offsets = [9, 0], sizes = [9, 64], strides = [1, 1]} : vector<18x64xf32> to vector<9x64xf32>
    %441 = arith.truncf %440 : vector<9x64xf32> to vector<9x64xbf16>
    %442 = vector.extract_strided_slice %420 {offsets = [9, 0], sizes = [9, 64], strides = [1, 1]} : vector<18x64xf32> to vector<9x64xf32>
    %443 = arith.truncf %442 : vector<9x64xf32> to vector<9x64xbf16>
    %444 = vector.extract_strided_slice %421 {offsets = [9, 0], sizes = [9, 64], strides = [1, 1]} : vector<18x64xf32> to vector<9x64xf32>
    %445 = arith.truncf %444 : vector<9x64xf32> to vector<9x64xbf16>
    %cst_94 = arith.constant dense<0.000000e+00> : vector<9x9xf32>
    %446 = tpu.matmul %441, %443, %cst_94 {dimension_numbers = #tpu.dot_dimension_numbers<[1], [1], [0], [0], [0, 0, 1, 0], [], []>} : vector<9x64xbf16>, vector<9x64xbf16>, vector<9x9xf32> -> vector<9x9xf32>
    %cst_95 = arith.constant dense<0xFF800000> : vector<9xf32>
    %447 = vector.multi_reduction <maximumf>, %446, %cst_95 [1] : vector<9x9xf32> to vector<9xf32>
    %448 = vector.shape_cast %447 : vector<9xf32> to vector<9x1xf32>
    %449 = vector.broadcast %448 : vector<9x1xf32> to vector<9x9xf32>
    %450 = arith.subf %446, %449 : vector<9x9xf32>
    %451 = math.exp %450 : vector<9x9xf32>
    %cst_96 = arith.constant dense<0.000000e+00> : vector<9xf32>
    %452 = vector.multi_reduction <add>, %451, %cst_96 [1] : vector<9x9xf32> to vector<9xf32>
    %453 = vector.shape_cast %452 : vector<9xf32> to vector<9x1xf32>
    %454 = vector.broadcast %453 : vector<9x1xf32> to vector<9x9xf32>
    %455 = arith.divf %451, %454 : vector<9x9xf32>
    %456 = arith.truncf %455 : vector<9x9xf32> to vector<9x9xbf16>
    %cst_97 = arith.constant dense<0.000000e+00> : vector<9x64xf32>
    %457 = tpu.matmul %456, %445, %cst_97 {dimension_numbers = #tpu.dot_dimension_numbers<[1], [0], [0], [1], [0, 0, 1, 1], [], []>} : vector<9x9xbf16>, vector<9x64xbf16>, vector<9x64xf32> -> vector<9x64xf32>
    %458 = tpu.concatenate %439, %457 in 0 : vector<9x64xf32>, vector<9x64xf32> -> vector<18x64xf32>
    %459 = arith.truncf %458 : vector<18x64xf32> to vector<18x64xbf16>
    %cst_98 = arith.constant dense<0.000000e+00> : vector<18x64xf32>
    %460 = tpu.matmul %459, %412, %cst_98 {dimension_numbers = #tpu.dot_dimension_numbers<[1], [0], [0], [1], [0, 0, 1, 1], [], []>} : vector<18x64xbf16>, vector<64x64xbf16>, vector<18x64xf32> -> vector<18x64xf32>
    %461 = vector.broadcast %414 : vector<1x64xf32> to vector<18x64xf32>
    %462 = arith.addf %460, %461 : vector<18x64xf32>
    %463 = vector.extract_strided_slice %462 {offsets = [0, 0], sizes = [18, 32], strides = [1, 1]} : vector<18x64xf32> to vector<18x32xf32>
    %464 = vector.extract_strided_slice %462 {offsets = [0, 32], sizes = [18, 32], strides = [1, 1]} : vector<18x64xf32> to vector<18x32xf32>
    %cst_99 = arith.constant 0.333333343 : f32
    %465 = vector.broadcast %cst_99 : f32 to vector<18x32xf32>
    %466 = arith.mulf %463, %465 : vector<18x32xf32>
    %cst_100 = arith.constant 0.000000e+00 : f32
    %467 = vector.broadcast %cst_100 : f32 to vector<18x32xf32>
    %468 = arith.cmpf olt, %466, %467 : vector<18x32xf32>
    %469 = math.absf %466 : vector<18x32xf32>
    %cst_101 = arith.constant 2.41421366 : f32
    %470 = vector.broadcast %cst_101 : f32 to vector<18x32xf32>
    %471 = arith.cmpf ogt, %469, %470 : vector<18x32xf32>
    %cst_102 = arith.constant 0.414213568 : f32
    %472 = vector.broadcast %cst_102 : f32 to vector<18x32xf32>
    %473 = arith.cmpf ogt, %469, %472 : vector<18x32xf32>
    %cst_103 = arith.constant 1.000000e-30 : f32
    %474 = vector.broadcast %cst_103 : f32 to vector<18x32xf32>
    %475 = arith.maximumf %469, %474 : vector<18x32xf32>
    %cst_104 = arith.constant -1.000000e+00 : f32
    %476 = vector.broadcast %cst_104 : f32 to vector<18x32xf32>
    %477 = arith.divf %476, %475 : vector<18x32xf32>
    %cst_105 = arith.constant 1.000000e+00 : f32
    %478 = vector.broadcast %cst_105 : f32 to vector<18x32xf32>
    %479 = arith.subf %469, %478 : vector<18x32xf32>
    %cst_106 = arith.constant 1.000000e+00 : f32
    %480 = vector.broadcast %cst_106 : f32 to vector<18x32xf32>
    %481 = arith.addf %469, %480 : vector<18x32xf32>
    %482 = arith.divf %479, %481 : vector<18x32xf32>
    %483 = arith.select %473, %482, %469 : vector<18x32xi1>, vector<18x32xf32>
    %484 = arith.select %471, %477, %483 : vector<18x32xi1>, vector<18x32xf32>
    %cst_107 = arith.constant 0.785398185 : f32
    %cst_108 = arith.constant 0.000000e+00 : f32
    %485 = vector.broadcast %cst_107 : f32 to vector<18x32xf32>
    %486 = vector.broadcast %cst_108 : f32 to vector<18x32xf32>
    %487 = arith.select %473, %485, %486 : vector<18x32xi1>, vector<18x32xf32>
    %cst_109 = arith.constant 1.57079637 : f32
    %488 = vector.broadcast %cst_109 : f32 to vector<18x32xf32>
    %489 = arith.select %471, %488, %487 : vector<18x32xi1>, vector<18x32xf32>
    %490 = arith.mulf %484, %484 : vector<18x32xf32>
    %cst_110 = arith.constant 0.0805374458 : f32
    %491 = vector.broadcast %cst_110 : f32 to vector<18x32xf32>
    %492 = arith.mulf %491, %490 : vector<18x32xf32>
    %cst_111 = arith.constant 0.138776854 : f32
    %493 = vector.broadcast %cst_111 : f32 to vector<18x32xf32>
    %494 = arith.subf %492, %493 : vector<18x32xf32>
    %495 = arith.mulf %494, %490 : vector<18x32xf32>
    %cst_112 = arith.constant 0.199777111 : f32
    %496 = vector.broadcast %cst_112 : f32 to vector<18x32xf32>
    %497 = arith.addf %495, %496 : vector<18x32xf32>
    %498 = arith.mulf %497, %490 : vector<18x32xf32>
    %cst_113 = arith.constant 0.333329499 : f32
    %499 = vector.broadcast %cst_113 : f32 to vector<18x32xf32>
    %500 = arith.subf %498, %499 : vector<18x32xf32>
    %501 = arith.mulf %500, %490 : vector<18x32xf32>
    %502 = arith.mulf %501, %484 : vector<18x32xf32>
    %503 = arith.addf %502, %484 : vector<18x32xf32>
    %504 = arith.addf %489, %503 : vector<18x32xf32>
    %cst_114 = arith.constant 0.000000e+00 : f32
    %505 = vector.broadcast %cst_114 : f32 to vector<18x32xf32>
    %506 = arith.subf %505, %504 : vector<18x32xf32>
    %507 = arith.select %468, %506, %504 : vector<18x32xi1>, vector<18x32xf32>
    %cst_115 = arith.constant 1.908000e+00 : f32
    %508 = vector.broadcast %cst_115 : f32 to vector<18x32xf32>
    %509 = arith.mulf %508, %507 : vector<18x32xf32>
    %510 = math.exp %509 : vector<18x32xf32>
    %511 = arith.mulf %510, %406 : vector<18x32xf32>
    %512 = arith.addf %511, %464 : vector<18x32xf32>
    %c3 = arith.constant 3 : index
    %c0_116 = arith.constant 0 : index
    %c0_117 = arith.constant 0 : index
    %513 = vector.load %arg1[%c3, %c0_116, %c0_117] : memref<4x32x192xbf16, #tpu.memory_space<vmem>>, vector<1x32x192xbf16>
    %514 = vector.shape_cast %513 : vector<1x32x192xbf16> to vector<32x192xbf16>
    %c3_118 = arith.constant 3 : index
    %c0_119 = arith.constant 0 : index
    %c0_120 = arith.constant 0 : index
    %515 = vector.load %arg2[%c3_118, %c0_119, %c0_120] : memref<4x1x192xf32, #tpu.memory_space<vmem>>, vector<1x1x192xf32>
    %516 = vector.shape_cast %515 : vector<1x1x192xf32> to vector<1x192xf32>
    %c3_121 = arith.constant 3 : index
    %c0_122 = arith.constant 0 : index
    %c0_123 = arith.constant 0 : index
    %517 = vector.load %arg3[%c3_121, %c0_122, %c0_123] : memref<4x64x64xbf16, #tpu.memory_space<vmem>>, vector<1x64x64xbf16>
    %518 = vector.shape_cast %517 : vector<1x64x64xbf16> to vector<64x64xbf16>
    %c3_124 = arith.constant 3 : index
    %c0_125 = arith.constant 0 : index
    %c0_126 = arith.constant 0 : index
    %519 = vector.load %arg4[%c3_124, %c0_125, %c0_126] : memref<4x1x64xf32, #tpu.memory_space<vmem>>, vector<1x1x64xf32>
    %520 = vector.shape_cast %519 : vector<1x1x64xf32> to vector<1x64xf32>
    %521 = arith.truncf %512 : vector<18x32xf32> to vector<18x32xbf16>
    %cst_127 = arith.constant dense<0.000000e+00> : vector<18x192xf32>
    %522 = tpu.matmul %521, %514, %cst_127 {dimension_numbers = #tpu.dot_dimension_numbers<[1], [0], [0], [1], [0, 0, 1, 1], [], []>} : vector<18x32xbf16>, vector<32x192xbf16>, vector<18x192xf32> -> vector<18x192xf32>
    %523 = vector.broadcast %516 : vector<1x192xf32> to vector<18x192xf32>
    %524 = arith.addf %522, %523 : vector<18x192xf32>
    %525 = vector.extract_strided_slice %524 {offsets = [0, 0], sizes = [18, 64], strides = [1, 1]} : vector<18x192xf32> to vector<18x64xf32>
    %526 = vector.extract_strided_slice %524 {offsets = [0, 64], sizes = [18, 64], strides = [1, 1]} : vector<18x192xf32> to vector<18x64xf32>
    %527 = vector.extract_strided_slice %524 {offsets = [0, 128], sizes = [18, 64], strides = [1, 1]} : vector<18x192xf32> to vector<18x64xf32>
    %528 = vector.extract_strided_slice %525 {offsets = [0, 0], sizes = [9, 64], strides = [1, 1]} : vector<18x64xf32> to vector<9x64xf32>
    %529 = arith.truncf %528 : vector<9x64xf32> to vector<9x64xbf16>
    %530 = vector.extract_strided_slice %526 {offsets = [0, 0], sizes = [9, 64], strides = [1, 1]} : vector<18x64xf32> to vector<9x64xf32>
    %531 = arith.truncf %530 : vector<9x64xf32> to vector<9x64xbf16>
    %532 = vector.extract_strided_slice %527 {offsets = [0, 0], sizes = [9, 64], strides = [1, 1]} : vector<18x64xf32> to vector<9x64xf32>
    %533 = arith.truncf %532 : vector<9x64xf32> to vector<9x64xbf16>
    %cst_128 = arith.constant dense<0.000000e+00> : vector<9x9xf32>
    %534 = tpu.matmul %529, %531, %cst_128 {dimension_numbers = #tpu.dot_dimension_numbers<[1], [1], [0], [0], [0, 0, 1, 0], [], []>} : vector<9x64xbf16>, vector<9x64xbf16>, vector<9x9xf32> -> vector<9x9xf32>
    %cst_129 = arith.constant dense<0xFF800000> : vector<9xf32>
    %535 = vector.multi_reduction <maximumf>, %534, %cst_129 [1] : vector<9x9xf32> to vector<9xf32>
    %536 = vector.shape_cast %535 : vector<9xf32> to vector<9x1xf32>
    %537 = vector.broadcast %536 : vector<9x1xf32> to vector<9x9xf32>
    %538 = arith.subf %534, %537 : vector<9x9xf32>
    %539 = math.exp %538 : vector<9x9xf32>
    %cst_130 = arith.constant dense<0.000000e+00> : vector<9xf32>
    %540 = vector.multi_reduction <add>, %539, %cst_130 [1] : vector<9x9xf32> to vector<9xf32>
    %541 = vector.shape_cast %540 : vector<9xf32> to vector<9x1xf32>
    %542 = vector.broadcast %541 : vector<9x1xf32> to vector<9x9xf32>
    %543 = arith.divf %539, %542 : vector<9x9xf32>
    %544 = arith.truncf %543 : vector<9x9xf32> to vector<9x9xbf16>
    %cst_131 = arith.constant dense<0.000000e+00> : vector<9x64xf32>
    %545 = tpu.matmul %544, %533, %cst_131 {dimension_numbers = #tpu.dot_dimension_numbers<[1], [0], [0], [1], [0, 0, 1, 1], [], []>} : vector<9x9xbf16>, vector<9x64xbf16>, vector<9x64xf32> -> vector<9x64xf32>
    %546 = vector.extract_strided_slice %525 {offsets = [9, 0], sizes = [9, 64], strides = [1, 1]} : vector<18x64xf32> to vector<9x64xf32>
    %547 = arith.truncf %546 : vector<9x64xf32> to vector<9x64xbf16>
    %548 = vector.extract_strided_slice %526 {offsets = [9, 0], sizes = [9, 64], strides = [1, 1]} : vector<18x64xf32> to vector<9x64xf32>
    %549 = arith.truncf %548 : vector<9x64xf32> to vector<9x64xbf16>
    %550 = vector.extract_strided_slice %527 {offsets = [9, 0], sizes = [9, 64], strides = [1, 1]} : vector<18x64xf32> to vector<9x64xf32>
    %551 = arith.truncf %550 : vector<9x64xf32> to vector<9x64xbf16>
    %cst_132 = arith.constant dense<0.000000e+00> : vector<9x9xf32>
    %552 = tpu.matmul %547, %549, %cst_132 {dimension_numbers = #tpu.dot_dimension_numbers<[1], [1], [0], [0], [0, 0, 1, 0], [], []>} : vector<9x64xbf16>, vector<9x64xbf16>, vector<9x9xf32> -> vector<9x9xf32>
    %cst_133 = arith.constant dense<0xFF800000> : vector<9xf32>
    %553 = vector.multi_reduction <maximumf>, %552, %cst_133 [1] : vector<9x9xf32> to vector<9xf32>
    %554 = vector.shape_cast %553 : vector<9xf32> to vector<9x1xf32>
    %555 = vector.broadcast %554 : vector<9x1xf32> to vector<9x9xf32>
    %556 = arith.subf %552, %555 : vector<9x9xf32>
    %557 = math.exp %556 : vector<9x9xf32>
    %cst_134 = arith.constant dense<0.000000e+00> : vector<9xf32>
    %558 = vector.multi_reduction <add>, %557, %cst_134 [1] : vector<9x9xf32> to vector<9xf32>
    %559 = vector.shape_cast %558 : vector<9xf32> to vector<9x1xf32>
    %560 = vector.broadcast %559 : vector<9x1xf32> to vector<9x9xf32>
    %561 = arith.divf %557, %560 : vector<9x9xf32>
    %562 = arith.truncf %561 : vector<9x9xf32> to vector<9x9xbf16>
    %cst_135 = arith.constant dense<0.000000e+00> : vector<9x64xf32>
    %563 = tpu.matmul %562, %551, %cst_135 {dimension_numbers = #tpu.dot_dimension_numbers<[1], [0], [0], [1], [0, 0, 1, 1], [], []>} : vector<9x9xbf16>, vector<9x64xbf16>, vector<9x64xf32> -> vector<9x64xf32>
    %564 = tpu.concatenate %545, %563 in 0 : vector<9x64xf32>, vector<9x64xf32> -> vector<18x64xf32>
    %565 = arith.truncf %564 : vector<18x64xf32> to vector<18x64xbf16>
    %cst_136 = arith.constant dense<0.000000e+00> : vector<18x64xf32>
    %566 = tpu.matmul %565, %518, %cst_136 {dimension_numbers = #tpu.dot_dimension_numbers<[1], [0], [0], [1], [0, 0, 1, 1], [], []>} : vector<18x64xbf16>, vector<64x64xbf16>, vector<18x64xf32> -> vector<18x64xf32>
    %567 = vector.broadcast %520 : vector<1x64xf32> to vector<18x64xf32>
    %568 = arith.addf %566, %567 : vector<18x64xf32>
    %569 = vector.extract_strided_slice %568 {offsets = [0, 0], sizes = [18, 32], strides = [1, 1]} : vector<18x64xf32> to vector<18x32xf32>
    %570 = vector.extract_strided_slice %568 {offsets = [0, 32], sizes = [18, 32], strides = [1, 1]} : vector<18x64xf32> to vector<18x32xf32>
    %cst_137 = arith.constant 0.333333343 : f32
    %571 = vector.broadcast %cst_137 : f32 to vector<18x32xf32>
    %572 = arith.mulf %569, %571 : vector<18x32xf32>
    %cst_138 = arith.constant 0.000000e+00 : f32
    %573 = vector.broadcast %cst_138 : f32 to vector<18x32xf32>
    %574 = arith.cmpf olt, %572, %573 : vector<18x32xf32>
    %575 = math.absf %572 : vector<18x32xf32>
    %cst_139 = arith.constant 2.41421366 : f32
    %576 = vector.broadcast %cst_139 : f32 to vector<18x32xf32>
    %577 = arith.cmpf ogt, %575, %576 : vector<18x32xf32>
    %cst_140 = arith.constant 0.414213568 : f32
    %578 = vector.broadcast %cst_140 : f32 to vector<18x32xf32>
    %579 = arith.cmpf ogt, %575, %578 : vector<18x32xf32>
    %cst_141 = arith.constant 1.000000e-30 : f32
    %580 = vector.broadcast %cst_141 : f32 to vector<18x32xf32>
    %581 = arith.maximumf %575, %580 : vector<18x32xf32>
    %cst_142 = arith.constant -1.000000e+00 : f32
    %582 = vector.broadcast %cst_142 : f32 to vector<18x32xf32>
    %583 = arith.divf %582, %581 : vector<18x32xf32>
    %cst_143 = arith.constant 1.000000e+00 : f32
    %584 = vector.broadcast %cst_143 : f32 to vector<18x32xf32>
    %585 = arith.subf %575, %584 : vector<18x32xf32>
    %cst_144 = arith.constant 1.000000e+00 : f32
    %586 = vector.broadcast %cst_144 : f32 to vector<18x32xf32>
    %587 = arith.addf %575, %586 : vector<18x32xf32>
    %588 = arith.divf %585, %587 : vector<18x32xf32>
    %589 = arith.select %579, %588, %575 : vector<18x32xi1>, vector<18x32xf32>
    %590 = arith.select %577, %583, %589 : vector<18x32xi1>, vector<18x32xf32>
    %cst_145 = arith.constant 0.785398185 : f32
    %cst_146 = arith.constant 0.000000e+00 : f32
    %591 = vector.broadcast %cst_145 : f32 to vector<18x32xf32>
    %592 = vector.broadcast %cst_146 : f32 to vector<18x32xf32>
    %593 = arith.select %579, %591, %592 : vector<18x32xi1>, vector<18x32xf32>
    %cst_147 = arith.constant 1.57079637 : f32
    %594 = vector.broadcast %cst_147 : f32 to vector<18x32xf32>
    %595 = arith.select %577, %594, %593 : vector<18x32xi1>, vector<18x32xf32>
    %596 = arith.mulf %590, %590 : vector<18x32xf32>
    %cst_148 = arith.constant 0.0805374458 : f32
    %597 = vector.broadcast %cst_148 : f32 to vector<18x32xf32>
    %598 = arith.mulf %597, %596 : vector<18x32xf32>
    %cst_149 = arith.constant 0.138776854 : f32
    %599 = vector.broadcast %cst_149 : f32 to vector<18x32xf32>
    %600 = arith.subf %598, %599 : vector<18x32xf32>
    %601 = arith.mulf %600, %596 : vector<18x32xf32>
    %cst_150 = arith.constant 0.199777111 : f32
    %602 = vector.broadcast %cst_150 : f32 to vector<18x32xf32>
    %603 = arith.addf %601, %602 : vector<18x32xf32>
    %604 = arith.mulf %603, %596 : vector<18x32xf32>
    %cst_151 = arith.constant 0.333329499 : f32
    %605 = vector.broadcast %cst_151 : f32 to vector<18x32xf32>
    %606 = arith.subf %604, %605 : vector<18x32xf32>
    %607 = arith.mulf %606, %596 : vector<18x32xf32>
    %608 = arith.mulf %607, %590 : vector<18x32xf32>
    %609 = arith.addf %608, %590 : vector<18x32xf32>
    %610 = arith.addf %595, %609 : vector<18x32xf32>
    %cst_152 = arith.constant 0.000000e+00 : f32
    %611 = vector.broadcast %cst_152 : f32 to vector<18x32xf32>
    %612 = arith.subf %611, %610 : vector<18x32xf32>
    %613 = arith.select %574, %612, %610 : vector<18x32xi1>, vector<18x32xf32>
    %cst_153 = arith.constant 1.908000e+00 : f32
    %614 = vector.broadcast %cst_153 : f32 to vector<18x32xf32>
    %615 = arith.mulf %614, %613 : vector<18x32xf32>
    %616 = math.exp %615 : vector<18x32xf32>
    %617 = arith.mulf %616, %512 : vector<18x32xf32>
    %618 = arith.addf %617, %570 : vector<18x32xf32>
    %619 = vector.extract_strided_slice %618 {offsets = [1, 0], sizes = [8, 32], strides = [1, 1]} : vector<18x32xf32> to vector<8x32xf32>
    %620 = vector.extract_strided_slice %618 {offsets = [10, 0], sizes = [8, 32], strides = [1, 1]} : vector<18x32xf32> to vector<8x32xf32>
    %621 = tpu.concatenate %619, %620 in 0 : vector<8x32xf32>, vector<8x32xf32> -> vector<16x32xf32>
    %c0_154 = arith.constant 0 : index
    %c0_155 = arith.constant 0 : index
    %622 = vector.load %arg5[%c0_154, %c0_155] : memref<16x32xf32, #tpu.memory_space<vmem>>, vector<16x32xf32>
    tpu.vector_store %arg5[%c0_154, %c0_155], %621 {strides = array<i32>} : memref<16x32xf32, #tpu.memory_space<vmem>>, vector<16x32xf32>,
    return
  }
}

</mosaic_0001>

<llo_original>
// kernel: _lambda_.1
$region0: #{_lambda_.1}
  #allocation0 [shape = 'u32[]', space=smem, size = 0x4, offset = 0x4, fixed_abs, tag = 'smem constant byte address 0x4 - core index']
  #allocation1 [shape = 'u32[72,128]{1,0:T(1,128)}', space=vmem, size = 0x9000, scoped, tag = 'internal scratch']
  %s0 = inlined_call_operand.vmem [shape: f32[18,32], index: 0, kind: input, shape index: {}]
  %s1 = inlined_call_operand.hbm [shape: bf16[4,32,192], index: 1, kind: input, shape index: {}]
  %s2 = inlined_call_operand.vmem [shape: f32[4,1,192], index: 2, kind: input, shape index: {}]
  %s3 = inlined_call_operand.hbm [shape: bf16[4,64,64], index: 3, kind: input, shape index: {}]
  %s4 = inlined_call_operand.vmem [shape: f32[4,1,64], index: 4, kind: input, shape index: {}]
  %s5 = inlined_call_operand.hbm [shape: f32[16,32], index: 5, kind: output, shape index: {}]
  %s6 = sld [smem:[#allocation0]]
  $region38: #{_lambda_.1} parent=0
    _
  %s8 = ssub.s32 1, %s6
  %s9 = scalar_select 0, %s8, %s6
  $region1: #{_lambda_.1} parent=0
    #allocation2 [shape = 'u8[65536]{0}', space=vmem, size = 0x10000, scoped, tag = 'input window, operand 1, single buffered']
    #allocation3 [shape = 's32[1]{0}', space=sflag, size = 0x4, scoped, tag = 'scoped memory for _lambda_.1']
    #allocation4 [shape = 's32[1]{0}', space=sflag, size = 0x4, scoped, tag = 'scoped memory for _lambda_.1']
    #allocation5 [shape = 'u8[65536]{0}', space=vmem, size = 0x10000, scoped, tag = 'input window, operand 3, single buffered']
    #allocation6 [shape = 's32[1]{0}', space=sflag, size = 0x4, scoped, tag = 'scoped memory for _lambda_.1']
    #allocation7 [shape = 'u8[8192]{0}', space=vmem, size = 0x2000, scoped, tag = 'output window, operand 0, single buffered']
    %10 = vsyncpa [#allocation3], 0
    %11 = vsyncpa [#allocation6], 0
    %12 = vsyncpa [#allocation4], 0
    // Predicated region
    $region2: #{_lambda_.1} parent=1 // pred_check
      _
    $region3: #{_lambda_.1} parent=1 // pred_check_branch
      %14 = sbr.rel (0) target = $region5
    $region4: #{_lambda_.1} parent=1 // pred_region
      _
    $region5: #{_lambda_.1} parent=1 // pred_fallthru
      _
    // Predicated region
    $region6: #{_lambda_.1} parent=1 // pred_check
      _
    $region7: #{_lambda_.1} parent=1 // pred_check_branch
      %16 = sbr.rel (0) target = $region9
    $region8: #{_lambda_.1} parent=1 // pred_region
      %18 = vsyncadd [#allocation3], 0
      %s19 = sshll.u32 %s1, 4
      %s20 = int_to_ptr.hbm [resolvable:$true] %s19
      %s21 = sshll.u32 [#allocation2], 4
      %s22 = int_to_ptr.vmem [resolvable:$true] %s21
      %27 = dma.hbm_to_vmem [thread:$0]  %s20, 2048, %s22, [#allocation3], 128, 128, 8
    $region9: #{_lambda_.1} parent=1 // pred_fallthru
      _
    // Predicated region
    $region10: #{_lambda_.1} parent=1 // pred_check
      _
    $region11: #{_lambda_.1} parent=1 // pred_check_branch
      %29 = sbr.rel (0) target = $region13
    $region12: #{_lambda_.1} parent=1 // pred_region
      _
    $region13: #{_lambda_.1} parent=1 // pred_fallthru
      _
    // Predicated region
    $region14: #{_lambda_.1} parent=1 // pred_check
      _
    $region15: #{_lambda_.1} parent=1 // pred_check_branch
      %31 = sbr.rel (0) target = $region17
    $region16: #{_lambda_.1} parent=1 // pred_region
      %33 = vsyncadd [#allocation6], 0
      %s34 = sshll.u32 %s3, 4
      %s35 = int_to_ptr.hbm [resolvable:$true] %s34
      %s36 = sshll.u32 [#allocation5], 4
      %s37 = int_to_ptr.vmem [resolvable:$true] %s36
      %42 = dma.hbm_to_vmem [thread:$0]  %s35, 2048, %s37, [#allocation6], 64, 64, 4
    $region17: #{_lambda_.1} parent=1 // pred_fallthru
      _
    // Predicated region
    $region18: #{_lambda_.1} parent=1 // pred_check
      _
    $region19: #{_lambda_.1} parent=1 // pred_check_branch
      %44 = sbr.rel (0) target = $region21
    $region20: #{_lambda_.1} parent=1 // pred_region
      _
    $region21: #{_lambda_.1} parent=1 // pred_fallthru
      _
    // Predicated region
    $region22: #{_lambda_.1} parent=1 // pred_check
      _
    $region23: #{_lambda_.1} parent=1 // pred_check_branch
      %46 = sbr.rel (0) target = $region25
    $region24: #{_lambda_.1} parent=1 // pred_region
      %48 = dma.done [#allocation3], 2048
    $region25: #{_lambda_.1} parent=1 // pred_fallthru
      _
    // Predicated region
    $region26: #{_lambda_.1} parent=1 // pred_check
      _
    $region27: #{_lambda_.1} parent=1 // pred_check_branch
      %50 = sbr.rel (0) target = $region29
    $region28: #{_lambda_.1} parent=1 // pred_region
      %52 = dma.done [#allocation6], 2048
    $region29: #{_lambda_.1} parent=1 // pred_fallthru
      _
    %v54 = vld [vmem:[%s0] sm:$0xff]
    %v55 = vld [vmem:[%s0 + $0x8] sm:$0xff]
    %v56 = vld [vmem:[%s0 + $0x10] sm:$0x3]
    %v57 = vlaneseq
    %v58 = vand.u32 %v57, 127
    %vm59 = vcmp.eq.s32.totalorder %v58, 0
    %61 = vset.pattern.permute.xlu0 3
    %62 = vperm.xlu0 %61, %v54
    %v63 = vpop.permute.xlu0 %62
    %66 = vset.pattern.permute.xlu0 3
    %67 = vperm.xlu0 %66, %v55
    %v68 = vpop.permute.xlu0 %67
    %71 = vset.pattern.permute.xlu0 3
    %72 = vperm.xlu0 %71, %v56
    %v73 = vpop.permute.xlu0 %72
    %v75 = vsel %vm59, %v63, 0.0
    %v76 = vsel %vm59, %v68, 0.0
    %v77 = vsel %vm59, %v73, 0.0
    %vm78 = vcmp.eq.s32.totalorder %v58, 1
    %79 = vset.pattern.permute.xlu0 2
    %80 = vperm.xlu0 %79, %v54
    %v81 = vpop.permute.xlu0 %80
    %83 = vset.pattern.permute.xlu0 2
    %84 = vperm.xlu0 %83, %v55
    %v85 = vpop.permute.xlu0 %84
    %87 = vset.pattern.permute.xlu0 2
    %88 = vperm.xlu0 %87, %v56
    %v89 = vpop.permute.xlu0 %88
    %v91 = vsel %vm78, %v81, %v75
    %v92 = vsel %vm78, %v85, %v76
    %v93 = vsel %vm78, %v89, %v77
    %vm94 = vcmp.eq.s32.totalorder %v58, 2
    %95 = vset.pattern.permute.xlu0 29
    %96 = vperm.xlu0 %95, %v54
    %v97 = vpop.permute.xlu0 %96
    %99 = vset.pattern.permute.xlu0 29
    %100 = vperm.xlu0 %99, %v55
    %v101 = vpop.permute.xlu0 %100
    %103 = vset.pattern.permute.xlu0 29
    %104 = vperm.xlu0 %103, %v56
    %v105 = vpop.permute.xlu0 %104
    %v107 = vsel %vm94, %v97, %v91
    %v108 = vsel %vm94, %v101, %v92
    %v109 = vsel %vm94, %v105, %v93
    %vm110 = vcmp.eq.s32.totalorder %v58, 3
    %111 = vset.pattern.permute.xlu0 31
    %112 = vperm.xlu0 %111, %v54
    %v113 = vpop.permute.xlu0 %112
    %115 = vset.pattern.permute.xlu0 31
    %116 = vperm.xlu0 %115, %v55
    %v117 = vpop.permute.xlu0 %116
    %119 = vset.pattern.permute.xlu0 31
    %120 = vperm.xlu0 %119, %v56
    %v121 = vpop.permute.xlu0 %120
    %v123 = vsel %vm110, %v113, %v107
    %v124 = vsel %vm110, %v117, %v108
    %v125 = vsel %vm110, %v121, %v109
    %vm126 = vcmp.eq.s32.totalorder %v58, 4
    %127 = vset.pattern.permute.xlu0 19
    %128 = vperm.xlu0 %127, %v54
    %v129 = vpop.permute.xlu0 %128
    %131 = vset.pattern.permute.xlu0 19
    %132 = vperm.xlu0 %131, %v55
    %v133 = vpop.permute.xlu0 %132
    %135 = vset.pattern.permute.xlu0 19
    %136 = vperm.xlu0 %135, %v56
    %v137 = vpop.permute.xlu0 %136
    %v139 = vsel %vm126, %v129, %v123
    %v140 = vsel %vm126, %v133, %v124
    %v141 = vsel %vm126, %v137, %v125
    %vm142 = vcmp.eq.s32.totalorder %v58, 5
    %143 = vset.pattern.permute.xlu0 1
    %144 = vperm.xlu0 %143, %v54
    %v145 = vpop.permute.xlu0 %144
    %147 = vset.pattern.permute.xlu0 1
    %148 = vperm.xlu0 %147, %v55
    %v149 = vpop.permute.xlu0 %148
    %151 = vset.pattern.permute.xlu0 1
    %152 = vperm.xlu0 %151, %v56
    %v153 = vpop.permute.xlu0 %152
    %v155 = vsel %vm142, %v145, %v139
    %v156 = vsel %vm142, %v149, %v140
    %v157 = vsel %vm142, %v153, %v141
    %vm158 = vcmp.eq.s32.totalorder %v58, 6
    %159 = vset.pattern.permute.xlu0 18
    %160 = vperm.xlu0 %159, %v54
    %v161 = vpop.permute.xlu0 %160
    %163 = vset.pattern.permute.xlu0 18
    %164 = vperm.xlu0 %163, %v55
    %v165 = vpop.permute.xlu0 %164
    %167 = vset.pattern.permute.xlu0 18
    %168 = vperm.xlu0 %167, %v56
    %v169 = vpop.permute.xlu0 %168
    %v171 = vsel %vm158, %v161, %v155
    %v172 = vsel %vm158, %v165, %v156
    %v173 = vsel %vm158, %v169, %v157
    %vm174 = vcmp.eq.s32.totalorder %v58, 7
    %175 = vset.pattern.permute.xlu0 0
    %176 = vperm.xlu0 %175, %v54
    %v177 = vpop.permute.xlu0 %176
    %179 = vset.pattern.permute.xlu0 0
    %180 = vperm.xlu0 %179, %v55
    %v181 = vpop.permute.xlu0 %180
    %183 = vset.pattern.permute.xlu0 0
    %184 = vperm.xlu0 %183, %v56
    %v185 = vpop.permute.xlu0 %184
    %v187 = vsel %vm174, %v177, %v171
    %v188 = vsel %vm174, %v181, %v172
    %v189 = vsel %vm174, %v185, %v173
    %vm190 = vcmp.eq.s32.totalorder %v58, 8
    %191 = vset.pattern.permute.xlu0 6
    %192 = vperm.xlu0 %191, %v54
    %v193 = vpop.permute.xlu0 %192
    %195 = vset.pattern.permute.xlu0 6
    %196 = vperm.xlu0 %195, %v55
    %v197 = vpop.permute.xlu0 %196
    %199 = vset.pattern.permute.xlu0 6
    %200 = vperm.xlu0 %199, %v56
    %v201 = vpop.permute.xlu0 %200
    %v203 = vsel %vm190, %v193, %v187
    %v204 = vsel %vm190, %v197, %v188
    %v205 = vsel %vm190, %v201, %v189
    %vm206 = vcmp.eq.s32.totalorder %v58, 9
    %207 = vset.pattern.permute.xlu0 30
    %208 = vperm.xlu0 %207, %v54
    %v209 = vpop.permute.xlu0 %208
    %211 = vset.pattern.permute.xlu0 30
    %212 = vperm.xlu0 %211, %v55
    %v213 = vpop.permute.xlu0 %212
    %215 = vset.pattern.permute.xlu0 30
    %216 = vperm.xlu0 %215, %v56
    %v217 = vpop.permute.xlu0 %216
    %v219 = vsel %vm206, %v209, %v203
    %v220 = vsel %vm206, %v213, %v204
    %v221 = vsel %vm206, %v217, %v205
    %vm222 = vcmp.eq.s32.totalorder %v58, 10
    %223 = vset.pattern.permute.xlu0 9
    %224 = vperm.xlu0 %223, %v54
    %v225 = vpop.permute.xlu0 %224
    %227 = vset.pattern.permute.xlu0 9
    %228 = vperm.xlu0 %227, %v55
    %v229 = vpop.permute.xlu0 %228
    %231 = vset.pattern.permute.xlu0 9
    %232 = vperm.xlu0 %231, %v56
    %v233 = vpop.permute.xlu0 %232
    %v235 = vsel %vm222, %v225, %v219
    %v236 = vsel %vm222, %v229, %v220
    %v237 = vsel %vm222, %v233, %v221
    %vm238 = vcmp.eq.s32.totalorder %v58, 11
    %239 = vset.pattern.permute.xlu0 24
    %240 = vperm.xlu0 %239, %v54
    %v241 = vpop.permute.xlu0 %240
    %243 = vset.pattern.permute.xlu0 24
    %244 = vperm.xlu0 %243, %v55
    %v245 = vpop.permute.xlu0 %244
    %247 = vset.pattern.permute.xlu0 24
    %248 = vperm.xlu0 %247, %v56
    %v249 = vpop.permute.xlu0 %248
    %v251 = vsel %vm238, %v241, %v235
    %v252 = vsel %vm238, %v245, %v236
    %v253 = vsel %vm238, %v249, %v237
    %vm254 = vcmp.eq.s32.totalorder %v58, 12
    %255 = vset.pattern.permute.xlu0 4
    %256 = vperm.xlu0 %255, %v54
    %v257 = vpop.permute.xlu0 %256
    %259 = vset.pattern.permute.xlu0 4
    %260 = vperm.xlu0 %259, %v55
    %v261 = vpop.permute.xlu0 %260
    %263 = vset.pattern.permute.xlu0 4
    %264 = vperm.xlu0 %263, %v56
    %v265 = vpop.permute.xlu0 %264
    %v267 = vsel %vm254, %v257, %v251
    %v268 = vsel %vm254, %v261, %v252
    %v269 = vsel %vm254, %v265, %v253
    %vm270 = vcmp.eq.s32.totalorder %v58, 13
    %271 = vset.pattern.permute.xlu0 27
    %272 = vperm.xlu0 %271, %v54
    %v273 = vpop.permute.xlu0 %272
    %275 = vset.pattern.permute.xlu0 27
    %276 = vperm.xlu0 %275, %v55
    %v277 = vpop.permute.xlu0 %276
    %279 = vset.pattern.permute.xlu0 27
    %280 = vperm.xlu0 %279, %v56
    %v281 = vpop.permute.xlu0 %280
    %v283 = vsel %vm270, %v273, %v267
    %v284 = vsel %vm270, %v277, %v268
    %v285 = vsel %vm270, %v281, %v269
    %vm286 = vcmp.eq.s32.totalorder %v58, 14
    %287 = vset.pattern.permute.xlu0 16
    %288 = vperm.xlu0 %287, %v54
    %v289 = vpop.permute.xlu0 %288
    %291 = vset.pattern.permute.xlu0 16
    %292 = vperm.xlu0 %291, %v55
    %v293 = vpop.permute.xlu0 %292
    %295 = vset.pattern.permute.xlu0 16
    %296 = vperm.xlu0 %295, %v56
    %v297 = vpop.permute.xlu0 %296
    %v299 = vsel %vm286, %v289, %v283
    %v300 = vsel %vm286, %v293, %v284
    %v301 = vsel %vm286, %v297, %v285
    %vm302 = vcmp.eq.s32.totalorder %v58, 15
    %303 = vset.pattern.permute.xlu0 10
    %304 = vperm.xlu0 %303, %v54
    %v305 = vpop.permute.xlu0 %304
    %307 = vset.pattern.permute.xlu0 10
    %308 = vperm.xlu0 %307, %v55
    %v309 = vpop.permute.xlu0 %308
    %311 = vset.pattern.permute.xlu0 10
    %312 = vperm.xlu0 %311, %v56
    %v313 = vpop.permute.xlu0 %312
    %v315 = vsel %vm302, %v305, %v299
    %v316 = vsel %vm302, %v309, %v300
    %v317 = vsel %vm302, %v313, %v301
    %vm318 = vcmp.eq.s32.totalorder %v58, 16
    %319 = vset.pattern.permute.xlu0 7
    %320 = vperm.xlu0 %319, %v54
    %v321 = vpop.permute.xlu0 %320
    %323 = vset.pattern.permute.xlu0 7
    %324 = vperm.xlu0 %323, %v55
    %v325 = vpop.permute.xlu0 %324
    %327 = vset.pattern.permute.xlu0 7
    %328 = vperm.xlu0 %327, %v56
    %v329 = vpop.permute.xlu0 %328
    %v331 = vsel %vm318, %v321, %v315
    %v332 = vsel %vm318, %v325, %v316
    %v333 = vsel %vm318, %v329, %v317
    %vm334 = vcmp.eq.s32.totalorder %v58, 17
    %335 = vset.pattern.permute.xlu0 28
    %336 = vperm.xlu0 %335, %v54
    %v337 = vpop.permute.xlu0 %336
    %339 = vset.pattern.permute.xlu0 28
    %340 = vperm.xlu0 %339, %v55
    %v341 = vpop.permute.xlu0 %340
    %343 = vset.pattern.permute.xlu0 28
    %344 = vperm.xlu0 %343, %v56
    %v345 = vpop.permute.xlu0 %344
    %v347 = vsel %vm334, %v337, %v331
    %v348 = vsel %vm334, %v341, %v332
    %v349 = vsel %vm334, %v345, %v333
    %vm350 = vcmp.eq.s32.totalorder %v58, 18
    %351 = vset.pattern.permute.xlu0 8
    %352 = vperm.xlu0 %351, %v54
    %v353 = vpop.permute.xlu0 %352
    %355 = vset.pattern.permute.xlu0 8
    %356 = vperm.xlu0 %355, %v55
    %v357 = vpop.permute.xlu0 %356
    %359 = vset.pattern.permute.xlu0 8
    %360 = vperm.xlu0 %359, %v56
    %v361 = vpop.permute.xlu0 %360
    %v363 = vsel %vm350, %v353, %v347
    %v364 = vsel %vm350, %v357, %v348
    %v365 = vsel %vm350, %v361, %v349
    %vm366 = vcmp.eq.s32.totalorder %v58, 19
    %367 = vset.pattern.permute.xlu0 26
    %368 = vperm.xlu0 %367, %v54
    %v369 = vpop.permute.xlu0 %368
    %371 = vset.pattern.permute.xlu0 26
    %372 = vperm.xlu0 %371, %v55
    %v373 = vpop.permute.xlu0 %372
    %375 = vset.pattern.permute.xlu0 26
    %376 = vperm.xlu0 %375, %v56
    %v377 = vpop.permute.xlu0 %376
    %v379 = vsel %vm366, %v369, %v363
    %v380 = vsel %vm366, %v373, %v364
    %v381 = vsel %vm366, %v377, %v365
    %vm382 = vcmp.eq.s32.totalorder %v58, 20
    %383 = vset.pattern.permute.xlu0 21
    %384 = vperm.xlu0 %383, %v54
    %v385 = vpop.permute.xlu0 %384
    %387 = vset.pattern.permute.xlu0 21
    %388 = vperm.xlu0 %387, %v55
    %v389 = vpop.permute.xlu0 %388
    %391 = vset.pattern.permute.xlu0 21
    %392 = vperm.xlu0 %391, %v56
    %v393 = vpop.permute.xlu0 %392
    %v395 = vsel %vm382, %v385, %v379
    %v396 = vsel %vm382, %v389, %v380
    %v397 = vsel %vm382, %v393, %v381
    %vm398 = vcmp.eq.s32.totalorder %v58, 21
    %399 = vset.pattern.permute.xlu0 22
    %400 = vperm.xlu0 %399, %v54
    %v401 = vpop.permute.xlu0 %400
    %403 = vset.pattern.permute.xlu0 22
    %404 = vperm.xlu0 %403, %v55
    %v405 = vpop.permute.xlu0 %404
    %407 = vset.pattern.permute.xlu0 22
    %408 = vperm.xlu0 %407, %v56
    %v409 = vpop.permute.xlu0 %408
    %v411 = vsel %vm398, %v401, %v395
    %v412 = vsel %vm398, %v405, %v396
    %v413 = vsel %vm398, %v409, %v397
    %vm414 = vcmp.eq.s32.totalorder %v58, 22
    %415 = vset.pattern.permute.xlu0 23
    %416 = vperm.xlu0 %415, %v54
    %v417 = vpop.permute.xlu0 %416
    %419 = vset.pattern.permute.xlu0 23
    %420 = vperm.xlu0 %419, %v55
    %v421 = vpop.permute.xlu0 %420
    %423 = vset.pattern.permute.xlu0 23
    %424 = vperm.xlu0 %423, %v56
    %v425 = vpop.permute.xlu0 %424
    %v427 = vsel %vm414, %v417, %v411
    %v428 = vsel %vm414, %v421, %v412
    %v429 = vsel %vm414, %v425, %v413
    %vm430 = vcmp.eq.s32.totalorder %v58, 23
    %431 = vset.pattern.permute.xlu0 11
    %432 = vperm.xlu0 %431, %v54
    %v433 = vpop.permute.xlu0 %432
    %435 = vset.pattern.permute.xlu0 11
    %436 = vperm.xlu0 %435, %v55
    %v437 = vpop.permute.xlu0 %436
    %439 = vset.pattern.permute.xlu0 11
    %440 = vperm.xlu0 %439, %v56
    %v441 = vpop.permute.xlu0 %440
    %v443 = vsel %vm430, %v433, %v427
    %v444 = vsel %vm430, %v437, %v428
    %v445 = vsel %vm430, %v441, %v429
    %vm446 = vcmp.eq.s32.totalorder %v58, 24
    %447 = vset.pattern.permute.xlu0 25
    %448 = vperm.xlu0 %447, %v54
    %v449 = vpop.permute.xlu0 %448
    %451 = vset.pattern.permute.xlu0 25
    %452 = vperm.xlu0 %451, %v55
    %v453 = vpop.permute.xlu0 %452
    %455 = vset.pattern.permute.xlu0 25
    %456 = vperm.xlu0 %455, %v56
    %v457 = vpop.permute.xlu0 %456
    %v459 = vsel %vm446, %v449, %v443
    %v460 = vsel %vm446, %v453, %v444
    %v461 = vsel %vm446, %v457, %v445
    %vm462 = vcmp.eq.s32.totalorder %v58, 25
    %463 = vset.pattern.permute.xlu0 12
    %464 = vperm.xlu0 %463, %v54
    %v465 = vpop.permute.xlu0 %464
    %467 = vset.pattern.permute.xlu0 12
    %468 = vperm.xlu0 %467, %v55
    %v469 = vpop.permute.xlu0 %468
    %471 = vset.pattern.permute.xlu0 12
    %472 = vperm.xlu0 %471, %v56
    %v473 = vpop.permute.xlu0 %472
    %v475 = vsel %vm462, %v465, %v459
    %v476 = vsel %vm462, %v469, %v460
    %v477 = vsel %vm462, %v473, %v461
    %vm478 = vcmp.eq.s32.totalorder %v58, 26
    %479 = vset.pattern.permute.xlu0 15
    %480 = vperm.xlu0 %479, %v54
    %v481 = vpop.permute.xlu0 %480
    %483 = vset.pattern.permute.xlu0 15
    %484 = vperm.xlu0 %483, %v55
    %v485 = vpop.permute.xlu0 %484
    %487 = vset.pattern.permute.xlu0 15
    %488 = vperm.xlu0 %487, %v56
    %v489 = vpop.permute.xlu0 %488
    %v491 = vsel %vm478, %v481, %v475
    %v492 = vsel %vm478, %v485, %v476
    %v493 = vsel %vm478, %v489, %v477
    %vm494 = vcmp.eq.s32.totalorder %v58, 27
    %495 = vset.pattern.permute.xlu0 13
    %496 = vperm.xlu0 %495, %v54
    %v497 = vpop.permute.xlu0 %496
    %499 = vset.pattern.permute.xlu0 13
    %500 = vperm.xlu0 %499, %v55
    %v501 = vpop.permute.xlu0 %500
    %503 = vset.pattern.permute.xlu0 13
    %504 = vperm.xlu0 %503, %v56
    %v505 = vpop.permute.xlu0 %504
    %v507 = vsel %vm494, %v497, %v491
    %v508 = vsel %vm494, %v501, %v492
    %v509 = vsel %vm494, %v505, %v493
    %vm510 = vcmp.eq.s32.totalorder %v58, 28
    %511 = vset.pattern.permute.xlu0 20
    %512 = vperm.xlu0 %511, %v54
    %v513 = vpop.permute.xlu0 %512
    %515 = vset.pattern.permute.xlu0 20
    %516 = vperm.xlu0 %515, %v55
    %v517 = vpop.permute.xlu0 %516
    %519 = vset.pattern.permute.xlu0 20
    %520 = vperm.xlu0 %519, %v56
    %v521 = vpop.permute.xlu0 %520
    %v523 = vsel %vm510, %v513, %v507
    %v524 = vsel %vm510, %v517, %v508
    %v525 = vsel %vm510, %v521, %v509
    %vm526 = vcmp.eq.s32.totalorder %v58, 29
    %527 = vset.pattern.permute.xlu0 17
    %528 = vperm.xlu0 %527, %v54
    %v529 = vpop.permute.xlu0 %528
    %531 = vset.pattern.permute.xlu0 17
    %532 = vperm.xlu0 %531, %v55
    %v533 = vpop.permute.xlu0 %532
    %535 = vset.pattern.permute.xlu0 17
    %536 = vperm.xlu0 %535, %v56
    %v537 = vpop.permute.xlu0 %536
    %v539 = vsel %vm526, %v529, %v523
    %v540 = vsel %vm526, %v533, %v524
    %v541 = vsel %vm526, %v537, %v525
    %vm542 = vcmp.eq.s32.totalorder %v58, 30
    %543 = vset.pattern.permute.xlu0 5
    %544 = vperm.xlu0 %543, %v54
    %v545 = vpop.permute.xlu0 %544
    %547 = vset.pattern.permute.xlu0 5
    %548 = vperm.xlu0 %547, %v55
    %v549 = vpop.permute.xlu0 %548
    %551 = vset.pattern.permute.xlu0 5
    %552 = vperm.xlu0 %551, %v56
    %v553 = vpop.permute.xlu0 %552
    %v555 = vsel %vm542, %v545, %v539
    %v556 = vsel %vm542, %v549, %v540
    %v557 = vsel %vm542, %v553, %v541
    %vm558 = vcmp.eq.s32.totalorder %v58, 31
    %559 = vset.pattern.permute.xlu0 14
    %560 = vperm.xlu0 %559, %v54
    %v561 = vpop.permute.xlu0 %560
    %563 = vset.pattern.permute.xlu0 14
    %564 = vperm.xlu0 %563, %v55
    %v565 = vpop.permute.xlu0 %564
    %567 = vset.pattern.permute.xlu0 14
    %568 = vperm.xlu0 %567, %v56
    %v569 = vpop.permute.xlu0 %568
    %v571 = vsel %vm558, %v561, %v555
    %v572 = vsel %vm558, %v565, %v556
    %v573 = vsel %vm558, %v569, %v557
    %v574 = vld [vmem:[#allocation2] sm:$0xff]
    %v575 = vld [vmem:[#allocation2 + $0x8] sm:$0xff]
    %v576 = vld [vmem:[#allocation2 + $0x10] sm:$0xff]
    %v577 = vld [vmem:[#allocation2 + $0x18] sm:$0xff]
    %v578 = vld [vmem:[%s2] sm:$0x3]
    %v579 = vld [vmem:[#allocation5] sm:$0xf]
    %v580 = vld [vmem:[#allocation5 + $0x4] sm:$0xf]
    %v581 = vld [vmem:[#allocation5 + $0x8] sm:$0xf]
    %v582 = vld [vmem:[#allocation5 + $0xc] sm:$0xf]
    %v583 = vld [vmem:[#allocation5 + $0x10] sm:$0xf]
    %v584 = vld [vmem:[#allocation5 + $0x14] sm:$0xf]
    %v585 = vld [vmem:[#allocation5 + $0x18] sm:$0xf]
    %v586 = vld [vmem:[#allocation5 + $0x1c] sm:$0xf]
    %v587 = vld [vmem:[%s4] sm:$0x1]
    %v588 = vpack.c.bf16 %v572, %v571
    %v589 = vpack.c.bf16 %v573, %v573
    %v591 = vperm.slane %v578, 0
    %v592 = vperm.slane %v578, 1
    %v599 = vunpack.c.l.b16 %v574
    %v600 = vunpack.c.h.b16 %v574
    %v601 = vunpack.c.l.b16 %v575
    %v602 = vunpack.c.h.b16 %v575
    %v603 = vunpack.c.l.b16 %v576
    %v604 = vunpack.c.h.b16 %v576
    %v605 = vunpack.c.l.b16 %v577
    %v606 = vunpack.c.h.b16 %v577
    %v607 = vpack.c.b16 %v601, %v599
    %v608 = vpack.c.b16 %v602, %v600
    %v609 = vpack.c.b16 %v605, %v603
    %v610 = vpack.c.b16 %v606, %v604
    %vm615 = vcmask 261120
    %v617 = vsel %vm615, %v588, 0
    %v620 = vsel %vm615, %v589, 0
    %622 = vmatpush.bf16.msra.mxu0 0
    %623 = vmatpush.bf16.msra.mxu0 0
    %624 = vmatpush.bf16.msra.mxu0 0
    %625 = vmatpush.bf16.msra.mxu0 0
    %626 = vmatpush.bf16.msra.mxu0 0
    %627 = vmatpush.bf16.msra.mxu0 0
    %628 = vmatpush.bf16.msra.mxu0 %v609
    %629 = vmatpush.bf16.msra.mxu0 %v607
    %630 = vmatmul.bf16.gmra.mxu0 %v617
    %v631 = vpop.f32.mrf.mxu0
    %v632 = vadd.f32 %v591, %v631
    %v633 = vpop.f32.mrf.mxu0
    %v634 = vadd.f32 %v591, %v633
    %635 = vmatmul.bf16.gmra.mxu0 %v620
    %v636 = vpop.f32.mrf.mxu0
    %v637 = vadd.f32 %v591, %v636
    %v638 = vpop.f32.mrf.mxu0
    %639 = vdwg.mxu0
    %640 = vmatpush.bf16.msra.mxu0 0
    %641 = vmatpush.bf16.msra.mxu0 0
    %642 = vmatpush.bf16.msra.mxu0 0
    %643 = vmatpush.bf16.msra.mxu0 0
    %644 = vmatpush.bf16.msra.mxu0 0
    %645 = vmatpush.bf16.msra.mxu0 0
    %646 = vmatpush.bf16.msra.mxu0 %v610
    %647 = vmatpush.bf16.msra.mxu0 %v608
    %648 = vmatmul.bf16.gmra.mxu0 %v617
    %v649 = vpop.f32.mrf.mxu0
    %v650 = vadd.f32 %v592, %v649
    %v651 = vpop.f32.mrf.mxu0
    %v652 = vadd.f32 %v592, %v651
    %653 = vmatmul.bf16.gmra.mxu0 %v620
    %v654 = vpop.f32.mrf.mxu0
    %v655 = vadd.f32 %v592, %v654
    %v656 = vpop.f32.mrf.mxu0
    %657 = vdwg.mxu0
    %v658 = vpack.c.bf16 %v634, %v632
    %v659 = vpack.c.bf16 %v652, %v650
    %661 = vrot.lane.b32.xlu0 %v658, 64
    %v662 = vpop.permute.xlu0 %661
    %vm663 = vcmask 523264
    %v665 = vsel %vm663, %v658, 0
    %v668 = vsel %vm663, %v662, 0
    %670 = vmatpush.bf16.xpose.msra.mxu0 0
    %671 = vmatpush.bf16.xpose.msra.mxu0 0
    %672 = vmatpush.bf16.xpose.msra.mxu0 0
    %673 = vmatpush.bf16.xpose.msra.mxu0 0
    %674 = vmatpush.bf16.xpose.msra.mxu0 0
    %675 = vmatpush.bf16.xpose.msra.mxu0 0
    %676 = vmatpush.bf16.xpose.msra.mxu0 0
    %677 = vmatpush.bf16.xpose.msra.mxu0 %v668
    %678 = vmatmul.bf16.gmra.mxu0 %v665
    %v679 = vpop.f32.mrf.mxu0
    %v680 = vadd.f32 0.0, %v679
    %v681 = vpop.f32.mrf.mxu0
    %v682 = vadd.f32 0.0, %v681
    %683 = vdwg.mxu0
    %vm684 = vcmask 72704
    %v685 = vsel %vm684, %v680, -inf
    %686 = vmax.xlane.f32.xlu0 %v685
    %v687 = vpop.xlane.xlu0 %686
    %vm688 = vcmask 65536
    %v689 = vsel %vm688, %v682, -inf
    %690 = vmax.xlane.f32.xlu0 %v689
    %v691 = vpop.xlane.xlu0 %690
    %v692 = vsub.f32 %v680, %v687
    %v693 = vsub.f32 %v682, %v691
    %v694 = vmul.f32 %v692, 1.442695
    %v695 = vpow.pop %v694
    %v696 = vmul.f32 %v693, 1.442695
    %v697 = vpow.pop %v696
    %v698 = vsel %vm684, %v695, 0.0
    %699 = vadd.xlane.f32.xlu0 %v698
    %v700 = vpop.xlane.xlu0 %699
    %v701 = vsel %vm688, %v697, 0.0
    %702 = vadd.xlane.f32.xlu0 %v701
    %v703 = vpop.xlane.xlu0 %702
    %v704 = vrcp.pop %v700
    %v705 = vmul.f32 %v700, %v704
    %v706 = vsub.f32 1.0, %v705
    %v707 = vmul.f32 %v704, %v706
    %v708 = vadd.f32 %v704, %v707
    %vm709 = vweird.f32 %v700
    %vm710 = vweird.f32 %v704
    %vm711 = vmor %vm709, %vm710
    %v712 = vsel %vm711, %v704, %v708
    %v713 = vand.u32 2147483647, %v700
    %vm714 = vcmp.eq.f32.partialorder %v713, 8.507059e+37
    %v715 = vand.u32 %v700, 2147483648
    %v716 = vor.u32 1.1754944e-38, %v715
    %v717 = vsel %vm714, %v716, %v712
    %v718 = vmul.f32 %v695, %v717
    %v719 = vrcp.pop %v703
    %v720 = vmul.f32 %v703, %v719
    %v721 = vsub.f32 1.0, %v720
    %v722 = vmul.f32 %v719, %v721
    %v723 = vadd.f32 %v719, %v722
    %vm724 = vweird.f32 %v703
    %vm725 = vweird.f32 %v719
    %vm726 = vmor %vm724, %vm725
    %v727 = vsel %vm726, %v719, %v723
    %v728 = vand.u32 2147483647, %v703
    %vm729 = vcmp.eq.f32.partialorder %v728, 8.507059e+37
    %v730 = vand.u32 %v703, 2147483648
    %v731 = vor.u32 1.1754944e-38, %v730
    %v732 = vsel %vm729, %v731, %v727
    %v733 = vmul.f32 %v697, %v732
    %v734 = vpack.c.bf16 %v733, %v718
    %v736 = vsel %vm684, %v734, 0
    %vm738 = vcmask 1043456
    %vm739 = vcmask 1044480
    %v740 = vsel %vm738, 4294967295, 65535
    %v741 = vsel %vm739, %v740, 0
    %v743 = vand.u32 %v659, %v741
    %745 = vmatpush.bf16.msra.mxu0 0
    %746 = vmatpush.bf16.msra.mxu0 0
    %747 = vmatpush.bf16.msra.mxu0 0
    %748 = vmatpush.bf16.msra.mxu0 0
    %749 = vmatpush.bf16.msra.mxu0 0
    %750 = vmatpush.bf16.msra.mxu0 0
    %751 = vmatpush.bf16.msra.mxu0 0
    %752 = vmatpush.bf16.msra.mxu0 %v743
    %753 = vmatmul.bf16.gmra.mxu0 %v736
    %v754 = vpop.f32.mrf.mxu0
    %v755 = vadd.f32 0.0, %v754
    %v756 = vpop.f32.mrf.mxu0
    %v757 = vadd.f32 0.0, %v756
    %758 = vdwg.mxu0
    %v759 = vpack.c.bf16 %v637, %v634
    %v760 = vpack.c.bf16 %v655, %v652
    %v762 = vshrl.u32 %v759, 16
    %v764 = vshll.u32 %v759, 16
    %v766 = vrot.slane %v764, 1
    %v767 = vor.u32 %v762, %v766
    %768 = vrot.lane.b32.xlu0 %v767, 64
    %v769 = vpop.permute.xlu0 %768
    %v771 = vsel %vm663, %v767, 0
    %v774 = vsel %vm663, %v769, 0
    %776 = vmatpush.bf16.xpose.msra.mxu0 0
    %777 = vmatpush.bf16.xpose.msra.mxu0 0
    %778 = vmatpush.bf16.xpose.msra.mxu0 0
    %779 = vmatpush.bf16.xpose.msra.mxu0 0
    %780 = vmatpush.bf16.xpose.msra.mxu0 0
    %781 = vmatpush.bf16.xpose.msra.mxu0 0
    %782 = vmatpush.bf16.xpose.msra.mxu0 0
    %783 = vmatpush.bf16.xpose.msra.mxu0 %v774
    %784 = vmatmul.bf16.gmra.mxu0 %v771
    %v785 = vpop.f32.mrf.mxu0
    %v786 = vadd.f32 0.0, %v785
    %v787 = vpop.f32.mrf.mxu0
    %v788 = vadd.f32 0.0, %v787
    %789 = vdwg.mxu0
    %v790 = vsel %vm684, %v786, -inf
    %791 = vmax.xlane.f32.xlu0 %v790
    %v792 = vpop.xlane.xlu0 %791
    %v793 = vsel %vm688, %v788, -inf
    %794 = vmax.xlane.f32.xlu0 %v793
    %v795 = vpop.xlane.xlu0 %794
    %v796 = vsub.f32 %v786, %v792
    %v797 = vsub.f32 %v788, %v795
    %v798 = vmul.f32 %v796, 1.442695
    %v799 = vpow.pop %v798
    %v800 = vmul.f32 %v797, 1.442695
    %v801 = vpow.pop %v800
    %v802 = vsel %vm684, %v799, 0.0
    %803 = vadd.xlane.f32.xlu0 %v802
    %v804 = vpop.xlane.xlu0 %803
    %v805 = vsel %vm688, %v801, 0.0
    %806 = vadd.xlane.f32.xlu0 %v805
    %v807 = vpop.xlane.xlu0 %806
    %v808 = vrcp.pop %v804
    %v809 = vmul.f32 %v804, %v808
    %v810 = vsub.f32 1.0, %v809
    %v811 = vmul.f32 %v808, %v810
    %v812 = vadd.f32 %v808, %v811
    %vm813 = vweird.f32 %v804
    %vm814 = vweird.f32 %v808
    %vm815 = vmor %vm813, %vm814
    %v816 = vsel %vm815, %v808, %v812
    %v817 = vand.u32 2147483647, %v804
    %vm818 = vcmp.eq.f32.partialorder %v817, 8.507059e+37
    %v819 = vand.u32 %v804, 2147483648
    %v820 = vor.u32 1.1754944e-38, %v819
    %v821 = vsel %vm818, %v820, %v816
    %v822 = vmul.f32 %v799, %v821
    %v823 = vrcp.pop %v807
    %v824 = vmul.f32 %v807, %v823
    %v825 = vsub.f32 1.0, %v824
    %v826 = vmul.f32 %v823, %v825
    %v827 = vadd.f32 %v823, %v826
    %vm828 = vweird.f32 %v807
    %vm829 = vweird.f32 %v823
    %vm830 = vmor %vm828, %vm829
    %v831 = vsel %vm830, %v823, %v827
    %v832 = vand.u32 2147483647, %v807
    %vm833 = vcmp.eq.f32.partialorder %v832, 8.507059e+37
    %v834 = vand.u32 %v807, 2147483648
    %v835 = vor.u32 1.1754944e-38, %v834
    %v836 = vsel %vm833, %v835, %v831
    %v837 = vmul.f32 %v801, %v836
    %v838 = vpack.c.bf16 %v837, %v822
    %v840 = vshrl.u32 %v760, 16
    %v842 = vshll.u32 %v760, 16
    %v844 = vrot.slane %v842, 1
    %v845 = vor.u32 %v840, %v844
    %v847 = vsel %vm684, %v838, 0
    %v850 = vand.u32 %v845, %v741
    %852 = vmatpush.bf16.msra.mxu0 0
    %853 = vmatpush.bf16.msra.mxu0 0
    %854 = vmatpush.bf16.msra.mxu0 0
    %855 = vmatpush.bf16.msra.mxu0 0
    %856 = vmatpush.bf16.msra.mxu0 0
    %857 = vmatpush.bf16.msra.mxu0 0
    %858 = vmatpush.bf16.msra.mxu0 0
    %859 = vmatpush.bf16.msra.mxu0 %v850
    %860 = vmatmul.bf16.gmra.mxu0 %v847
    %v861 = vpop.f32.mrf.mxu0
    %v862 = vadd.f32 0.0, %v861
    %v863 = vpop.f32.mrf.mxu0
    %v864 = vadd.f32 0.0, %v863
    %865 = vdwg.mxu0
    %vm868 = vcmask 1040384
    %v869 = vrot.slane %v862, 7
    %v870 = vrot.slane %v864, 7
    %v871 = vsel %vm868, %v869, %v870
    %v874 = vsel %vm868, %v757, %v869
    %v875 = vpack.c.bf16 %v874, %v755
    %v876 = vpack.c.bf16 %v871, %v871
    %v878 = vperm.slane %v587, 0
    %v888 = vunpack.c.l.b16 %v579
    %v889 = vunpack.c.l.b16 %v580
    %v890 = vunpack.c.l.b16 %v581
    %v891 = vunpack.c.l.b16 %v582
    %v892 = vunpack.c.l.b16 %v583
    %v893 = vunpack.c.l.b16 %v584
    %v894 = vunpack.c.l.b16 %v585
    %v895 = vunpack.c.l.b16 %v586
    %v896 = vpack.c.b16 %v889, %v888
    %v897 = vpack.c.b16 %v891, %v890
    %v898 = vpack.c.b16 %v893, %v892
    %v899 = vpack.c.b16 %v895, %v894
    %v905 = vsel %vm663, %v875, 0
    %v908 = vsel %vm663, %v876, 0
    %910 = vmatpush.bf16.msra.mxu0 0
    %911 = vmatpush.bf16.msra.mxu0 0
    %912 = vmatpush.bf16.msra.mxu0 0
    %913 = vmatpush.bf16.msra.mxu0 0
    %914 = vmatpush.bf16.msra.mxu0 %v899
    %915 = vmatpush.bf16.msra.mxu0 %v898
    %916 = vmatpush.bf16.msra.mxu0 %v897
    %917 = vmatpush.bf16.msra.mxu0 %v896
    %918 = vmatmul.bf16.gmra.mxu0 %v905
    %v919 = vpop.f32.mrf.mxu0
    %v920 = vadd.f32 %v878, %v919
    %v921 = vpop.f32.mrf.mxu0
    %v922 = vadd.f32 %v878, %v921
    %923 = vmatmul.bf16.gmra.mxu0 %v908
    %v924 = vpop.f32.mrf.mxu0
    %v925 = vadd.f32 %v878, %v924
    %v926 = vpop.f32.mrf.mxu0
    %927 = vdwg.mxu0
    %v928 = vmul.f32 %v920, 0.33333334
    %v929 = vmul.f32 %v922, 0.33333334
    %v930 = vmul.f32 %v925, 0.33333334
    %vm931 = vcmp.lt.f32.partialorder %v928, 0.0
    %vm932 = vcmp.lt.f32.partialorder %v929, 0.0
    %vm933 = vcmp.lt.f32.partialorder %v930, 0.0
    %v934 = vand.u32 2147483647, %v928
    %v935 = vand.u32 2147483647, %v929
    %v936 = vand.u32 2147483647, %v930
    %vm937 = vcmp.gt.f32.partialorder %v934, 2.4142137
    %vm938 = vcmp.gt.f32.partialorder %v935, 2.4142137
    %vm939 = vcmp.gt.f32.partialorder %v936, 2.4142137
    %vm940 = vcmp.gt.f32.partialorder %v934, 0.41421357
    %vm941 = vcmp.gt.f32.partialorder %v935, 0.41421357
    %vm942 = vcmp.gt.f32.partialorder %v936, 0.41421357
    %v943 = vmax.f32 %v934, 1e-30
    %v944 = vmax.f32 %v935, 1e-30
    %v945 = vmax.f32 %v936, 1e-30
    %v946 = vrcp.pop %v943
    %v947 = vmul.f32 %v943, %v946
    %v948 = vsub.f32 1.0, %v947
    %v949 = vmul.f32 %v946, %v948
    %v950 = vadd.f32 %v946, %v949
    %vm951 = vweird.f32 %v943
    %vm952 = vweird.f32 %v946
    %vm953 = vmor %vm951, %vm952
    %v954 = vsel %vm953, %v946, %v950
    %v955 = vand.u32 2147483647, %v943
    %vm956 = vcmp.eq.f32.partialorder %v955, 8.507059e+37
    %v957 = vand.u32 %v943, 2147483648
    %v958 = vor.u32 1.1754944e-38, %v957
    %v959 = vsel %vm956, %v958, %v954
    %v960 = vmul.f32 -1.0, %v959
    %v961 = vrcp.pop %v944
    %v962 = vmul.f32 %v944, %v961
    %v963 = vsub.f32 1.0, %v962
    %v964 = vmul.f32 %v961, %v963
    %v965 = vadd.f32 %v961, %v964
    %vm966 = vweird.f32 %v944
    %vm967 = vweird.f32 %v961
    %vm968 = vmor %vm966, %vm967
    %v969 = vsel %vm968, %v961, %v965
    %v970 = vand.u32 2147483647, %v944
    %vm971 = vcmp.eq.f32.partialorder %v970, 8.507059e+37
    %v972 = vand.u32 %v944, 2147483648
    %v973 = vor.u32 1.1754944e-38, %v972
    %v974 = vsel %vm971, %v973, %v969
    %v975 = vmul.f32 -1.0, %v974
    %v976 = vrcp.pop %v945
    %v977 = vmul.f32 %v945, %v976
    %v978 = vsub.f32 1.0, %v977
    %v979 = vmul.f32 %v976, %v978
    %v980 = vadd.f32 %v976, %v979
    %vm981 = vweird.f32 %v945
    %vm982 = vweird.f32 %v976
    %vm983 = vmor %vm981, %vm982
    %v984 = vsel %vm983, %v976, %v980
    %v985 = vand.u32 2147483647, %v945
    %vm986 = vcmp.eq.f32.partialorder %v985, 8.507059e+37
    %v987 = vand.u32 %v945, 2147483648
    %v988 = vor.u32 1.1754944e-38, %v987
    %v989 = vsel %vm986, %v988, %v984
    %v990 = vmul.f32 -1.0, %v989
    %v991 = vsub.f32 %v934, 1.0
    %v992 = vsub.f32 %v935, 1.0
    %v993 = vsub.f32 %v936, 1.0
    %v994 = vadd.f32 %v934, 1.0
    %v995 = vadd.f32 %v935, 1.0
    %v996 = vadd.f32 %v936, 1.0
    %v997 = vrcp.pop %v994
    %v998 = vmul.f32 %v994, %v997
    %v999 = vsub.f32 1.0, %v998
    %v1000 = vmul.f32 %v997, %v999
    %v1001 = vadd.f32 %v997, %v1000
    %vm1002 = vweird.f32 %v994
    %vm1003 = vweird.f32 %v997
    %vm1004 = vmor %vm1002, %vm1003
    %v1005 = vsel %vm1004, %v997, %v1001
    %v1006 = vand.u32 2147483647, %v994
    %vm1007 = vcmp.eq.f32.partialorder %v1006, 8.507059e+37
    %v1008 = vand.u32 %v994, 2147483648
    %v1009 = vor.u32 1.1754944e-38, %v1008
    %v1010 = vsel %vm1007, %v1009, %v1005
    %v1011 = vmul.f32 %v991, %v1010
    %v1012 = vrcp.pop %v995
    %v1013 = vmul.f32 %v995, %v1012
    %v1014 = vsub.f32 1.0, %v1013
    %v1015 = vmul.f32 %v1012, %v1014
    %v1016 = vadd.f32 %v1012, %v1015
    %vm1017 = vweird.f32 %v995
    %vm1018 = vweird.f32 %v1012
    %vm1019 = vmor %vm1017, %vm1018
    %v1020 = vsel %vm1019, %v1012, %v1016
    %v1021 = vand.u32 2147483647, %v995
    %vm1022 = vcmp.eq.f32.partialorder %v1021, 8.507059e+37
    %v1023 = vand.u32 %v995, 2147483648
    %v1024 = vor.u32 1.1754944e-38, %v1023
    %v1025 = vsel %vm1022, %v1024, %v1020
    %v1026 = vmul.f32 %v992, %v1025
    %v1027 = vrcp.pop %v996
    %v1028 = vmul.f32 %v996, %v1027
    %v1029 = vsub.f32 1.0, %v1028
    %v1030 = vmul.f32 %v1027, %v1029
    %v1031 = vadd.f32 %v1027, %v1030
    %vm1032 = vweird.f32 %v996
    %vm1033 = vweird.f32 %v1027
    %vm1034 = vmor %vm1032, %vm1033
    %v1035 = vsel %vm1034, %v1027, %v1031
    %v1036 = vand.u32 2147483647, %v996
    %vm1037 = vcmp.eq.f32.partialorder %v1036, 8.507059e+37
    %v1038 = vand.u32 %v996, 2147483648
    %v1039 = vor.u32 1.1754944e-38, %v1038
    %v1040 = vsel %vm1037, %v1039, %v1035
    %v1041 = vmul.f32 %v993, %v1040
    %v1042 = vsel %vm940, %v1011, %v934
    %v1043 = vsel %vm941, %v1026, %v935
    %v1044 = vsel %vm942, %v1041, %v936
    %v1045 = vsel %vm937, %v960, %v1042
    %v1046 = vsel %vm938, %v975, %v1043
    %v1047 = vsel %vm939, %v990, %v1044
    %v1048 = vsel %vm940, 0.7853982, 0.0
    %v1049 = vsel %vm941, 0.7853982, 0.0
    %v1050 = vsel %vm942, 0.7853982, 0.0
    %v1051 = vsel %vm937, 1.5707964, %v1048
    %v1052 = vsel %vm938, 1.5707964, %v1049
    %v1053 = vsel %vm939, 1.5707964, %v1050
    %v1054 = vmul.f32 %v1045, %v1045
    %v1055 = vmul.f32 %v1046, %v1046
    %v1056 = vmul.f32 %v1047, %v1047
    %v1057 = vmul.f32 %v1054, 0.080537446
    %v1058 = vmul.f32 %v1055, 0.080537446
    %v1059 = vmul.f32 %v1056, 0.080537446
    %v1060 = vsub.f32 %v1057, 0.13877685
    %v1061 = vsub.f32 %v1058, 0.13877685
    %v1062 = vsub.f32 %v1059, 0.13877685
    %v1063 = vmul.f32 %v1060, %v1054
    %v1064 = vmul.f32 %v1061, %v1055
    %v1065 = vmul.f32 %v1062, %v1056
    %v1066 = vadd.f32 %v1063, 0.19977711
    %v1067 = vadd.f32 %v1064, 0.19977711
    %v1068 = vadd.f32 %v1065, 0.19977711
    %v1069 = vmul.f32 %v1066, %v1054
    %v1070 = vmul.f32 %v1067, %v1055
    %v1071 = vmul.f32 %v1068, %v1056
    %v1072 = vsub.f32 %v1069, 0.3333295
    %v1073 = vsub.f32 %v1070, 0.3333295
    %v1074 = vsub.f32 %v1071, 0.3333295
    %v1075 = vmul.f32 %v1072, %v1054
    %v1076 = vmul.f32 %v1073, %v1055
    %v1077 = vmul.f32 %v1074, %v1056
    %v1078 = vmul.f32 %v1075, %v1045
    %v1079 = vmul.f32 %v1076, %v1046
    %v1080 = vmul.f32 %v1077, %v1047
    %v1081 = vadd.f32 %v1078, %v1045
    %v1082 = vadd.f32 %v1079, %v1046
    %v1083 = vadd.f32 %v1080, %v1047
    %v1084 = vadd.f32 %v1051, %v1081
    %v1085 = vadd.f32 %v1052, %v1082
    %v1086 = vadd.f32 %v1053, %v1083
    %v1087 = vsub.f32 0.0, %v1084
    %v1088 = vsub.f32 0.0, %v1085
    %v1089 = vsub.f32 0.0, %v1086
    %v1090 = vsel %vm931, %v1087, %v1084
    %v1091 = vsel %vm932, %v1088, %v1085
    %v1092 = vsel %vm933, %v1089, %v1086
    %v1093 = vmul.f32 %v1090, 1.908
    %v1094 = vmul.f32 %v1091, 1.908
    %v1095 = vmul.f32 %v1092, 1.908
    %v1096 = vmul.f32 %v1093, 1.442695
    %v1097 = vpow.pop %v1096
    %v1098 = vmul.f32 %v1094, 1.442695
    %v1099 = vpow.pop %v1098
    %v1100 = vmul.f32 %v1095, 1.442695
    %v1101 = vpow.pop %v1100
    %v1102 = vmul.f32 %v1097, %v571
    %v1103 = vmul.f32 %v1099, %v572
    %v1104 = vmul.f32 %v1101, %v573
    %1108 = vrot.lane.b32.xlu0 %v920, 96
    %v1109 = vpop.permute.xlu0 %1108
    %1110 = vrot.lane.b32.xlu0 %v922, 96
    %v1111 = vpop.permute.xlu0 %1110
    %1112 = vrot.lane.b32.xlu0 %v925, 96
    %v1113 = vpop.permute.xlu0 %1112
    %v1117 = vadd.f32 %v1102, %v1109
    %v1118 = vadd.f32 %v1103, %v1111
    %v1119 = vadd.f32 %v1104, %v1113
    %s1120 = scalar_lea.vmem [#allocation2], 32
    %v1121 = vld [vmem:[%s1120] sm:$0xff]
    %v1122 = vld [vmem:[%s1120 + $0x8] sm:$0xff]
    %v1123 = vld [vmem:[%s1120 + $0x10] sm:$0xff]
    %v1124 = vld [vmem:[%s1120 + $0x18] sm:$0xff]
    %s1125 = scalar_lea.vmem %s2, 2
    %v1126 = vld [vmem:[%s1125] sm:$0x3]
    %s1127 = scalar_lea.vmem [#allocation5], 32
    %v1128 = vld [vmem:[%s1127] sm:$0xf]
    %v1129 = vld [vmem:[%s1127 + $0x4] sm:$0xf]
    %v1130 = vld [vmem:[%s1127 + $0x8] sm:$0xf]
    %v1131 = vld [vmem:[%s1127 + $0xc] sm:$0xf]
    %v1132 = vld [vmem:[%s1127 + $0x10] sm:$0xf]
    %v1133 = vld [vmem:[%s1127 + $0x14] sm:$0xf]
    %v1134 = vld [vmem:[%s1127 + $0x18] sm:$0xf]
    %v1135 = vld [vmem:[%s1127 + $0x1c] sm:$0xf]
    %s1136 = scalar_lea.vmem %s4, 1
    %v1137 = vld [vmem:[%s1136] sm:$0x1]
    %v1138 = vpack.c.bf16 %v1118, %v1117
    %v1139 = vpack.c.bf16 %v1119, %v1119
    %v1141 = vperm.slane %v1126, 0
    %v1142 = vperm.slane %v1126, 1
    %v1149 = vunpack.c.l.b16 %v1121
    %v1150 = vunpack.c.h.b16 %v1121
    %v1151 = vunpack.c.l.b16 %v1122
    %v1152 = vunpack.c.h.b16 %v1122
    %v1153 = vunpack.c.l.b16 %v1123
    %v1154 = vunpack.c.h.b16 %v1123
    %v1155 = vunpack.c.l.b16 %v1124
    %v1156 = vunpack.c.h.b16 %v1124
    %v1157 = vpack.c.b16 %v1151, %v1149
    %v1158 = vpack.c.b16 %v1152, %v1150
    %v1159 = vpack.c.b16 %v1155, %v1153
    %v1160 = vpack.c.b16 %v1156, %v1154
    %v1166 = vsel %vm615, %v1138, 0
    %v1169 = vsel %vm615, %v1139, 0
    %1171 = vmatpush.bf16.msra.mxu0 0
    %1172 = vmatpush.bf16.msra.mxu0 0
    %1173 = vmatpush.bf16.msra.mxu0 0
    %1174 = vmatpush.bf16.msra.mxu0 0
    %1175 = vmatpush.bf16.msra.mxu0 0
    %1176 = vmatpush.bf16.msra.mxu0 0
    %1177 = vmatpush.bf16.msra.mxu0 %v1159
    %1178 = vmatpush.bf16.msra.mxu0 %v1157
    %1179 = vmatmul.bf16.gmra.mxu0 %v1166
    %v1180 = vpop.f32.mrf.mxu0
    %v1181 = vadd.f32 %v1141, %v1180
    %v1182 = vpop.f32.mrf.mxu0
    %v1183 = vadd.f32 %v1141, %v1182
    %1184 = vmatmul.bf16.gmra.mxu0 %v1169
    %v1185 = vpop.f32.mrf.mxu0
    %v1186 = vadd.f32 %v1141, %v1185
    %v1187 = vpop.f32.mrf.mxu0
    %1188 = vdwg.mxu0
    %1189 = vmatpush.bf16.msra.mxu0 0
    %1190 = vmatpush.bf16.msra.mxu0 0
    %1191 = vmatpush.bf16.msra.mxu0 0
    %1192 = vmatpush.bf16.msra.mxu0 0
    %1193 = vmatpush.bf16.msra.mxu0 0
    %1194 = vmatpush.bf16.msra.mxu0 0
    %1195 = vmatpush.bf16.msra.mxu0 %v1160
    %1196 = vmatpush.bf16.msra.mxu0 %v1158
    %1197 = vmatmul.bf16.gmra.mxu0 %v1166
    %v1198 = vpop.f32.mrf.mxu0
    %v1199 = vadd.f32 %v1142, %v1198
    %v1200 = vpop.f32.mrf.mxu0
    %v1201 = vadd.f32 %v1142, %v1200
    %1202 = vmatmul.bf16.gmra.mxu0 %v1169
    %v1203 = vpop.f32.mrf.mxu0
    %v1204 = vadd.f32 %v1142, %v1203
    %v1205 = vpop.f32.mrf.mxu0
    %1206 = vdwg.mxu0
    %v1207 = vpack.c.bf16 %v1183, %v1181
    %v1208 = vpack.c.bf16 %v1201, %v1199
    %1210 = vrot.lane.b32.xlu0 %v1207, 64
    %v1211 = vpop.permute.xlu0 %1210
    %v1213 = vsel %vm663, %v1207, 0
    %v1216 = vsel %vm663, %v1211, 0
    %1218 = vmatpush.bf16.xpose.msra.mxu0 0
    %1219 = vmatpush.bf16.xpose.msra.mxu0 0
    %1220 = vmatpush.bf16.xpose.msra.mxu0 0
    %1221 = vmatpush.bf16.xpose.msra.mxu0 0
    %1222 = vmatpush.bf16.xpose.msra.mxu0 0
    %1223 = vmatpush.bf16.xpose.msra.mxu0 0
    %1224 = vmatpush.bf16.xpose.msra.mxu0 0
    %1225 = vmatpush.bf16.xpose.msra.mxu0 %v1216
    %1226 = vmatmul.bf16.gmra.mxu0 %v1213
    %v1227 = vpop.f32.mrf.mxu0
    %v1228 = vadd.f32 0.0, %v1227
    %v1229 = vpop.f32.mrf.mxu0
    %v1230 = vadd.f32 0.0, %v1229
    %1231 = vdwg.mxu0
    %v1232 = vsel %vm684, %v1228, -inf
    %1233 = vmax.xlane.f32.xlu0 %v1232
    %v1234 = vpop.xlane.xlu0 %1233
    %v1235 = vsel %vm688, %v1230, -inf
    %1236 = vmax.xlane.f32.xlu0 %v1235
    %v1237 = vpop.xlane.xlu0 %1236
    %v1238 = vsub.f32 %v1228, %v1234
    %v1239 = vsub.f32 %v1230, %v1237
    %v1240 = vmul.f32 %v1238, 1.442695
    %v1241 = vpow.pop %v1240
    %v1242 = vmul.f32 %v1239, 1.442695
    %v1243 = vpow.pop %v1242
    %v1244 = vsel %vm684, %v1241, 0.0
    %1245 = vadd.xlane.f32.xlu0 %v1244
    %v1246 = vpop.xlane.xlu0 %1245
    %v1247 = vsel %vm688, %v1243, 0.0
    %1248 = vadd.xlane.f32.xlu0 %v1247
    %v1249 = vpop.xlane.xlu0 %1248
    %v1250 = vrcp.pop %v1246
    %v1251 = vmul.f32 %v1246, %v1250
    %v1252 = vsub.f32 1.0, %v1251
    %v1253 = vmul.f32 %v1250, %v1252
    %v1254 = vadd.f32 %v1250, %v1253
    %vm1255 = vweird.f32 %v1246
    %vm1256 = vweird.f32 %v1250
    %vm1257 = vmor %vm1255, %vm1256
    %v1258 = vsel %vm1257, %v1250, %v1254
    %v1259 = vand.u32 2147483647, %v1246
    %vm1260 = vcmp.eq.f32.partialorder %v1259, 8.507059e+37
    %v1261 = vand.u32 %v1246, 2147483648
    %v1262 = vor.u32 1.1754944e-38, %v1261
    %v1263 = vsel %vm1260, %v1262, %v1258
    %v1264 = vmul.f32 %v1241, %v1263
    %v1265 = vrcp.pop %v1249
    %v1266 = vmul.f32 %v1249, %v1265
    %v1267 = vsub.f32 1.0, %v1266
    %v1268 = vmul.f32 %v1265, %v1267
    %v1269 = vadd.f32 %v1265, %v1268
    %vm1270 = vweird.f32 %v1249
    %vm1271 = vweird.f32 %v1265
    %vm1272 = vmor %vm1270, %vm1271
    %v1273 = vsel %vm1272, %v1265, %v1269
    %v1274 = vand.u32 2147483647, %v1249
    %vm1275 = vcmp.eq.f32.partialorder %v1274, 8.507059e+37
    %v1276 = vand.u32 %v1249, 2147483648
    %v1277 = vor.u32 1.1754944e-38, %v1276
    %v1278 = vsel %vm1275, %v1277, %v1273
    %v1279 = vmul.f32 %v1243, %v1278
    %v1280 = vpack.c.bf16 %v1279, %v1264
    %v1282 = vsel %vm684, %v1280, 0
    %v1285 = vand.u32 %v1208, %v741
    %1287 = vmatpush.bf16.msra.mxu0 0
    %1288 = vmatpush.bf16.msra.mxu0 0
    %1289 = vmatpush.bf16.msra.mxu0 0
    %1290 = vmatpush.bf16.msra.mxu0 0
    %1291 = vmatpush.bf16.msra.mxu0 0
    %1292 = vmatpush.bf16.msra.mxu0 0
    %1293 = vmatpush.bf16.msra.mxu0 0
    %1294 = vmatpush.bf16.msra.mxu0 %v1285
    %1295 = vmatmul.bf16.gmra.mxu0 %v1282
    %v1296 = vpop.f32.mrf.mxu0
    %v1297 = vadd.f32 0.0, %v1296
    %v1298 = vpop.f32.mrf.mxu0
    %v1299 = vadd.f32 0.0, %v1298
    %1300 = vdwg.mxu0
    %v1301 = vpack.c.bf16 %v1186, %v1183
    %v1302 = vpack.c.bf16 %v1204, %v1201
    %v1304 = vshrl.u32 %v1301, 16
    %v1306 = vshll.u32 %v1301, 16
    %v1308 = vrot.slane %v1306, 1
    %v1309 = vor.u32 %v1304, %v1308
    %1310 = vrot.lane.b32.xlu0 %v1309, 64
    %v1311 = vpop.permute.xlu0 %1310
    %v1313 = vsel %vm663, %v1309, 0
    %v1316 = vsel %vm663, %v1311, 0
    %1318 = vmatpush.bf16.xpose.msra.mxu0 0
    %1319 = vmatpush.bf16.xpose.msra.mxu0 0
    %1320 = vmatpush.bf16.xpose.msra.mxu0 0
    %1321 = vmatpush.bf16.xpose.msra.mxu0 0
    %1322 = vmatpush.bf16.xpose.msra.mxu0 0
    %1323 = vmatpush.bf16.xpose.msra.mxu0 0
    %1324 = vmatpush.bf16.xpose.msra.mxu0 0
    %1325 = vmatpush.bf16.xpose.msra.mxu0 %v1316
    %1326 = vmatmul.bf16.gmra.mxu0 %v1313
    %v1327 = vpop.f32.mrf.mxu0
    %v1328 = vadd.f32 0.0, %v1327
    %v1329 = vpop.f32.mrf.mxu0
    %v1330 = vadd.f32 0.0, %v1329
    %1331 = vdwg.mxu0
    %v1332 = vsel %vm684, %v1328, -inf
    %1333 = vmax.xlane.f32.xlu0 %v1332
    %v1334 = vpop.xlane.xlu0 %1333
    %v1335 = vsel %vm688, %v1330, -inf
    %1336 = vmax.xlane.f32.xlu0 %v1335
    %v1337 = vpop.xlane.xlu0 %1336
    %v1338 = vsub.f32 %v1328, %v1334
    %v1339 = vsub.f32 %v1330, %v1337
    %v1340 = vmul.f32 %v1338, 1.442695
    %v1341 = vpow.pop %v1340
    %v1342 = vmul.f32 %v1339, 1.442695
    %v1343 = vpow.pop %v1342
    %v1344 = vsel %vm684, %v1341, 0.0
    %1345 = vadd.xlane.f32.xlu0 %v1344
    %v1346 = vpop.xlane.xlu0 %1345
    %v1347 = vsel %vm688, %v1343, 0.0
    %1348 = vadd.xlane.f32.xlu0 %v1347
    %v1349 = vpop.xlane.xlu0 %1348
    %v1350 = vrcp.pop %v1346
    %v1351 = vmul.f32 %v1346, %v1350
    %v1352 = vsub.f32 1.0, %v1351
    %v1353 = vmul.f32 %v1350, %v1352
    %v1354 = vadd.f32 %v1350, %v1353
    %vm1355 = vweird.f32 %v1346
    %vm1356 = vweird.f32 %v1350
    %vm1357 = vmor %vm1355, %vm1356
    %v1358 = vsel %vm1357, %v1350, %v1354
    %v1359 = vand.u32 2147483647, %v1346
    %vm1360 = vcmp.eq.f32.partialorder %v1359, 8.507059e+37
    %v1361 = vand.u32 %v1346, 2147483648
    %v1362 = vor.u32 1.1754944e-38, %v1361
    %v1363 = vsel %vm1360, %v1362, %v1358
    %v1364 = vmul.f32 %v1341, %v1363
    %v1365 = vrcp.pop %v1349
    %v1366 = vmul.f32 %v1349, %v1365
    %v1367 = vsub.f32 1.0, %v1366
    %v1368 = vmul.f32 %v1365, %v1367
    %v1369 = vadd.f32 %v1365, %v1368
    %vm1370 = vweird.f32 %v1349
    %vm1371 = vweird.f32 %v1365
    %vm1372 = vmor %vm1370, %vm1371
    %v1373 = vsel %vm1372, %v1365, %v1369
    %v1374 = vand.u32 2147483647, %v1349
    %vm1375 = vcmp.eq.f32.partialorder %v1374, 8.507059e+37
    %v1376 = vand.u32 %v1349, 2147483648
    %v1377 = vor.u32 1.1754944e-38, %v1376
    %v1378 = vsel %vm1375, %v1377, %v1373
    %v1379 = vmul.f32 %v1343, %v1378
    %v1380 = vpack.c.bf16 %v1379, %v1364
    %v1382 = vshrl.u32 %v1302, 16
    %v1384 = vshll.u32 %v1302, 16
    %v1386 = vrot.slane %v1384, 1
    %v1387 = vor.u32 %v1382, %v1386
    %v1389 = vsel %vm684, %v1380, 0
    %v1392 = vand.u32 %v1387, %v741
    %1394 = vmatpush.bf16.msra.mxu0 0
    %1395 = vmatpush.bf16.msra.mxu0 0
    %1396 = vmatpush.bf16.msra.mxu0 0
    %1397 = vmatpush.bf16.msra.mxu0 0
    %1398 = vmatpush.bf16.msra.mxu0 0
    %1399 = vmatpush.bf16.msra.mxu0 0
    %1400 = vmatpush.bf16.msra.mxu0 0
    %1401 = vmatpush.bf16.msra.mxu0 %v1392
    %1402 = vmatmul.bf16.gmra.mxu0 %v1389
    %v1403 = vpop.f32.mrf.mxu0
    %v1404 = vadd.f32 0.0, %v1403
    %v1405 = vpop.f32.mrf.mxu0
    %v1406 = vadd.f32 0.0, %v1405
    %1407 = vdwg.mxu0
    %v1410 = vrot.slane %v1404, 7
    %v1411 = vrot.slane %v1406, 7
    %v1412 = vsel %vm868, %v1410, %v1411
    %v1415 = vsel %vm868, %v1299, %v1410
    %v1416 = vpack.c.bf16 %v1415, %v1297
    %v1417 = vpack.c.bf16 %v1412, %v1412
    %v1419 = vperm.slane %v1137, 0
    %v1429 = vunpack.c.l.b16 %v1128
    %v1430 = vunpack.c.l.b16 %v1129
    %v1431 = vunpack.c.l.b16 %v1130
    %v1432 = vunpack.c.l.b16 %v1131
    %v1433 = vunpack.c.l.b16 %v1132
    %v1434 = vunpack.c.l.b16 %v1133
    %v1435 = vunpack.c.l.b16 %v1134
    %v1436 = vunpack.c.l.b16 %v1135
    %v1437 = vpack.c.b16 %v1430, %v1429
    %v1438 = vpack.c.b16 %v1432, %v1431
    %v1439 = vpack.c.b16 %v1434, %v1433
    %v1440 = vpack.c.b16 %v1436, %v1435
    %v1446 = vsel %vm663, %v1416, 0
    %v1449 = vsel %vm663, %v1417, 0
    %1451 = vmatpush.bf16.msra.mxu0 0
    %1452 = vmatpush.bf16.msra.mxu0 0
    %1453 = vmatpush.bf16.msra.mxu0 0
    %1454 = vmatpush.bf16.msra.mxu0 0
    %1455 = vmatpush.bf16.msra.mxu0 %v1440
    %1456 = vmatpush.bf16.msra.mxu0 %v1439
    %1457 = vmatpush.bf16.msra.mxu0 %v1438
    %1458 = vmatpush.bf16.msra.mxu0 %v1437
    %1459 = vmatmul.bf16.gmra.mxu0 %v1446
    %v1460 = vpop.f32.mrf.mxu0
    %v1461 = vadd.f32 %v1419, %v1460
    %v1462 = vpop.f32.mrf.mxu0
    %v1463 = vadd.f32 %v1419, %v1462
    %1464 = vmatmul.bf16.gmra.mxu0 %v1449
    %v1465 = vpop.f32.mrf.mxu0
    %v1466 = vadd.f32 %v1419, %v1465
    %v1467 = vpop.f32.mrf.mxu0
    %1468 = vdwg.mxu0
    %v1469 = vmul.f32 %v1461, 0.33333334
    %v1470 = vmul.f32 %v1463, 0.33333334
    %v1471 = vmul.f32 %v1466, 0.33333334
    %vm1472 = vcmp.lt.f32.partialorder %v1469, 0.0
    %vm1473 = vcmp.lt.f32.partialorder %v1470, 0.0
    %vm1474 = vcmp.lt.f32.partialorder %v1471, 0.0
    %v1475 = vand.u32 2147483647, %v1469
    %v1476 = vand.u32 2147483647, %v1470
    %v1477 = vand.u32 2147483647, %v1471
    %vm1478 = vcmp.gt.f32.partialorder %v1475, 2.4142137
    %vm1479 = vcmp.gt.f32.partialorder %v1476, 2.4142137
    %vm1480 = vcmp.gt.f32.partialorder %v1477, 2.4142137
    %vm1481 = vcmp.gt.f32.partialorder %v1475, 0.41421357
    %vm1482 = vcmp.gt.f32.partialorder %v1476, 0.41421357
    %vm1483 = vcmp.gt.f32.partialorder %v1477, 0.41421357
    %v1484 = vmax.f32 %v1475, 1e-30
    %v1485 = vmax.f32 %v1476, 1e-30
    %v1486 = vmax.f32 %v1477, 1e-30
    %v1487 = vrcp.pop %v1484
    %v1488 = vmul.f32 %v1484, %v1487
    %v1489 = vsub.f32 1.0, %v1488
    %v1490 = vmul.f32 %v1487, %v1489
    %v1491 = vadd.f32 %v1487, %v1490
    %vm1492 = vweird.f32 %v1484
    %vm1493 = vweird.f32 %v1487
    %vm1494 = vmor %vm1492, %vm1493
    %v1495 = vsel %vm1494, %v1487, %v1491
    %v1496 = vand.u32 2147483647, %v1484
    %vm1497 = vcmp.eq.f32.partialorder %v1496, 8.507059e+37
    %v1498 = vand.u32 %v1484, 2147483648
    %v1499 = vor.u32 1.1754944e-38, %v1498
    %v1500 = vsel %vm1497, %v1499, %v1495
    %v1501 = vmul.f32 -1.0, %v1500
    %v1502 = vrcp.pop %v1485
    %v1503 = vmul.f32 %v1485, %v1502
    %v1504 = vsub.f32 1.0, %v1503
    %v1505 = vmul.f32 %v1502, %v1504
    %v1506 = vadd.f32 %v1502, %v1505
    %vm1507 = vweird.f32 %v1485
    %vm1508 = vweird.f32 %v1502
    %vm1509 = vmor %vm1507, %vm1508
    %v1510 = vsel %vm1509, %v1502, %v1506
    %v1511 = vand.u32 2147483647, %v1485
    %vm1512 = vcmp.eq.f32.partialorder %v1511, 8.507059e+37
    %v1513 = vand.u32 %v1485, 2147483648
    %v1514 = vor.u32 1.1754944e-38, %v1513
    %v1515 = vsel %vm1512, %v1514, %v1510
    %v1516 = vmul.f32 -1.0, %v1515
    %v1517 = vrcp.pop %v1486
    %v1518 = vmul.f32 %v1486, %v1517
    %v1519 = vsub.f32 1.0, %v1518
    %v1520 = vmul.f32 %v1517, %v1519
    %v1521 = vadd.f32 %v1517, %v1520
    %vm1522 = vweird.f32 %v1486
    %vm1523 = vweird.f32 %v1517
    %vm1524 = vmor %vm1522, %vm1523
    %v1525 = vsel %vm1524, %v1517, %v1521
    %v1526 = vand.u32 2147483647, %v1486
    %vm1527 = vcmp.eq.f32.partialorder %v1526, 8.507059e+37
    %v1528 = vand.u32 %v1486, 2147483648
    %v1529 = vor.u32 1.1754944e-38, %v1528
    %v1530 = vsel %vm1527, %v1529, %v1525
    %v1531 = vmul.f32 -1.0, %v1530
    %v1532 = vsub.f32 %v1475, 1.0
    %v1533 = vsub.f32 %v1476, 1.0
    %v1534 = vsub.f32 %v1477, 1.0
    %v1535 = vadd.f32 %v1475, 1.0
    %v1536 = vadd.f32 %v1476, 1.0
    %v1537 = vadd.f32 %v1477, 1.0
    %v1538 = vrcp.pop %v1535
    %v1539 = vmul.f32 %v1535, %v1538
    %v1540 = vsub.f32 1.0, %v1539
    %v1541 = vmul.f32 %v1538, %v1540
    %v1542 = vadd.f32 %v1538, %v1541
    %vm1543 = vweird.f32 %v1535
    %vm1544 = vweird.f32 %v1538
    %vm1545 = vmor %vm1543, %vm1544
    %v1546 = vsel %vm1545, %v1538, %v1542
    %v1547 = vand.u32 2147483647, %v1535
    %vm1548 = vcmp.eq.f32.partialorder %v1547, 8.507059e+37
    %v1549 = vand.u32 %v1535, 2147483648
    %v1550 = vor.u32 1.1754944e-38, %v1549
    %v1551 = vsel %vm1548, %v1550, %v1546
    %v1552 = vmul.f32 %v1532, %v1551
    %v1553 = vrcp.pop %v1536
    %v1554 = vmul.f32 %v1536, %v1553
    %v1555 = vsub.f32 1.0, %v1554
    %v1556 = vmul.f32 %v1553, %v1555
    %v1557 = vadd.f32 %v1553, %v1556
    %vm1558 = vweird.f32 %v1536
    %vm1559 = vweird.f32 %v1553
    %vm1560 = vmor %vm1558, %vm1559
    %v1561 = vsel %vm1560, %v1553, %v1557
    %v1562 = vand.u32 2147483647, %v1536
    %vm1563 = vcmp.eq.f32.partialorder %v1562, 8.507059e+37
    %v1564 = vand.u32 %v1536, 2147483648
    %v1565 = vor.u32 1.1754944e-38, %v1564
    %v1566 = vsel %vm1563, %v1565, %v1561
    %v1567 = vmul.f32 %v1533, %v1566
    %v1568 = vrcp.pop %v1537
    %v1569 = vmul.f32 %v1537, %v1568
    %v1570 = vsub.f32 1.0, %v1569
    %v1571 = vmul.f32 %v1568, %v1570
    %v1572 = vadd.f32 %v1568, %v1571
    %vm1573 = vweird.f32 %v1537
    %vm1574 = vweird.f32 %v1568
    %vm1575 = vmor %vm1573, %vm1574
    %v1576 = vsel %vm1575, %v1568, %v1572
    %v1577 = vand.u32 2147483647, %v1537
    %vm1578 = vcmp.eq.f32.partialorder %v1577, 8.507059e+37
    %v1579 = vand.u32 %v1537, 2147483648
    %v1580 = vor.u32 1.1754944e-38, %v1579
    %v1581 = vsel %vm1578, %v1580, %v1576
    %v1582 = vmul.f32 %v1534, %v1581
    %v1583 = vsel %vm1481, %v1552, %v1475
    %v1584 = vsel %vm1482, %v1567, %v1476
    %v1585 = vsel %vm1483, %v1582, %v1477
    %v1586 = vsel %vm1478, %v1501, %v1583
    %v1587 = vsel %vm1479, %v1516, %v1584
    %v1588 = vsel %vm1480, %v1531, %v1585
    %v1589 = vsel %vm1481, 0.7853982, 0.0
    %v1590 = vsel %vm1482, 0.7853982, 0.0
    %v1591 = vsel %vm1483, 0.7853982, 0.0
    %v1592 = vsel %vm1478, 1.5707964, %v1589
    %v1593 = vsel %vm1479, 1.5707964, %v1590
    %v1594 = vsel %vm1480, 1.5707964, %v1591
    %v1595 = vmul.f32 %v1586, %v1586
    %v1596 = vmul.f32 %v1587, %v1587
    %v1597 = vmul.f32 %v1588, %v1588
    %v1598 = vmul.f32 %v1595, 0.080537446
    %v1599 = vmul.f32 %v1596, 0.080537446
    %v1600 = vmul.f32 %v1597, 0.080537446
    %v1601 = vsub.f32 %v1598, 0.13877685
    %v1602 = vsub.f32 %v1599, 0.13877685
    %v1603 = vsub.f32 %v1600, 0.13877685
    %v1604 = vmul.f32 %v1601, %v1595
    %v1605 = vmul.f32 %v1602, %v1596
    %v1606 = vmul.f32 %v1603, %v1597
    %v1607 = vadd.f32 %v1604, 0.19977711
    %v1608 = vadd.f32 %v1605, 0.19977711
    %v1609 = vadd.f32 %v1606, 0.19977711
    %v1610 = vmul.f32 %v1607, %v1595
    %v1611 = vmul.f32 %v1608, %v1596
    %v1612 = vmul.f32 %v1609, %v1597
    %v1613 = vsub.f32 %v1610, 0.3333295
    %v1614 = vsub.f32 %v1611, 0.3333295
    %v1615 = vsub.f32 %v1612, 0.3333295
    %v1616 = vmul.f32 %v1613, %v1595
    %v1617 = vmul.f32 %v1614, %v1596
    %v1618 = vmul.f32 %v1615, %v1597
    %v1619 = vmul.f32 %v1616, %v1586
    %v1620 = vmul.f32 %v1617, %v1587
    %v1621 = vmul.f32 %v1618, %v1588
    %v1622 = vadd.f32 %v1619, %v1586
    %v1623 = vadd.f32 %v1620, %v1587
    %v1624 = vadd.f32 %v1621, %v1588
    %v1625 = vadd.f32 %v1592, %v1622
    %v1626 = vadd.f32 %v1593, %v1623
    %v1627 = vadd.f32 %v1594, %v1624
    %v1628 = vsub.f32 0.0, %v1625
    %v1629 = vsub.f32 0.0, %v1626
    %v1630 = vsub.f32 0.0, %v1627
    %v1631 = vsel %vm1472, %v1628, %v1625
    %v1632 = vsel %vm1473, %v1629, %v1626
    %v1633 = vsel %vm1474, %v1630, %v1627
    %v1634 = vmul.f32 %v1631, 1.908
    %v1635 = vmul.f32 %v1632, 1.908
    %v1636 = vmul.f32 %v1633, 1.908
    %v1637 = vmul.f32 %v1634, 1.442695
    %v1638 = vpow.pop %v1637
    %v1639 = vmul.f32 %v1635, 1.442695
    %v1640 = vpow.pop %v1639
    %v1641 = vmul.f32 %v1636, 1.442695
    %v1642 = vpow.pop %v1641
    %v1643 = vmul.f32 %v1638, %v1117
    %v1644 = vmul.f32 %v1640, %v1118
    %v1645 = vmul.f32 %v1642, %v1119
    %1649 = vrot.lane.b32.xlu0 %v1461, 96
    %v1650 = vpop.permute.xlu0 %1649
    %1651 = vrot.lane.b32.xlu0 %v1463, 96
    %v1652 = vpop.permute.xlu0 %1651
    %1653 = vrot.lane.b32.xlu0 %v1466, 96
    %v1654 = vpop.permute.xlu0 %1653
    %v1658 = vadd.f32 %v1643, %v1650
    %v1659 = vadd.f32 %v1644, %v1652
    %v1660 = vadd.f32 %v1645, %v1654
    %s1661 = scalar_lea.vmem [#allocation2], 64
    %v1662 = vld [vmem:[%s1661] sm:$0xff]
    %v1663 = vld [vmem:[%s1661 + $0x8] sm:$0xff]
    %v1664 = vld [vmem:[%s1661 + $0x10] sm:$0xff]
    %v1665 = vld [vmem:[%s1661 + $0x18] sm:$0xff]
    %s1666 = scalar_lea.vmem %s2, 4
    %v1667 = vld [vmem:[%s1666] sm:$0x3]
    %s1668 = scalar_lea.vmem [#allocation5], 64
    %v1669 = vld [vmem:[%s1668] sm:$0xf]
    %v1670 = vld [vmem:[%s1668 + $0x4] sm:$0xf]
    %v1671 = vld [vmem:[%s1668 + $0x8] sm:$0xf]
    %v1672 = vld [vmem:[%s1668 + $0xc] sm:$0xf]
    %v1673 = vld [vmem:[%s1668 + $0x10] sm:$0xf]
    %v1674 = vld [vmem:[%s1668 + $0x14] sm:$0xf]
    %v1675 = vld [vmem:[%s1668 + $0x18] sm:$0xf]
    %v1676 = vld [vmem:[%s1668 + $0x1c] sm:$0xf]
    %s1677 = scalar_lea.vmem %s4, 2
    %v1678 = vld [vmem:[%s1677] sm:$0x1]
    %v1679 = vpack.c.bf16 %v1659, %v1658
    %v1680 = vpack.c.bf16 %v1660, %v1660
    %v1682 = vperm.slane %v1667, 0
    %v1683 = vperm.slane %v1667, 1
    %v1690 = vunpack.c.l.b16 %v1662
    %v1691 = vunpack.c.h.b16 %v1662
    %v1692 = vunpack.c.l.b16 %v1663
    %v1693 = vunpack.c.h.b16 %v1663
    %v1694 = vunpack.c.l.b16 %v1664
    %v1695 = vunpack.c.h.b16 %v1664
    %v1696 = vunpack.c.l.b16 %v1665
    %v1697 = vunpack.c.h.b16 %v1665
    %v1698 = vpack.c.b16 %v1692, %v1690
    %v1699 = vpack.c.b16 %v1693, %v1691
    %v1700 = vpack.c.b16 %v1696, %v1694
    %v1701 = vpack.c.b16 %v1697, %v1695
    %v1707 = vsel %vm615, %v1679, 0
    %v1710 = vsel %vm615, %v1680, 0
    %1712 = vmatpush.bf16.msra.mxu0 0
    %1713 = vmatpush.bf16.msra.mxu0 0
    %1714 = vmatpush.bf16.msra.mxu0 0
    %1715 = vmatpush.bf16.msra.mxu0 0
    %1716 = vmatpush.bf16.msra.mxu0 0
    %1717 = vmatpush.bf16.msra.mxu0 0
    %1718 = vmatpush.bf16.msra.mxu0 %v1700
    %1719 = vmatpush.bf16.msra.mxu0 %v1698
    %1720 = vmatmul.bf16.gmra.mxu0 %v1707
    %v1721 = vpop.f32.mrf.mxu0
    %v1722 = vadd.f32 %v1682, %v1721
    %v1723 = vpop.f32.mrf.mxu0
    %v1724 = vadd.f32 %v1682, %v1723
    %1725 = vmatmul.bf16.gmra.mxu0 %v1710
    %v1726 = vpop.f32.mrf.mxu0
    %v1727 = vadd.f32 %v1682, %v1726
    %v1728 = vpop.f32.mrf.mxu0
    %1729 = vdwg.mxu0
    %1730 = vmatpush.bf16.msra.mxu0 0
    %1731 = vmatpush.bf16.msra.mxu0 0
    %1732 = vmatpush.bf16.msra.mxu0 0
    %1733 = vmatpush.bf16.msra.mxu0 0
    %1734 = vmatpush.bf16.msra.mxu0 0
    %1735 = vmatpush.bf16.msra.mxu0 0
    %1736 = vmatpush.bf16.msra.mxu0 %v1701
    %1737 = vmatpush.bf16.msra.mxu0 %v1699
    %1738 = vmatmul.bf16.gmra.mxu0 %v1707
    %v1739 = vpop.f32.mrf.mxu0
    %v1740 = vadd.f32 %v1683, %v1739
    %v1741 = vpop.f32.mrf.mxu0
    %v1742 = vadd.f32 %v1683, %v1741
    %1743 = vmatmul.bf16.gmra.mxu0 %v1710
    %v1744 = vpop.f32.mrf.mxu0
    %v1745 = vadd.f32 %v1683, %v1744
    %v1746 = vpop.f32.mrf.mxu0
    %1747 = vdwg.mxu0
    %v1748 = vpack.c.bf16 %v1724, %v1722
    %v1749 = vpack.c.bf16 %v1742, %v1740
    %1751 = vrot.lane.b32.xlu0 %v1748, 64
    %v1752 = vpop.permute.xlu0 %1751
    %v1754 = vsel %vm663, %v1748, 0
    %v1757 = vsel %vm663, %v1752, 0
    %1759 = vmatpush.bf16.xpose.msra.mxu0 0
    %1760 = vmatpush.bf16.xpose.msra.mxu0 0
    %1761 = vmatpush.bf16.xpose.msra.mxu0 0
    %1762 = vmatpush.bf16.xpose.msra.mxu0 0
    %1763 = vmatpush.bf16.xpose.msra.mxu0 0
    %1764 = vmatpush.bf16.xpose.msra.mxu0 0
    %1765 = vmatpush.bf16.xpose.msra.mxu0 0
    %1766 = vmatpush.bf16.xpose.msra.mxu0 %v1757
    %1767 = vmatmul.bf16.gmra.mxu0 %v1754
    %v1768 = vpop.f32.mrf.mxu0
    %v1769 = vadd.f32 0.0, %v1768
    %v1770 = vpop.f32.mrf.mxu0
    %v1771 = vadd.f32 0.0, %v1770
    %1772 = vdwg.mxu0
    %v1773 = vsel %vm684, %v1769, -inf
    %1774 = vmax.xlane.f32.xlu0 %v1773
    %v1775 = vpop.xlane.xlu0 %1774
    %v1776 = vsel %vm688, %v1771, -inf
    %1777 = vmax.xlane.f32.xlu0 %v1776
    %v1778 = vpop.xlane.xlu0 %1777
    %v1779 = vsub.f32 %v1769, %v1775
    %v1780 = vsub.f32 %v1771, %v1778
    %v1781 = vmul.f32 %v1779, 1.442695
    %v1782 = vpow.pop %v1781
    %v1783 = vmul.f32 %v1780, 1.442695
    %v1784 = vpow.pop %v1783
    %v1785 = vsel %vm684, %v1782, 0.0
    %1786 = vadd.xlane.f32.xlu0 %v1785
    %v1787 = vpop.xlane.xlu0 %1786
    %v1788 = vsel %vm688, %v1784, 0.0
    %1789 = vadd.xlane.f32.xlu0 %v1788
    %v1790 = vpop.xlane.xlu0 %1789
    %v1791 = vrcp.pop %v1787
    %v1792 = vmul.f32 %v1787, %v1791
    %v1793 = vsub.f32 1.0, %v1792
    %v1794 = vmul.f32 %v1791, %v1793
    %v1795 = vadd.f32 %v1791, %v1794
    %vm1796 = vweird.f32 %v1787
    %vm1797 = vweird.f32 %v1791
    %vm1798 = vmor %vm1796, %vm1797
    %v1799 = vsel %vm1798, %v1791, %v1795
    %v1800 = vand.u32 2147483647, %v1787
    %vm1801 = vcmp.eq.f32.partialorder %v1800, 8.507059e+37
    %v1802 = vand.u32 %v1787, 2147483648
    %v1803 = vor.u32 1.1754944e-38, %v1802
    %v1804 = vsel %vm1801, %v1803, %v1799
    %v1805 = vmul.f32 %v1782, %v1804
    %v1806 = vrcp.pop %v1790
    %v1807 = vmul.f32 %v1790, %v1806
    %v1808 = vsub.f32 1.0, %v1807
    %v1809 = vmul.f32 %v1806, %v1808
    %v1810 = vadd.f32 %v1806, %v1809
    %vm1811 = vweird.f32 %v1790
    %vm1812 = vweird.f32 %v1806
    %vm1813 = vmor %vm1811, %vm1812
    %v1814 = vsel %vm1813, %v1806, %v1810
    %v1815 = vand.u32 2147483647, %v1790
    %vm1816 = vcmp.eq.f32.partialorder %v1815, 8.507059e+37
    %v1817 = vand.u32 %v1790, 2147483648
    %v1818 = vor.u32 1.1754944e-38, %v1817
    %v1819 = vsel %vm1816, %v1818, %v1814
    %v1820 = vmul.f32 %v1784, %v1819
    %v1821 = vpack.c.bf16 %v1820, %v1805
    %v1823 = vsel %vm684, %v1821, 0
    %v1826 = vand.u32 %v1749, %v741
    %1828 = vmatpush.bf16.msra.mxu0 0
    %1829 = vmatpush.bf16.msra.mxu0 0
    %1830 = vmatpush.bf16.msra.mxu0 0
    %1831 = vmatpush.bf16.msra.mxu0 0
    %1832 = vmatpush.bf16.msra.mxu0 0
    %1833 = vmatpush.bf16.msra.mxu0 0
    %1834 = vmatpush.bf16.msra.mxu0 0
    %1835 = vmatpush.bf16.msra.mxu0 %v1826
    %1836 = vmatmul.bf16.gmra.mxu0 %v1823
    %v1837 = vpop.f32.mrf.mxu0
    %v1838 = vadd.f32 0.0, %v1837
    %v1839 = vpop.f32.mrf.mxu0
    %v1840 = vadd.f32 0.0, %v1839
    %1841 = vdwg.mxu0
    %v1842 = vpack.c.bf16 %v1727, %v1724
    %v1843 = vpack.c.bf16 %v1745, %v1742
    %v1845 = vshrl.u32 %v1842, 16
    %v1847 = vshll.u32 %v1842, 16
    %v1849 = vrot.slane %v1847, 1
    %v1850 = vor.u32 %v1845, %v1849
    %1851 = vrot.lane.b32.xlu0 %v1850, 64
    %v1852 = vpop.permute.xlu0 %1851
    %v1854 = vsel %vm663, %v1850, 0
    %v1857 = vsel %vm663, %v1852, 0
    %1859 = vmatpush.bf16.xpose.msra.mxu0 0
    %1860 = vmatpush.bf16.xpose.msra.mxu0 0
    %1861 = vmatpush.bf16.xpose.msra.mxu0 0
    %1862 = vmatpush.bf16.xpose.msra.mxu0 0
    %1863 = vmatpush.bf16.xpose.msra.mxu0 0
    %1864 = vmatpush.bf16.xpose.msra.mxu0 0
    %1865 = vmatpush.bf16.xpose.msra.mxu0 0
    %1866 = vmatpush.bf16.xpose.msra.mxu0 %v1857
    %1867 = vmatmul.bf16.gmra.mxu0 %v1854
    %v1868 = vpop.f32.mrf.mxu0
    %v1869 = vadd.f32 0.0, %v1868
    %v1870 = vpop.f32.mrf.mxu0
    %v1871 = vadd.f32 0.0, %v1870
    %1872 = vdwg.mxu0
    %v1873 = vsel %vm684, %v1869, -inf
    %1874 = vmax.xlane.f32.xlu0 %v1873
    %v1875 = vpop.xlane.xlu0 %1874
    %v1876 = vsel %vm688, %v1871, -inf
    %1877 = vmax.xlane.f32.xlu0 %v1876
    %v1878 = vpop.xlane.xlu0 %1877
    %v1879 = vsub.f32 %v1869, %v1875
    %v1880 = vsub.f32 %v1871, %v1878
    %v1881 = vmul.f32 %v1879, 1.442695
    %v1882 = vpow.pop %v1881
    %v1883 = vmul.f32 %v1880, 1.442695
    %v1884 = vpow.pop %v1883
    %v1885 = vsel %vm684, %v1882, 0.0
    %1886 = vadd.xlane.f32.xlu0 %v1885
    %v1887 = vpop.xlane.xlu0 %1886
    %v1888 = vsel %vm688, %v1884, 0.0
    %1889 = vadd.xlane.f32.xlu0 %v1888
    %v1890 = vpop.xlane.xlu0 %1889
    %v1891 = vrcp.pop %v1887
    %v1892 = vmul.f32 %v1887, %v1891
    %v1893 = vsub.f32 1.0, %v1892
    %v1894 = vmul.f32 %v1891, %v1893
    %v1895 = vadd.f32 %v1891, %v1894
    %vm1896 = vweird.f32 %v1887
    %vm1897 = vweird.f32 %v1891
    %vm1898 = vmor %vm1896, %vm1897
    %v1899 = vsel %vm1898, %v1891, %v1895
    %v1900 = vand.u32 2147483647, %v1887
    %vm1901 = vcmp.eq.f32.partialorder %v1900, 8.507059e+37
    %v1902 = vand.u32 %v1887, 2147483648
    %v1903 = vor.u32 1.1754944e-38, %v1902
    %v1904 = vsel %vm1901, %v1903, %v1899
    %v1905 = vmul.f32 %v1882, %v1904
    %v1906 = vrcp.pop %v1890
    %v1907 = vmul.f32 %v1890, %v1906
    %v1908 = vsub.f32 1.0, %v1907
    %v1909 = vmul.f32 %v1906, %v1908
    %v1910 = vadd.f32 %v1906, %v1909
    %vm1911 = vweird.f32 %v1890
    %vm1912 = vweird.f32 %v1906
    %vm1913 = vmor %vm1911, %vm1912
    %v1914 = vsel %vm1913, %v1906, %v1910
    %v1915 = vand.u32 2147483647, %v1890
    %vm1916 = vcmp.eq.f32.partialorder %v1915, 8.507059e+37
    %v1917 = vand.u32 %v1890, 2147483648
    %v1918 = vor.u32 1.1754944e-38, %v1917
    %v1919 = vsel %vm1916, %v1918, %v1914
    %v1920 = vmul.f32 %v1884, %v1919
    %v1921 = vpack.c.bf16 %v1920, %v1905
    %v1923 = vshrl.u32 %v1843, 16
    %v1925 = vshll.u32 %v1843, 16
    %v1927 = vrot.slane %v1925, 1
    %v1928 = vor.u32 %v1923, %v1927
    %v1930 = vsel %vm684, %v1921, 0
    %v1933 = vand.u32 %v1928, %v741
    %1935 = vmatpush.bf16.msra.mxu0 0
    %1936 = vmatpush.bf16.msra.mxu0 0
    %1937 = vmatpush.bf16.msra.mxu0 0
    %1938 = vmatpush.bf16.msra.mxu0 0
    %1939 = vmatpush.bf16.msra.mxu0 0
    %1940 = vmatpush.bf16.msra.mxu0 0
    %1941 = vmatpush.bf16.msra.mxu0 0
    %1942 = vmatpush.bf16.msra.mxu0 %v1933
    %1943 = vmatmul.bf16.gmra.mxu0 %v1930
    %v1944 = vpop.f32.mrf.mxu0
    %v1945 = vadd.f32 0.0, %v1944
    %v1946 = vpop.f32.mrf.mxu0
    %v1947 = vadd.f32 0.0, %v1946
    %1948 = vdwg.mxu0
    %v1951 = vrot.slane %v1945, 7
    %v1952 = vrot.slane %v1947, 7
    %v1953 = vsel %vm868, %v1951, %v1952
    %v1956 = vsel %vm868, %v1840, %v1951
    %v1957 = vpack.c.bf16 %v1956, %v1838
    %v1958 = vpack.c.bf16 %v1953, %v1953
    %v1960 = vperm.slane %v1678, 0
    %v1970 = vunpack.c.l.b16 %v1669
    %v1971 = vunpack.c.l.b16 %v1670
    %v1972 = vunpack.c.l.b16 %v1671
    %v1973 = vunpack.c.l.b16 %v1672
    %v1974 = vunpack.c.l.b16 %v1673
    %v1975 = vunpack.c.l.b16 %v1674
    %v1976 = vunpack.c.l.b16 %v1675
    %v1977 = vunpack.c.l.b16 %v1676
    %v1978 = vpack.c.b16 %v1971, %v1970
    %v1979 = vpack.c.b16 %v1973, %v1972
    %v1980 = vpack.c.b16 %v1975, %v1974
    %v1981 = vpack.c.b16 %v1977, %v1976
    %v1987 = vsel %vm663, %v1957, 0
    %v1990 = vsel %vm663, %v1958, 0
    %1992 = vmatpush.bf16.msra.mxu0 0
    %1993 = vmatpush.bf16.msra.mxu0 0
    %1994 = vmatpush.bf16.msra.mxu0 0
    %1995 = vmatpush.bf16.msra.mxu0 0
    %1996 = vmatpush.bf16.msra.mxu0 %v1981
    %1997 = vmatpush.bf16.msra.mxu0 %v1980
    %1998 = vmatpush.bf16.msra.mxu0 %v1979
    %1999 = vmatpush.bf16.msra.mxu0 %v1978
    %2000 = vmatmul.bf16.gmra.mxu0 %v1987
    %v2001 = vpop.f32.mrf.mxu0
    %v2002 = vadd.f32 %v1960, %v2001
    %v2003 = vpop.f32.mrf.mxu0
    %v2004 = vadd.f32 %v1960, %v2003
    %2005 = vmatmul.bf16.gmra.mxu0 %v1990
    %v2006 = vpop.f32.mrf.mxu0
    %v2007 = vadd.f32 %v1960, %v2006
    %v2008 = vpop.f32.mrf.mxu0
    %2009 = vdwg.mxu0
    %v2010 = vmul.f32 %v2002, 0.33333334
    %v2011 = vmul.f32 %v2004, 0.33333334
    %v2012 = vmul.f32 %v2007, 0.33333334
    %vm2013 = vcmp.lt.f32.partialorder %v2010, 0.0
    %vm2014 = vcmp.lt.f32.partialorder %v2011, 0.0
    %vm2015 = vcmp.lt.f32.partialorder %v2012, 0.0
    %v2016 = vand.u32 2147483647, %v2010
    %v2017 = vand.u32 2147483647, %v2011
    %v2018 = vand.u32 2147483647, %v2012
    %vm2019 = vcmp.gt.f32.partialorder %v2016, 2.4142137
    %vm2020 = vcmp.gt.f32.partialorder %v2017, 2.4142137
    %vm2021 = vcmp.gt.f32.partialorder %v2018, 2.4142137
    %vm2022 = vcmp.gt.f32.partialorder %v2016, 0.41421357
    %vm2023 = vcmp.gt.f32.partialorder %v2017, 0.41421357
    %vm2024 = vcmp.gt.f32.partialorder %v2018, 0.41421357
    %v2025 = vmax.f32 %v2016, 1e-30
    %v2026 = vmax.f32 %v2017, 1e-30
    %v2027 = vmax.f32 %v2018, 1e-30
    %v2028 = vrcp.pop %v2025
    %v2029 = vmul.f32 %v2025, %v2028
    %v2030 = vsub.f32 1.0, %v2029
    %v2031 = vmul.f32 %v2028, %v2030
    %v2032 = vadd.f32 %v2028, %v2031
    %vm2033 = vweird.f32 %v2025
    %vm2034 = vweird.f32 %v2028
    %vm2035 = vmor %vm2033, %vm2034
    %v2036 = vsel %vm2035, %v2028, %v2032
    %v2037 = vand.u32 2147483647, %v2025
    %vm2038 = vcmp.eq.f32.partialorder %v2037, 8.507059e+37
    %v2039 = vand.u32 %v2025, 2147483648
    %v2040 = vor.u32 1.1754944e-38, %v2039
    %v2041 = vsel %vm2038, %v2040, %v2036
    %v2042 = vmul.f32 -1.0, %v2041
    %v2043 = vrcp.pop %v2026
    %v2044 = vmul.f32 %v2026, %v2043
    %v2045 = vsub.f32 1.0, %v2044
    %v2046 = vmul.f32 %v2043, %v2045
    %v2047 = vadd.f32 %v2043, %v2046
    %vm2048 = vweird.f32 %v2026
    %vm2049 = vweird.f32 %v2043
    %vm2050 = vmor %vm2048, %vm2049
    %v2051 = vsel %vm2050, %v2043, %v2047
    %v2052 = vand.u32 2147483647, %v2026
    %vm2053 = vcmp.eq.f32.partialorder %v2052, 8.507059e+37
    %v2054 = vand.u32 %v2026, 2147483648
    %v2055 = vor.u32 1.1754944e-38, %v2054
    %v2056 = vsel %vm2053, %v2055, %v2051
    %v2057 = vmul.f32 -1.0, %v2056
    %v2058 = vrcp.pop %v2027
    %v2059 = vmul.f32 %v2027, %v2058
    %v2060 = vsub.f32 1.0, %v2059
    %v2061 = vmul.f32 %v2058, %v2060
    %v2062 = vadd.f32 %v2058, %v2061
    %vm2063 = vweird.f32 %v2027
    %vm2064 = vweird.f32 %v2058
    %vm2065 = vmor %vm2063, %vm2064
    %v2066 = vsel %vm2065, %v2058, %v2062
    %v2067 = vand.u32 2147483647, %v2027
    %vm2068 = vcmp.eq.f32.partialorder %v2067, 8.507059e+37
    %v2069 = vand.u32 %v2027, 2147483648
    %v2070 = vor.u32 1.1754944e-38, %v2069
    %v2071 = vsel %vm2068, %v2070, %v2066
    %v2072 = vmul.f32 -1.0, %v2071
    %v2073 = vsub.f32 %v2016, 1.0
    %v2074 = vsub.f32 %v2017, 1.0
    %v2075 = vsub.f32 %v2018, 1.0
    %v2076 = vadd.f32 %v2016, 1.0
    %v2077 = vadd.f32 %v2017, 1.0
    %v2078 = vadd.f32 %v2018, 1.0
    %v2079 = vrcp.pop %v2076
    %v2080 = vmul.f32 %v2076, %v2079
    %v2081 = vsub.f32 1.0, %v2080
    %v2082 = vmul.f32 %v2079, %v2081
    %v2083 = vadd.f32 %v2079, %v2082
    %vm2084 = vweird.f32 %v2076
    %vm2085 = vweird.f32 %v2079
    %vm2086 = vmor %vm2084, %vm2085
    %v2087 = vsel %vm2086, %v2079, %v2083
    %v2088 = vand.u32 2147483647, %v2076
    %vm2089 = vcmp.eq.f32.partialorder %v2088, 8.507059e+37
    %v2090 = vand.u32 %v2076, 2147483648
    %v2091 = vor.u32 1.1754944e-38, %v2090
    %v2092 = vsel %vm2089, %v2091, %v2087
    %v2093 = vmul.f32 %v2073, %v2092
    %v2094 = vrcp.pop %v2077
    %v2095 = vmul.f32 %v2077, %v2094
    %v2096 = vsub.f32 1.0, %v2095
    %v2097 = vmul.f32 %v2094, %v2096
    %v2098 = vadd.f32 %v2094, %v2097
    %vm2099 = vweird.f32 %v2077
    %vm2100 = vweird.f32 %v2094
    %vm2101 = vmor %vm2099, %vm2100
    %v2102 = vsel %vm2101, %v2094, %v2098
    %v2103 = vand.u32 2147483647, %v2077
    %vm2104 = vcmp.eq.f32.partialorder %v2103, 8.507059e+37
    %v2105 = vand.u32 %v2077, 2147483648
    %v2106 = vor.u32 1.1754944e-38, %v2105
    %v2107 = vsel %vm2104, %v2106, %v2102
    %v2108 = vmul.f32 %v2074, %v2107
    %v2109 = vrcp.pop %v2078
    %v2110 = vmul.f32 %v2078, %v2109
    %v2111 = vsub.f32 1.0, %v2110
    %v2112 = vmul.f32 %v2109, %v2111
    %v2113 = vadd.f32 %v2109, %v2112
    %vm2114 = vweird.f32 %v2078
    %vm2115 = vweird.f32 %v2109
    %vm2116 = vmor %vm2114, %vm2115
    %v2117 = vsel %vm2116, %v2109, %v2113
    %v2118 = vand.u32 2147483647, %v2078
    %vm2119 = vcmp.eq.f32.partialorder %v2118, 8.507059e+37
    %v2120 = vand.u32 %v2078, 2147483648
    %v2121 = vor.u32 1.1754944e-38, %v2120
    %v2122 = vsel %vm2119, %v2121, %v2117
    %v2123 = vmul.f32 %v2075, %v2122
    %v2124 = vsel %vm2022, %v2093, %v2016
    %v2125 = vsel %vm2023, %v2108, %v2017
    %v2126 = vsel %vm2024, %v2123, %v2018
    %v2127 = vsel %vm2019, %v2042, %v2124
    %v2128 = vsel %vm2020, %v2057, %v2125
    %v2129 = vsel %vm2021, %v2072, %v2126
    %v2130 = vsel %vm2022, 0.7853982, 0.0
    %v2131 = vsel %vm2023, 0.7853982, 0.0
    %v2132 = vsel %vm2024, 0.7853982, 0.0
    %v2133 = vsel %vm2019, 1.5707964, %v2130
    %v2134 = vsel %vm2020, 1.5707964, %v2131
    %v2135 = vsel %vm2021, 1.5707964, %v2132
    %v2136 = vmul.f32 %v2127, %v2127
    %v2137 = vmul.f32 %v2128, %v2128
    %v2138 = vmul.f32 %v2129, %v2129
    %v2139 = vmul.f32 %v2136, 0.080537446
    %v2140 = vmul.f32 %v2137, 0.080537446
    %v2141 = vmul.f32 %v2138, 0.080537446
    %v2142 = vsub.f32 %v2139, 0.13877685
    %v2143 = vsub.f32 %v2140, 0.13877685
    %v2144 = vsub.f32 %v2141, 0.13877685
    %v2145 = vmul.f32 %v2142, %v2136
    %v2146 = vmul.f32 %v2143, %v2137
    %v2147 = vmul.f32 %v2144, %v2138
    %v2148 = vadd.f32 %v2145, 0.19977711
    %v2149 = vadd.f32 %v2146, 0.19977711
    %v2150 = vadd.f32 %v2147, 0.19977711
    %v2151 = vmul.f32 %v2148, %v2136
    %v2152 = vmul.f32 %v2149, %v2137
    %v2153 = vmul.f32 %v2150, %v2138
    %v2154 = vsub.f32 %v2151, 0.3333295
    %v2155 = vsub.f32 %v2152, 0.3333295
    %v2156 = vsub.f32 %v2153, 0.3333295
    %v2157 = vmul.f32 %v2154, %v2136
    %v2158 = vmul.f32 %v2155, %v2137
    %v2159 = vmul.f32 %v2156, %v2138
    %v2160 = vmul.f32 %v2157, %v2127
    %v2161 = vmul.f32 %v2158, %v2128
    %v2162 = vmul.f32 %v2159, %v2129
    %v2163 = vadd.f32 %v2160, %v2127
    %v2164 = vadd.f32 %v2161, %v2128
    %v2165 = vadd.f32 %v2162, %v2129
    %v2166 = vadd.f32 %v2133, %v2163
    %v2167 = vadd.f32 %v2134, %v2164
    %v2168 = vadd.f32 %v2135, %v2165
    %v2169 = vsub.f32 0.0, %v2166
    %v2170 = vsub.f32 0.0, %v2167
    %v2171 = vsub.f32 0.0, %v2168
    %v2172 = vsel %vm2013, %v2169, %v2166
    %v2173 = vsel %vm2014, %v2170, %v2167
    %v2174 = vsel %vm2015, %v2171, %v2168
    %v2175 = vmul.f32 %v2172, 1.908
    %v2176 = vmul.f32 %v2173, 1.908
    %v2177 = vmul.f32 %v2174, 1.908
    %v2178 = vmul.f32 %v2175, 1.442695
    %v2179 = vpow.pop %v2178
    %v2180 = vmul.f32 %v2176, 1.442695
    %v2181 = vpow.pop %v2180
    %v2182 = vmul.f32 %v2177, 1.442695
    %v2183 = vpow.pop %v2182
    %v2184 = vmul.f32 %v2179, %v1658
    %v2185 = vmul.f32 %v2181, %v1659
    %v2186 = vmul.f32 %v2183, %v1660
    %2190 = vrot.lane.b32.xlu0 %v2002, 96
    %v2191 = vpop.permute.xlu0 %2190
    %2192 = vrot.lane.b32.xlu0 %v2004, 96
    %v2193 = vpop.permute.xlu0 %2192
    %2194 = vrot.lane.b32.xlu0 %v2007, 96
    %v2195 = vpop.permute.xlu0 %2194
    %v2199 = vadd.f32 %v2184, %v2191
    %v2200 = vadd.f32 %v2185, %v2193
    %v2201 = vadd.f32 %v2186, %v2195
    %s2202 = scalar_lea.vmem [#allocation2], 96
    %v2203 = vld [vmem:[%s2202] sm:$0xff]
    %v2204 = vld [vmem:[%s2202 + $0x8] sm:$0xff]
    %v2205 = vld [vmem:[%s2202 + $0x10] sm:$0xff]
    %v2206 = vld [vmem:[%s2202 + $0x18] sm:$0xff]
    %s2207 = scalar_lea.vmem %s2, 6
    %v2208 = vld [vmem:[%s2207] sm:$0x3]
    %s2209 = scalar_lea.vmem [#allocation5], 96
    %v2210 = vld [vmem:[%s2209] sm:$0xf]
    %v2211 = vld [vmem:[%s2209 + $0x4] sm:$0xf]
    %v2212 = vld [vmem:[%s2209 + $0x8] sm:$0xf]
    %v2213 = vld [vmem:[%s2209 + $0xc] sm:$0xf]
    %v2214 = vld [vmem:[%s2209 + $0x10] sm:$0xf]
    %v2215 = vld [vmem:[%s2209 + $0x14] sm:$0xf]
    %v2216 = vld [vmem:[%s2209 + $0x18] sm:$0xf]
    %v2217 = vld [vmem:[%s2209 + $0x1c] sm:$0xf]
    %s2218 = scalar_lea.vmem %s4, 3
    %v2219 = vld [vmem:[%s2218] sm:$0x1]
    %v2220 = vpack.c.bf16 %v2200, %v2199
    %v2221 = vpack.c.bf16 %v2201, %v2201
    %v2223 = vperm.slane %v2208, 0
    %v2224 = vperm.slane %v2208, 1
    %v2231 = vunpack.c.l.b16 %v2203
    %v2232 = vunpack.c.h.b16 %v2203
    %v2233 = vunpack.c.l.b16 %v2204
    %v2234 = vunpack.c.h.b16 %v2204
    %v2235 = vunpack.c.l.b16 %v2205
    %v2236 = vunpack.c.h.b16 %v2205
    %v2237 = vunpack.c.l.b16 %v2206
    %v2238 = vunpack.c.h.b16 %v2206
    %v2239 = vpack.c.b16 %v2233, %v2231
    %v2240 = vpack.c.b16 %v2234, %v2232
    %v2241 = vpack.c.b16 %v2237, %v2235
    %v2242 = vpack.c.b16 %v2238, %v2236
    %v2248 = vsel %vm615, %v2220, 0
    %v2251 = vsel %vm615, %v2221, 0
    %2253 = vmatpush.bf16.msra.mxu0 0
    %2254 = vmatpush.bf16.msra.mxu0 0
    %2255 = vmatpush.bf16.msra.mxu0 0
    %2256 = vmatpush.bf16.msra.mxu0 0
    %2257 = vmatpush.bf16.msra.mxu0 0
    %2258 = vmatpush.bf16.msra.mxu0 0
    %2259 = vmatpush.bf16.msra.mxu0 %v2241
    %2260 = vmatpush.bf16.msra.mxu0 %v2239
    %2261 = vmatmul.bf16.gmra.mxu0 %v2248
    %v2262 = vpop.f32.mrf.mxu0
    %v2263 = vadd.f32 %v2223, %v2262
    %v2264 = vpop.f32.mrf.mxu0
    %v2265 = vadd.f32 %v2223, %v2264
    %2266 = vmatmul.bf16.gmra.mxu0 %v2251
    %v2267 = vpop.f32.mrf.mxu0
    %v2268 = vadd.f32 %v2223, %v2267
    %v2269 = vpop.f32.mrf.mxu0
    %2270 = vdwg.mxu0
    %2271 = vmatpush.bf16.msra.mxu0 0
    %2272 = vmatpush.bf16.msra.mxu0 0
    %2273 = vmatpush.bf16.msra.mxu0 0
    %2274 = vmatpush.bf16.msra.mxu0 0
    %2275 = vmatpush.bf16.msra.mxu0 0
    %2276 = vmatpush.bf16.msra.mxu0 0
    %2277 = vmatpush.bf16.msra.mxu0 %v2242
    %2278 = vmatpush.bf16.msra.mxu0 %v2240
    %2279 = vmatmul.bf16.gmra.mxu0 %v2248
    %v2280 = vpop.f32.mrf.mxu0
    %v2281 = vadd.f32 %v2224, %v2280
    %v2282 = vpop.f32.mrf.mxu0
    %v2283 = vadd.f32 %v2224, %v2282
    %2284 = vmatmul.bf16.gmra.mxu0 %v2251
    %v2285 = vpop.f32.mrf.mxu0
    %v2286 = vadd.f32 %v2224, %v2285
    %v2287 = vpop.f32.mrf.mxu0
    %2288 = vdwg.mxu0
    %v2289 = vpack.c.bf16 %v2265, %v2263
    %v2290 = vpack.c.bf16 %v2283, %v2281
    %2292 = vrot.lane.b32.xlu0 %v2289, 64
    %v2293 = vpop.permute.xlu0 %2292
    %v2295 = vsel %vm663, %v2289, 0
    %v2298 = vsel %vm663, %v2293, 0
    %2300 = vmatpush.bf16.xpose.msra.mxu0 0
    %2301 = vmatpush.bf16.xpose.msra.mxu0 0
    %2302 = vmatpush.bf16.xpose.msra.mxu0 0
    %2303 = vmatpush.bf16.xpose.msra.mxu0 0
    %2304 = vmatpush.bf16.xpose.msra.mxu0 0
    %2305 = vmatpush.bf16.xpose.msra.mxu0 0
    %2306 = vmatpush.bf16.xpose.msra.mxu0 0
    %2307 = vmatpush.bf16.xpose.msra.mxu0 %v2298
    %2308 = vmatmul.bf16.gmra.mxu0 %v2295
    %v2309 = vpop.f32.mrf.mxu0
    %v2310 = vadd.f32 0.0, %v2309
    %v2311 = vpop.f32.mrf.mxu0
    %v2312 = vadd.f32 0.0, %v2311
    %2313 = vdwg.mxu0
    %v2314 = vsel %vm684, %v2310, -inf
    %2315 = vmax.xlane.f32.xlu0 %v2314
    %v2316 = vpop.xlane.xlu0 %2315
    %v2317 = vsel %vm688, %v2312, -inf
    %2318 = vmax.xlane.f32.xlu0 %v2317
    %v2319 = vpop.xlane.xlu0 %2318
    %v2320 = vsub.f32 %v2310, %v2316
    %v2321 = vsub.f32 %v2312, %v2319
    %v2322 = vmul.f32 %v2320, 1.442695
    %v2323 = vpow.pop %v2322
    %v2324 = vmul.f32 %v2321, 1.442695
    %v2325 = vpow.pop %v2324
    %v2326 = vsel %vm684, %v2323, 0.0
    %2327 = vadd.xlane.f32.xlu0 %v2326
    %v2328 = vpop.xlane.xlu0 %2327
    %v2329 = vsel %vm688, %v2325, 0.0
    %2330 = vadd.xlane.f32.xlu0 %v2329
    %v2331 = vpop.xlane.xlu0 %2330
    %v2332 = vrcp.pop %v2328
    %v2333 = vmul.f32 %v2328, %v2332
    %v2334 = vsub.f32 1.0, %v2333
    %v2335 = vmul.f32 %v2332, %v2334
    %v2336 = vadd.f32 %v2332, %v2335
    %vm2337 = vweird.f32 %v2328
    %vm2338 = vweird.f32 %v2332
    %vm2339 = vmor %vm2337, %vm2338
    %v2340 = vsel %vm2339, %v2332, %v2336
    %v2341 = vand.u32 2147483647, %v2328
    %vm2342 = vcmp.eq.f32.partialorder %v2341, 8.507059e+37
    %v2343 = vand.u32 %v2328, 2147483648
    %v2344 = vor.u32 1.1754944e-38, %v2343
    %v2345 = vsel %vm2342, %v2344, %v2340
    %v2346 = vmul.f32 %v2323, %v2345
    %v2347 = vrcp.pop %v2331
    %v2348 = vmul.f32 %v2331, %v2347
    %v2349 = vsub.f32 1.0, %v2348
    %v2350 = vmul.f32 %v2347, %v2349
    %v2351 = vadd.f32 %v2347, %v2350
    %vm2352 = vweird.f32 %v2331
    %vm2353 = vweird.f32 %v2347
    %vm2354 = vmor %vm2352, %vm2353
    %v2355 = vsel %vm2354, %v2347, %v2351
    %v2356 = vand.u32 2147483647, %v2331
    %vm2357 = vcmp.eq.f32.partialorder %v2356, 8.507059e+37
    %v2358 = vand.u32 %v2331, 2147483648
    %v2359 = vor.u32 1.1754944e-38, %v2358
    %v2360 = vsel %vm2357, %v2359, %v2355
    %v2361 = vmul.f32 %v2325, %v2360
    %v2362 = vpack.c.bf16 %v2361, %v2346
    %v2364 = vsel %vm684, %v2362, 0
    %v2367 = vand.u32 %v2290, %v741
    %2369 = vmatpush.bf16.msra.mxu0 0
    %2370 = vmatpush.bf16.msra.mxu0 0
    %2371 = vmatpush.bf16.msra.mxu0 0
    %2372 = vmatpush.bf16.msra.mxu0 0
    %2373 = vmatpush.bf16.msra.mxu0 0
    %2374 = vmatpush.bf16.msra.mxu0 0
    %2375 = vmatpush.bf16.msra.mxu0 0
    %2376 = vmatpush.bf16.msra.mxu0 %v2367
    %2377 = vmatmul.bf16.gmra.mxu0 %v2364
    %v2378 = vpop.f32.mrf.mxu0
    %v2379 = vadd.f32 0.0, %v2378
    %v2380 = vpop.f32.mrf.mxu0
    %v2381 = vadd.f32 0.0, %v2380
    %2382 = vdwg.mxu0
    %v2383 = vpack.c.bf16 %v2268, %v2265
    %v2384 = vpack.c.bf16 %v2286, %v2283
    %v2386 = vshrl.u32 %v2383, 16
    %v2388 = vshll.u32 %v2383, 16
    %v2390 = vrot.slane %v2388, 1
    %v2391 = vor.u32 %v2386, %v2390
    %2392 = vrot.lane.b32.xlu0 %v2391, 64
    %v2393 = vpop.permute.xlu0 %2392
    %v2395 = vsel %vm663, %v2391, 0
    %v2398 = vsel %vm663, %v2393, 0
    %2400 = vmatpush.bf16.xpose.msra.mxu0 0
    %2401 = vmatpush.bf16.xpose.msra.mxu0 0
    %2402 = vmatpush.bf16.xpose.msra.mxu0 0
    %2403 = vmatpush.bf16.xpose.msra.mxu0 0
    %2404 = vmatpush.bf16.xpose.msra.mxu0 0
    %2405 = vmatpush.bf16.xpose.msra.mxu0 0
    %2406 = vmatpush.bf16.xpose.msra.mxu0 0
    %2407 = vmatpush.bf16.xpose.msra.mxu0 %v2398
    %2408 = vmatmul.bf16.gmra.mxu0 %v2395
    %v2409 = vpop.f32.mrf.mxu0
    %v2410 = vadd.f32 0.0, %v2409
    %v2411 = vpop.f32.mrf.mxu0
    %v2412 = vadd.f32 0.0, %v2411
    %2413 = vdwg.mxu0
    %v2414 = vsel %vm684, %v2410, -inf
    %2415 = vmax.xlane.f32.xlu0 %v2414
    %v2416 = vpop.xlane.xlu0 %2415
    %v2417 = vsel %vm688, %v2412, -inf
    %2418 = vmax.xlane.f32.xlu0 %v2417
    %v2419 = vpop.xlane.xlu0 %2418
    %v2420 = vsub.f32 %v2410, %v2416
    %v2421 = vsub.f32 %v2412, %v2419
    %v2422 = vmul.f32 %v2420, 1.442695
    %v2423 = vpow.pop %v2422
    %v2424 = vmul.f32 %v2421, 1.442695
    %v2425 = vpow.pop %v2424
    %v2426 = vsel %vm684, %v2423, 0.0
    %2427 = vadd.xlane.f32.xlu0 %v2426
    %v2428 = vpop.xlane.xlu0 %2427
    %v2429 = vsel %vm688, %v2425, 0.0
    %2430 = vadd.xlane.f32.xlu0 %v2429
    %v2431 = vpop.xlane.xlu0 %2430
    %v2432 = vrcp.pop %v2428
    %v2433 = vmul.f32 %v2428, %v2432
    %v2434 = vsub.f32 1.0, %v2433
    %v2435 = vmul.f32 %v2432, %v2434
    %v2436 = vadd.f32 %v2432, %v2435
    %vm2437 = vweird.f32 %v2428
    %vm2438 = vweird.f32 %v2432
    %vm2439 = vmor %vm2437, %vm2438
    %v2440 = vsel %vm2439, %v2432, %v2436
    %v2441 = vand.u32 2147483647, %v2428
    %vm2442 = vcmp.eq.f32.partialorder %v2441, 8.507059e+37
    %v2443 = vand.u32 %v2428, 2147483648
    %v2444 = vor.u32 1.1754944e-38, %v2443
    %v2445 = vsel %vm2442, %v2444, %v2440
    %v2446 = vmul.f32 %v2423, %v2445
    %v2447 = vrcp.pop %v2431
    %v2448 = vmul.f32 %v2431, %v2447
    %v2449 = vsub.f32 1.0, %v2448
    %v2450 = vmul.f32 %v2447, %v2449
    %v2451 = vadd.f32 %v2447, %v2450
    %vm2452 = vweird.f32 %v2431
    %vm2453 = vweird.f32 %v2447
    %vm2454 = vmor %vm2452, %vm2453
    %v2455 = vsel %vm2454, %v2447, %v2451
    %v2456 = vand.u32 2147483647, %v2431
    %vm2457 = vcmp.eq.f32.partialorder %v2456, 8.507059e+37
    %v2458 = vand.u32 %v2431, 2147483648
    %v2459 = vor.u32 1.1754944e-38, %v2458
    %v2460 = vsel %vm2457, %v2459, %v2455
    %v2461 = vmul.f32 %v2425, %v2460
    %v2462 = vpack.c.bf16 %v2461, %v2446
    %v2464 = vshrl.u32 %v2384, 16
    %v2466 = vshll.u32 %v2384, 16
    %v2468 = vrot.slane %v2466, 1
    %v2469 = vor.u32 %v2464, %v2468
    %v2471 = vsel %vm684, %v2462, 0
    %v2474 = vand.u32 %v2469, %v741
    %2476 = vmatpush.bf16.msra.mxu0 0
    %2477 = vmatpush.bf16.msra.mxu0 0
    %2478 = vmatpush.bf16.msra.mxu0 0
    %2479 = vmatpush.bf16.msra.mxu0 0
    %2480 = vmatpush.bf16.msra.mxu0 0
    %2481 = vmatpush.bf16.msra.mxu0 0
    %2482 = vmatpush.bf16.msra.mxu0 0
    %2483 = vmatpush.bf16.msra.mxu0 %v2474
    %2484 = vmatmul.bf16.gmra.mxu0 %v2471
    %v2485 = vpop.f32.mrf.mxu0
    %v2486 = vadd.f32 0.0, %v2485
    %v2487 = vpop.f32.mrf.mxu0
    %v2488 = vadd.f32 0.0, %v2487
    %2489 = vdwg.mxu0
    %v2492 = vrot.slane %v2486, 7
    %v2493 = vrot.slane %v2488, 7
    %v2494 = vsel %vm868, %v2492, %v2493
    %v2497 = vsel %vm868, %v2381, %v2492
    %v2498 = vpack.c.bf16 %v2497, %v2379
    %v2499 = vpack.c.bf16 %v2494, %v2494
    %v2501 = vperm.slane %v2219, 0
    %v2511 = vunpack.c.l.b16 %v2210
    %v2512 = vunpack.c.l.b16 %v2211
    %v2513 = vunpack.c.l.b16 %v2212
    %v2514 = vunpack.c.l.b16 %v2213
    %v2515 = vunpack.c.l.b16 %v2214
    %v2516 = vunpack.c.l.b16 %v2215
    %v2517 = vunpack.c.l.b16 %v2216
    %v2518 = vunpack.c.l.b16 %v2217
    %v2519 = vpack.c.b16 %v2512, %v2511
    %v2520 = vpack.c.b16 %v2514, %v2513
    %v2521 = vpack.c.b16 %v2516, %v2515
    %v2522 = vpack.c.b16 %v2518, %v2517
    %v2528 = vsel %vm663, %v2498, 0
    %v2531 = vsel %vm663, %v2499, 0
    %2533 = vmatpush.bf16.msra.mxu0 0
    %2534 = vmatpush.bf16.msra.mxu0 0
    %2535 = vmatpush.bf16.msra.mxu0 0
    %2536 = vmatpush.bf16.msra.mxu0 0
    %2537 = vmatpush.bf16.msra.mxu0 %v2522
    %2538 = vmatpush.bf16.msra.mxu0 %v2521
    %2539 = vmatpush.bf16.msra.mxu0 %v2520
    %2540 = vmatpush.bf16.msra.mxu0 %v2519
    %2541 = vmatmul.bf16.gmra.mxu0 %v2528
    %v2542 = vpop.f32.mrf.mxu0
    %v2543 = vadd.f32 %v2501, %v2542
    %v2544 = vpop.f32.mrf.mxu0
    %v2545 = vadd.f32 %v2501, %v2544
    %2546 = vmatmul.bf16.gmra.mxu0 %v2531
    %v2547 = vpop.f32.mrf.mxu0
    %v2548 = vadd.f32 %v2501, %v2547
    %v2549 = vpop.f32.mrf.mxu0
    %2550 = vdwg.mxu0
    %v2551 = vmul.f32 %v2543, 0.33333334
    %v2552 = vmul.f32 %v2545, 0.33333334
    %v2553 = vmul.f32 %v2548, 0.33333334
    %vm2554 = vcmp.lt.f32.partialorder %v2551, 0.0
    %vm2555 = vcmp.lt.f32.partialorder %v2552, 0.0
    %vm2556 = vcmp.lt.f32.partialorder %v2553, 0.0
    %v2557 = vand.u32 2147483647, %v2551
    %v2558 = vand.u32 2147483647, %v2552
    %v2559 = vand.u32 2147483647, %v2553
    %vm2560 = vcmp.gt.f32.partialorder %v2557, 2.4142137
    %vm2561 = vcmp.gt.f32.partialorder %v2558, 2.4142137
    %vm2562 = vcmp.gt.f32.partialorder %v2559, 2.4142137
    %vm2563 = vcmp.gt.f32.partialorder %v2557, 0.41421357
    %vm2564 = vcmp.gt.f32.partialorder %v2558, 0.41421357
    %vm2565 = vcmp.gt.f32.partialorder %v2559, 0.41421357
    %v2566 = vmax.f32 %v2557, 1e-30
    %v2567 = vmax.f32 %v2558, 1e-30
    %v2568 = vmax.f32 %v2559, 1e-30
    %v2569 = vrcp.pop %v2566
    %v2570 = vmul.f32 %v2566, %v2569
    %v2571 = vsub.f32 1.0, %v2570
    %v2572 = vmul.f32 %v2569, %v2571
    %v2573 = vadd.f32 %v2569, %v2572
    %vm2574 = vweird.f32 %v2566
    %vm2575 = vweird.f32 %v2569
    %vm2576 = vmor %vm2574, %vm2575
    %v2577 = vsel %vm2576, %v2569, %v2573
    %v2578 = vand.u32 2147483647, %v2566
    %vm2579 = vcmp.eq.f32.partialorder %v2578, 8.507059e+37
    %v2580 = vand.u32 %v2566, 2147483648
    %v2581 = vor.u32 1.1754944e-38, %v2580
    %v2582 = vsel %vm2579, %v2581, %v2577
    %v2583 = vmul.f32 -1.0, %v2582
    %v2584 = vrcp.pop %v2567
    %v2585 = vmul.f32 %v2567, %v2584
    %v2586 = vsub.f32 1.0, %v2585
    %v2587 = vmul.f32 %v2584, %v2586
    %v2588 = vadd.f32 %v2584, %v2587
    %vm2589 = vweird.f32 %v2567
    %vm2590 = vweird.f32 %v2584
    %vm2591 = vmor %vm2589, %vm2590
    %v2592 = vsel %vm2591, %v2584, %v2588
    %v2593 = vand.u32 2147483647, %v2567
    %vm2594 = vcmp.eq.f32.partialorder %v2593, 8.507059e+37
    %v2595 = vand.u32 %v2567, 2147483648
    %v2596 = vor.u32 1.1754944e-38, %v2595
    %v2597 = vsel %vm2594, %v2596, %v2592
    %v2598 = vmul.f32 -1.0, %v2597
    %v2599 = vrcp.pop %v2568
    %v2600 = vmul.f32 %v2568, %v2599
    %v2601 = vsub.f32 1.0, %v2600
    %v2602 = vmul.f32 %v2599, %v2601
    %v2603 = vadd.f32 %v2599, %v2602
    %vm2604 = vweird.f32 %v2568
    %vm2605 = vweird.f32 %v2599
    %vm2606 = vmor %vm2604, %vm2605
    %v2607 = vsel %vm2606, %v2599, %v2603
    %v2608 = vand.u32 2147483647, %v2568
    %vm2609 = vcmp.eq.f32.partialorder %v2608, 8.507059e+37
    %v2610 = vand.u32 %v2568, 2147483648
    %v2611 = vor.u32 1.1754944e-38, %v2610
    %v2612 = vsel %vm2609, %v2611, %v2607
    %v2613 = vmul.f32 -1.0, %v2612
    %v2614 = vsub.f32 %v2557, 1.0
    %v2615 = vsub.f32 %v2558, 1.0
    %v2616 = vsub.f32 %v2559, 1.0
    %v2617 = vadd.f32 %v2557, 1.0
    %v2618 = vadd.f32 %v2558, 1.0
    %v2619 = vadd.f32 %v2559, 1.0
    %v2620 = vrcp.pop %v2617
    %v2621 = vmul.f32 %v2617, %v2620
    %v2622 = vsub.f32 1.0, %v2621
    %v2623 = vmul.f32 %v2620, %v2622
    %v2624 = vadd.f32 %v2620, %v2623
    %vm2625 = vweird.f32 %v2617
    %vm2626 = vweird.f32 %v2620
    %vm2627 = vmor %vm2625, %vm2626
    %v2628 = vsel %vm2627, %v2620, %v2624
    %v2629 = vand.u32 2147483647, %v2617
    %vm2630 = vcmp.eq.f32.partialorder %v2629, 8.507059e+37
    %v2631 = vand.u32 %v2617, 2147483648
    %v2632 = vor.u32 1.1754944e-38, %v2631
    %v2633 = vsel %vm2630, %v2632, %v2628
    %v2634 = vmul.f32 %v2614, %v2633
    %v2635 = vrcp.pop %v2618
    %v2636 = vmul.f32 %v2618, %v2635
    %v2637 = vsub.f32 1.0, %v2636
    %v2638 = vmul.f32 %v2635, %v2637
    %v2639 = vadd.f32 %v2635, %v2638
    %vm2640 = vweird.f32 %v2618
    %vm2641 = vweird.f32 %v2635
    %vm2642 = vmor %vm2640, %vm2641
    %v2643 = vsel %vm2642, %v2635, %v2639
    %v2644 = vand.u32 2147483647, %v2618
    %vm2645 = vcmp.eq.f32.partialorder %v2644, 8.507059e+37
    %v2646 = vand.u32 %v2618, 2147483648
    %v2647 = vor.u32 1.1754944e-38, %v2646
    %v2648 = vsel %vm2645, %v2647, %v2643
    %v2649 = vmul.f32 %v2615, %v2648
    %v2650 = vrcp.pop %v2619
    %v2651 = vmul.f32 %v2619, %v2650
    %v2652 = vsub.f32 1.0, %v2651
    %v2653 = vmul.f32 %v2650, %v2652
    %v2654 = vadd.f32 %v2650, %v2653
    %vm2655 = vweird.f32 %v2619
    %vm2656 = vweird.f32 %v2650
    %vm2657 = vmor %vm2655, %vm2656
    %v2658 = vsel %vm2657, %v2650, %v2654
    %v2659 = vand.u32 2147483647, %v2619
    %vm2660 = vcmp.eq.f32.partialorder %v2659, 8.507059e+37
    %v2661 = vand.u32 %v2619, 2147483648
    %v2662 = vor.u32 1.1754944e-38, %v2661
    %v2663 = vsel %vm2660, %v2662, %v2658
    %v2664 = vmul.f32 %v2616, %v2663
    %v2665 = vsel %vm2563, %v2634, %v2557
    %v2666 = vsel %vm2564, %v2649, %v2558
    %v2667 = vsel %vm2565, %v2664, %v2559
    %v2668 = vsel %vm2560, %v2583, %v2665
    %v2669 = vsel %vm2561, %v2598, %v2666
    %v2670 = vsel %vm2562, %v2613, %v2667
    %v2671 = vsel %vm2563, 0.7853982, 0.0
    %v2672 = vsel %vm2564, 0.7853982, 0.0
    %v2673 = vsel %vm2565, 0.7853982, 0.0
    %v2674 = vsel %vm2560, 1.5707964, %v2671
    %v2675 = vsel %vm2561, 1.5707964, %v2672
    %v2676 = vsel %vm2562, 1.5707964, %v2673
    %v2677 = vmul.f32 %v2668, %v2668
    %v2678 = vmul.f32 %v2669, %v2669
    %v2679 = vmul.f32 %v2670, %v2670
    %v2680 = vmul.f32 %v2677, 0.080537446
    %v2681 = vmul.f32 %v2678, 0.080537446
    %v2682 = vmul.f32 %v2679, 0.080537446
    %v2683 = vsub.f32 %v2680, 0.13877685
    %v2684 = vsub.f32 %v2681, 0.13877685
    %v2685 = vsub.f32 %v2682, 0.13877685
    %v2686 = vmul.f32 %v2683, %v2677
    %v2687 = vmul.f32 %v2684, %v2678
    %v2688 = vmul.f32 %v2685, %v2679
    %v2689 = vadd.f32 %v2686, 0.19977711
    %v2690 = vadd.f32 %v2687, 0.19977711
    %v2691 = vadd.f32 %v2688, 0.19977711
    %v2692 = vmul.f32 %v2689, %v2677
    %v2693 = vmul.f32 %v2690, %v2678
    %v2694 = vmul.f32 %v2691, %v2679
    %v2695 = vsub.f32 %v2692, 0.3333295
    %v2696 = vsub.f32 %v2693, 0.3333295
    %v2697 = vsub.f32 %v2694, 0.3333295
    %v2698 = vmul.f32 %v2695, %v2677
    %v2699 = vmul.f32 %v2696, %v2678
    %v2700 = vmul.f32 %v2697, %v2679
    %v2701 = vmul.f32 %v2698, %v2668
    %v2702 = vmul.f32 %v2699, %v2669
    %v2703 = vmul.f32 %v2700, %v2670
    %v2704 = vadd.f32 %v2701, %v2668
    %v2705 = vadd.f32 %v2702, %v2669
    %v2706 = vadd.f32 %v2703, %v2670
    %v2707 = vadd.f32 %v2674, %v2704
    %v2708 = vadd.f32 %v2675, %v2705
    %v2709 = vadd.f32 %v2676, %v2706
    %v2710 = vsub.f32 0.0, %v2707
    %v2711 = vsub.f32 0.0, %v2708
    %v2712 = vsub.f32 0.0, %v2709
    %v2713 = vsel %vm2554, %v2710, %v2707
    %v2714 = vsel %vm2555, %v2711, %v2708
    %v2715 = vsel %vm2556, %v2712, %v2709
    %v2716 = vmul.f32 %v2713, 1.908
    %v2717 = vmul.f32 %v2714, 1.908
    %v2718 = vmul.f32 %v2715, 1.908
    %v2719 = vmul.f32 %v2716, 1.442695
    %v2720 = vpow.pop %v2719
    %v2721 = vmul.f32 %v2717, 1.442695
    %v2722 = vpow.pop %v2721
    %v2723 = vmul.f32 %v2718, 1.442695
    %v2724 = vpow.pop %v2723
    %v2725 = vmul.f32 %v2720, %v2199
    %v2726 = vmul.f32 %v2722, %v2200
    %v2727 = vmul.f32 %v2724, %v2201
    %2731 = vrot.lane.b32.xlu0 %v2543, 96
    %v2732 = vpop.permute.xlu0 %2731
    %2733 = vrot.lane.b32.xlu0 %v2545, 96
    %v2734 = vpop.permute.xlu0 %2733
    %2735 = vrot.lane.b32.xlu0 %v2548, 96
    %v2736 = vpop.permute.xlu0 %2735
    %v2740 = vadd.f32 %v2725, %v2732
    %v2741 = vadd.f32 %v2726, %v2734
    %v2742 = vadd.f32 %v2727, %v2736
    %vm2745 = vcmask 1046528
    %v2746 = vrot.slane %v2740, 1
    %v2747 = vrot.slane %v2741, 1
    %v2748 = vsel %vm2745, %v2746, %v2747
    %vm2751 = vcmask 1045504
    %v2752 = vrot.slane %v2741, 2
    %v2753 = vrot.slane %v2742, 2
    %v2754 = vsel %vm2751, %v2752, %v2753
    %2756 = vst.msk [vmem:[#allocation7] sm:$0xff] %vm615, %v2748
    %2757 = vst.msk [vmem:[#allocation7 + $0x8] sm:$0xff] %vm615, %v2754
    // Predicated region
    $region30: #{_lambda_.1} parent=1 // pred_check
      _
    $region31: #{_lambda_.1} parent=1 // pred_check_branch
      %2759 = sbr.rel (0) target = $region33
    $region32: #{_lambda_.1} parent=1 // pred_region
      %2761 = vsyncadd [#allocation4], 0
      %s2762 = sshll.u32 [#allocation7], 4
      %s2763 = int_to_ptr.vmem [resolvable:$true] %s2762
      %s2764 = sshll.u32 %s5, 4
      %s2765 = int_to_ptr.hbm [resolvable:$true] %s2764
      %2770 = dma.vmem_to_hbm [thread:$0]  %s2763, 256, %s2765, [#allocation4], 128, 128, 8
    $region33: #{_lambda_.1} parent=1 // pred_fallthru
      _
    // Predicated region
    $region34: #{_lambda_.1} parent=1 // pred_check
      _
    $region35: #{_lambda_.1} parent=1 // pred_check_branch
      %2772 = sbr.rel (0) target = $region37
    $region36: #{_lambda_.1} parent=1 // pred_region
      %2774 = dma.done [#allocation4], 256
    $region37: #{_lambda_.1} parent=1 // pred_fallthru
      _
    %2775 = vsyncpa [#allocation3], 1
    %2776 = vsyncpa [#allocation6], 1
    %2777 = vsyncpa [#allocation4], 1

</llo_original>
